<compile_context>
chip_gen: v5e
topology: v5e:2x2
jax: 0.10.0
libtpu: 0.0.40
codegen_flags: <defaults>
</compile_context>

<pallas_src>
import functools

import jax
import jax.numpy as jnp
from jax import lax
from jax.experimental import pallas as pl
from jax.experimental.pallas import tpu as pltpu

EPS = 1e-5


# --------------------------------------------------------------------------
# Fused kernel: conv1+BN+ReLU -> conv2+BN+ReLU -> 2x2/2 maxpool + argmax
# --------------------------------------------------------------------------
def _fused_down2_kernel(x_ref, w1_ref, s1_ref, t1_ref, w2_ref, s2_ref, t2_ref,
                        out_ref, idx_ref):
    # x_ref : (1, 1, TH+4, W+4, Cin) bf16   halo'd, zero-padded input row tile
    # w1_ref: (9*Cin,  Cmid) bf16           all 9 taps folded into K = 9*Cin
    # w2_ref: (9*Cmid, Cout) bf16
    # s*/t* : (1, C)   f32                  folded BN scale / shift
    # out   : (1, 1, TH/2, WO*Cout) f32     pooled activations (lane-dense)
    # idx   : (1, 1, TH/2, WO*Cout) i32     PyTorch-style flat h*W + w argmax
    i = pl.program_id(1)
    th4, w4, cin = x_ref.shape[2], x_ref.shape[3], x_ref.shape[4]
    th, w = th4 - 4, w4 - 4
    cmid = w1_ref.shape[-1]
    cout = w2_ref.shape[-1]
    h = th * pl.num_programs(1)
    ho, wo = th // 2, w // 2                               # per-tile pooled size

    xt = x_ref[0, 0]                                       # (TH+4, W+4, Cin) bf16

    # ---- conv1 + BN + ReLU over the (TH+2, W+2) halo slab --------------------
    # All 9 taps in one K = 9*Cin contraction; im2col built directly in bf16.
    r1, q1 = th + 2, w + 2
    lhs1 = jnp.concatenate(
        [xt[dy:dy + r1, dx:dx + q1, :] for dy in range(3) for dx in range(3)],
        axis=-1).reshape(r1 * q1, 9 * cin)                 # (R1*Q1, 9*Cin) bf16
    y1 = jnp.dot(lhs1, w1_ref[...], preferred_element_type=jnp.float32)
    y1 = jnp.maximum(y1 * s1_ref[...] + t1_ref[...], 0.0)  # f32 BN + ReLU
    y1 = y1.reshape(r1, q1, cmid)

    # Zero the halo ring that lies OUTSIDE the image: it must be conv2's zero
    # padding, not conv1 applied to padding.
    r_io = lax.broadcasted_iota(jnp.int32, (r1, q1, 1), 0)
    c_io = lax.broadcasted_iota(jnp.int32, (r1, q1, 1), 1)
    g_row = i * th - 1 + r_io                              # global conv1 row
    inside = (g_row >= 0) & (g_row < h) & (c_io >= 1) & (c_io <= w)
    y1 = jnp.where(inside, y1, 0.0).astype(jnp.bfloat16)   # bf16 before im2col2

    # ---- conv2 + BN + ReLU (K = 9*Cmid, bf16 im2col) --------------------------
    lhs2 = jnp.concatenate(
        [y1[dy:dy + th, dx:dx + w, :] for dy in range(3) for dx in range(3)],
        axis=-1).reshape(th * w, 9 * cmid)                 # (TH*W, 9*Cmid) bf16
    y2 = jnp.dot(lhs2, w2_ref[...], preferred_element_type=jnp.float32)
    y2 = jnp.maximum(y2 * s2_ref[...] + t2_ref[...], 0.0)  # (TH*W, Cout) f32

    # ---- 2x2 / stride-2 max-pool with argmax (reshape-based windows) ----------
    y2 = y2.reshape(ho, 2, w, cout)
    top = y2[:, 0].reshape(ho, wo, 2, cout)                # even rows
    bot = y2[:, 1].reshape(ho, wo, 2, cout)                # odd rows
    a, b = top[:, :, 0, :], top[:, :, 1, :]                # (2i, 2j), (2i, 2j+1)
    c, d = bot[:, :, 0, :], bot[:, :, 1, :]                # (2i+1, 2j), (2i+1, 2j+1)

    ph = lax.broadcasted_iota(jnp.int32, (ho, wo, 1), 0)
    pw = lax.broadcasted_iota(jnp.int32, (ho, wo, 1), 1)
    base = (i * th + 2 * ph) * w + 2 * pw                  # flat idx of (2i, 2j)
    ia, ib, ic, id_ = base, base + 1, base + w, base + w + 1

    # ">=" keeps the first occurrence on ties (row-major scan order, PyTorch).
    m_ab = jnp.where(a >= b, a, b)
    i_ab = jnp.where(a >= b, ia, ib)
    m_cd = jnp.where(c >= d, c, d)
    i_cd = jnp.where(c >= d, ic, id_)
    sel = m_ab >= m_cd
    # Lane-dense stores: (ho, wo, cout) -> (ho, wo*cout).
    out_ref[0, 0] = jnp.where(sel, m_ab, m_cd).reshape(ho, wo * cout)
    idx_ref[0, 0] = jnp.where(sel, i_ab, i_cd).reshape(ho, wo * cout)


# --------------------------------------------------------------------------
# Wrapper helpers
# --------------------------------------------------------------------------
def _fold_bn(w_oihw, bias, gamma, beta, mean, var):
    """Fold conv bias + eval-mode BatchNorm; weights as (9*Cin, Cout) bf16."""
    cout, cin = w_oihw.shape[0], w_oihw.shape[1]
    # (Cout, Cin, 3, 3) -> (dy, dx, Cin, Cout) -> (9*Cin, Cout); K order matches
    # the kernel's im2col concat order: ((dy*3 + dx)*Cin + c).
    w_k = jnp.transpose(w_oihw, (2, 3, 1, 0)).reshape(9 * cin, cout)
    inv_std = gamma / jnp.sqrt(var + EPS)
    scale = inv_std.reshape(1, cout).astype(jnp.float32)
    shift = ((bias - mean) * inv_std + beta).reshape(1, cout).astype(jnp.float32)
    return w_k.astype(jnp.bfloat16), scale, shift


def _round_up(x, m):
    return ((x + m - 1) // m) * m


def _vmem_limit_bytes():
    """Per-generation VMEM limit: use most of 128 MiB parts, stay <=48 MiB on v7x."""
    try:
        cap = pltpu.get_tpu_info().vmem_capacity_bytes
    except Exception:
        cap = 128 * 1024 * 1024
    if cap >= 128 * 1024 * 1024:
        return 100 * 1024 * 1024                           # v5e / v6e
    return min(48 * 1024 * 1024, (cap * 3) // 4)           # v7x (64 MiB physical)


def _tile_vmem_bytes(th, w, cin, cmid, cout):
    """Padding-aware per-grid-step working set, including the im2col buffers."""
    lane = 128
    r1, q1 = th + 2, w + 2
    ho, wo = th // 2, w // 2
    # pipeline (double-buffered) blocks
    in_blk = (th + 4) * _round_up(w + 4, 16) * _round_up(cin, lane) * 2
    out_blk = _round_up(ho, 8) * _round_up(wo * cout, lane) * (4 + 4)
    bufs = 2 * (in_blk + out_blk)
    # compute intermediates (conservative: counted as if all live together)
    lhs1 = _round_up(r1 * q1, 16) * _round_up(9 * cin, lane) * 2
    y1_f32 = _round_up(r1 * q1, 8) * _round_up(cmid, lane) * 4
    y1_bf16 = y1_f32 // 2
    lhs2 = _round_up(th * w, 16) * _round_up(9 * cmid, lane) * 2
    y2_f32 = _round_up(th * w, 8) * _round_up(cout, lane) * 4
    pool_tmp = 2 * _round_up(ho * wo, 8) * _round_up(cout, lane) * (4 + 4)
    return bufs + lhs1 + y1_f32 + y1_bf16 + lhs2 + y2_f32 + pool_tmp


def _weight_vmem_bytes(cin, cmid, cout):
    w1 = _round_up(9 * cin, 16) * _round_up(cmid, 128) * 2
    w2 = _round_up(9 * cmid, 16) * _round_up(cout, 128) * 2
    return 2 * (w1 + w2) + 4 * 4 * 128                     # double-buffered + scales


def _pick_row_tile(n, h, w, cin, cmid, cout, budget_bytes):
    """Largest even row tile dividing H that fits the budget; keep >=2 grid pts."""
    cands = [th for th in range(2, h + 1, 2) if h % th == 0]
    fits = [th for th in cands
            if _tile_vmem_bytes(th, w, cin, cmid, cout) <= budget_bytes]
    if not fits:
        fits = [2]
    if n == 1:                                             # megacore: give both TCs work
        multi = [th for th in fits if h // th >= 2]
        if multi:
            fits = multi
    return max(fits)


# --------------------------------------------------------------------------
# Public entry point
# --------------------------------------------------------------------------
@functools.partial(jax.jit, static_argnames=("row_tile",))
def segnet_down2(x_nchw, params, row_tile=None):
    """Forward pass of segnetDown2. NCHW in; returns (pooled, indices, unpooled_shape)."""
    x = jnp.transpose(x_nchw, (0, 2, 3, 1))                # NCHW -> NHWC
    n, h, w, cin = x.shape
    w1, b1, g1, be1, m1, v1 = params["conv1"]
    w2, b2, g2, be2, m2, v2 = params["conv2"]
    cmid, cout = w1.shape[0], w2.shape[0]
    assert h % 2 == 0 and w % 2 == 0, "maxpool 2x2/2 expects even spatial dims"

    vmem_limit = _vmem_limit_bytes()
    budget = int(0.7 * vmem_limit) - _weight_vmem_bytes(cin, cmid, cout)
    th = row_tile if row_tile is not None else _pick_row_tile(
        n, h, w, cin, cmid, cout, budget_bytes=budget)
    assert th % 2 == 0 and h % th == 0, "row_tile must be even and divide H"
    nt = h // th
    ho, wo = h // 2, w // 2

    # Overlapping (2-row halo each side) row windows of the zero-padded input,
    # staged once in HBM as bf16 (halves the activation DMA traffic).
    xp = jnp.pad(x.astype(jnp.bfloat16), ((0, 0), (2, 2), (2, 2), (0, 0)))
    xwin = jnp.stack(
        [lax.slice_in_dim(xp, i * th, i * th + th + 4, axis=1) for i in range(nt)],
        axis=1)                                            # (N, nt, TH+4, W+4, Cin)

    w1_t, s1, t1 = _fold_bn(w1, b1, g1, be1, m1, v1)
    w2_t, s2, t2 = _fold_bn(w2, b2, g2, be2, m2, v2)

    pooled, idx = pl.pallas_call(
        _fused_down2_kernel,
        out_shape=(jax.ShapeDtypeStruct((n, nt, th // 2, wo * cout), jnp.float32),
                   jax.ShapeDtypeStruct((n, nt, th // 2, wo * cout), jnp.int32)),
        grid=(n, nt),
        in_specs=[
            pl.BlockSpec((1, 1, th + 4, w + 4, cin), lambda ni, ti: (ni, ti, 0, 0, 0)),
            pl.BlockSpec((9 * cin, cmid), lambda ni, ti: (0, 0)),
            pl.BlockSpec((1, cmid), lambda ni, ti: (0, 0)),
            pl.BlockSpec((1, cmid), lambda ni, ti: (0, 0)),
            pl.BlockSpec((9 * cmid, cout), lambda ni, ti: (0, 0)),
            pl.BlockSpec((1, cout), lambda ni, ti: (0, 0)),
            pl.BlockSpec((1, cout), lambda ni, ti: (0, 0)),
        ],
        out_specs=(pl.BlockSpec((1, 1, th // 2, wo * cout), lambda ni, ti: (ni, ti, 0, 0)),
                   pl.BlockSpec((1, 1, th // 2, wo * cout), lambda ni, ti: (ni, ti, 0, 0))),
        compiler_params=pltpu.CompilerParams(
            dimension_semantics=("parallel", "parallel"),  # megacore-friendly
            vmem_limit_bytes=vmem_limit),
    )(xwin, w1_t, s1, t1, w2_t, s2, t2)

    # (N, nt, TH/2, WO*Cout) -> (N, Ho, Wo, Cout) -> NCHW
    pooled = pooled.reshape(n, nt, th // 2, wo, cout).reshape(n, ho, wo, cout)
    idx = idx.reshape(n, nt, th // 2, wo, cout).reshape(n, ho, wo, cout)
    pooled_nchw = jnp.transpose(pooled, (0, 3, 1, 2))
    idx_nchw = jnp.transpose(idx, (0, 3, 1, 2))
    # TODO(synk): pooled could be emitted bf16 if the next block consumes bf16.
    unpooled_shape = (n, cout, h, w)
    return pooled_nchw, idx_nchw, unpooled_shape


# --------------------------------------------------------------------------
# Deterministic parameter init + pure-JAX reference for sanity checking
# --------------------------------------------------------------------------
def init_params(key, in_size, out_size):
    def cbr(k, cin, cout):
        ks = jax.random.split(k, 6)
        w = 0.1 * jax.random.normal(ks[0], (cout, cin, 3, 3), jnp.float32)
        b = 0.1 * jax.random.normal(ks[1], (cout,), jnp.float32)
        gamma = 1.0 + 0.1 * jax.random.normal(ks[2], (cout,), jnp.float32)
        beta = 0.1 * jax.random.normal(ks[3], (cout,), jnp.float32)
        mean = 0.1 * jax.random.normal(ks[4], (cout,), jnp.float32)
        var = jax.random.uniform(ks[5], (cout,), jnp.float32, 0.5, 1.5)
        return (w, b, gamma, beta, mean, var)
    k1, k2 = jax.random.split(key)
    return {"conv1": cbr(k1, in_size, out_size),
            "conv2": cbr(k2, out_size, out_size)}


def _ref_cbr(x_nchw, w, b, gamma, beta, mean, var):
    # Matches the kernel's numerics: bf16 conv operands, f32 accumulation,
    # folded eval-mode BatchNorm + ReLU in f32.
    y = lax.conv_general_dilated(
        x_nchw.astype(jnp.bfloat16), w.astype(jnp.bfloat16), (1, 1), "SAME",
        dimension_numbers=("NCHW", "OIHW", "NCHW"),
        preferred_element_type=jnp.float32)
    inv_std = gamma / jnp.sqrt(var + EPS)
    scale = inv_std[None, :, None, None]
    shift = ((b - mean) * inv_std + beta)[None, :, None, None]
    return jnp.maximum(y * scale + shift, 0.0)


def _ref_forward(x_nchw, params):
    y = _ref_cbr(x_nchw, *params["conv1"])
    y = _ref_cbr(y, *params["conv2"])
    n, c, h, w = y.shape
    ho, wo = h // 2, w // 2
    win = (y.reshape(n, c, ho, 2, wo, 2).transpose(0, 1, 2, 4, 3, 5)
            .reshape(n, c, ho, wo, 4))
    pooled = win.max(axis=-1)
    am = jnp.argmax(win, axis=-1).astype(jnp.int32)
    oh = lax.broadcasted_iota(jnp.int32, (n, c, ho, wo), 2)
    ow = lax.broadcasted_iota(jnp.int32, (n, c, ho, wo), 3)
    idx = (2 * oh + am // 2) * w + (2 * ow + am % 2)
    return pooled, idx, (n, c, h, w), y


if __name__ == "__main__":
    key = jax.random.PRNGKey(0)
    k_x, k_p = jax.random.split(key)

    N, Cin, Cout, H, W = 2, 4, 8, 16, 16
    x = jax.random.normal(k_x, (N, Cin, H, W), jnp.float32)
    params = init_params(k_p, Cin, Cout)

    # row_tile=8 -> 2 row-tiles per image: exercises the (batch, row-tile) grid.
    pooled, indices, unpooled_shape = segnet_down2(x, params, row_tile=8)
    pooled = jax.block_until_ready(pooled)
    indices = jax.block_until_ready(indices)

    ref_pooled, ref_idx, ref_shape, ref_feat = _ref_forward(x, params)
    Ho, Wo = H // 2, W // 2

    assert pooled.shape == (N, Cout, Ho, Wo) and pooled.dtype == jnp.float32
    assert indices.shape == (N, Cout, Ho, Wo) and indices.dtype == jnp.int32
    assert unpooled_shape == ref_shape == (N, Cout, H, W)
    # bf16 MXU operands => tolerances sized for bf16 rounding of the operands.
    assert jnp.allclose(pooled, ref_pooled, atol=2e-3, rtol=2e-3)

    # Argmax semantics (tie-robust): every index must land inside its 2x2
    # window and point at a feature-map element equal to the pooled maximum.
    vals_at_idx = jnp.take_along_axis(
        ref_feat.reshape(N, Cout, H * W),
        indices.reshape(N, Cout, Ho * Wo), axis=-1).reshape(N, Cout, Ho, Wo)
    assert jnp.allclose(vals_at_idx, pooled, atol=2e-3, rtol=2e-3)
    oh = lax.broadcasted_iota(jnp.int32, (N, Cout, Ho, Wo), 2)
    ow = lax.broadcasted_iota(jnp.int32, (N, Cout, Ho, Wo), 3)
    assert bool(jnp.all(((indices // W) // 2 == oh) & ((indices % W) // 2 == ow)))
    # (exact equality with ref_idx is not asserted: f32 accumulation-order noise
    #  can legitimately flip near-exact ties)

    print("KERNEL_OK")
</pallas_src>

<mosaic_0001>
module attributes {stable_mosaic.version = 11 : i64} {
  func.func @_fused_down2_kernel(%arg0: i32, %arg1: i32, %arg2: memref<1x1x12x20x4xbf16, #tpu.memory_space<vmem>>, %arg3: memref<36x8xbf16, #tpu.memory_space<vmem>>, %arg4: memref<1x8xf32, #tpu.memory_space<vmem>>, %arg5: memref<1x8xf32, #tpu.memory_space<vmem>>, %arg6: memref<72x8xbf16, #tpu.memory_space<vmem>>, %arg7: memref<1x8xf32, #tpu.memory_space<vmem>>, %arg8: memref<1x8xf32, #tpu.memory_space<vmem>>, %arg9: memref<1x1x4x64xf32, #tpu.memory_space<vmem>>, %arg10: memref<1x1x4x64xi32, #tpu.memory_space<vmem>>) attributes {dimension_semantics = [#tpu.dimension_semantics<parallel>, #tpu.dimension_semantics<parallel>], iteration_bounds = array<i64: 2, 2>, scalar_prefetch = 0 : i64, scratch_operands = 0 : i64, tpu.core_type = #tpu.core_type<tc>, window_params = [{transform_indices = @transform_0, window_bounds = array<i64: 1, 1, 12, 20, 4>}, {pipeline_mode = #tpu.pipeline_mode<synchronous>, transform_indices = @transform_1, window_bounds = array<i64: 36, 8>}, {pipeline_mode = #tpu.pipeline_mode<synchronous>, transform_indices = @transform_2, window_bounds = array<i64: 1, 8>}, {pipeline_mode = #tpu.pipeline_mode<synchronous>, transform_indices = @transform_3, window_bounds = array<i64: 1, 8>}, {pipeline_mode = #tpu.pipeline_mode<synchronous>, transform_indices = @transform_4, window_bounds = array<i64: 72, 8>}, {pipeline_mode = #tpu.pipeline_mode<synchronous>, transform_indices = @transform_5, window_bounds = array<i64: 1, 8>}, {pipeline_mode = #tpu.pipeline_mode<synchronous>, transform_indices = @transform_6, window_bounds = array<i64: 1, 8>}, {transform_indices = @transform_7, window_bounds = array<i64: 1, 1, 4, 64>}, {transform_indices = @transform_8, window_bounds = array<i64: 1, 1, 4, 64>}]} {
    %c0 = arith.constant 0 : index
    %c0_0 = arith.constant 0 : index
    %c0_1 = arith.constant 0 : index
    %c0_2 = arith.constant 0 : index
    %c0_3 = arith.constant 0 : index
    %0 = vector.load %arg2[%c0, %c0_0, %c0_1, %c0_2, %c0_3] : memref<1x1x12x20x4xbf16, #tpu.memory_space<vmem>>, vector<1x1x12x20x4xbf16>
    %1 = vector.shape_cast %0 : vector<1x1x12x20x4xbf16> to vector<12x20x4xbf16>
    %2 = vector.extract_strided_slice %1 {offsets = [0, 0, 0], sizes = [10, 18, 4], strides = [1, 1, 1]} : vector<12x20x4xbf16> to vector<10x18x4xbf16>
    %3 = vector.extract_strided_slice %1 {offsets = [0, 1, 0], sizes = [10, 18, 4], strides = [1, 1, 1]} : vector<12x20x4xbf16> to vector<10x18x4xbf16>
    %4 = vector.extract_strided_slice %1 {offsets = [0, 2, 0], sizes = [10, 18, 4], strides = [1, 1, 1]} : vector<12x20x4xbf16> to vector<10x18x4xbf16>
    %5 = vector.extract_strided_slice %1 {offsets = [1, 0, 0], sizes = [10, 18, 4], strides = [1, 1, 1]} : vector<12x20x4xbf16> to vector<10x18x4xbf16>
    %6 = vector.extract_strided_slice %1 {offsets = [1, 1, 0], sizes = [10, 18, 4], strides = [1, 1, 1]} : vector<12x20x4xbf16> to vector<10x18x4xbf16>
    %7 = vector.extract_strided_slice %1 {offsets = [1, 2, 0], sizes = [10, 18, 4], strides = [1, 1, 1]} : vector<12x20x4xbf16> to vector<10x18x4xbf16>
    %8 = vector.extract_strided_slice %1 {offsets = [2, 0, 0], sizes = [10, 18, 4], strides = [1, 1, 1]} : vector<12x20x4xbf16> to vector<10x18x4xbf16>
    %9 = vector.extract_strided_slice %1 {offsets = [2, 1, 0], sizes = [10, 18, 4], strides = [1, 1, 1]} : vector<12x20x4xbf16> to vector<10x18x4xbf16>
    %10 = vector.extract_strided_slice %1 {offsets = [2, 2, 0], sizes = [10, 18, 4], strides = [1, 1, 1]} : vector<12x20x4xbf16> to vector<10x18x4xbf16>
    %11 = tpu.concatenate %2, %3, %4, %5, %6, %7, %8, %9, %10 in 2 : vector<10x18x4xbf16>, vector<10x18x4xbf16>, vector<10x18x4xbf16>, vector<10x18x4xbf16>, vector<10x18x4xbf16>, vector<10x18x4xbf16>, vector<10x18x4xbf16>, vector<10x18x4xbf16>, vector<10x18x4xbf16> -> vector<10x18x36xbf16>
    %12 = vector.shape_cast %11 : vector<10x18x36xbf16> to vector<180x36xbf16>
    %c0_4 = arith.constant 0 : index
    %c0_5 = arith.constant 0 : index
    %13 = vector.load %arg3[%c0_4, %c0_5] : memref<36x8xbf16, #tpu.memory_space<vmem>>, vector<36x8xbf16>
    %cst = arith.constant dense<0.000000e+00> : vector<180x8xf32>
    %14 = tpu.matmul %12, %13, %cst {dimension_numbers = #tpu.dot_dimension_numbers<[1], [0], [0], [1], [0, 0, 1, 1], [], []>} : vector<180x36xbf16>, vector<36x8xbf16>, vector<180x8xf32> -> vector<180x8xf32>
    %c0_6 = arith.constant 0 : index
    %c0_7 = arith.constant 0 : index
    %15 = vector.load %arg4[%c0_6, %c0_7] : memref<1x8xf32, #tpu.memory_space<vmem>>, vector<1x8xf32>
    %16 = vector.broadcast %15 : vector<1x8xf32> to vector<180x8xf32>
    %17 = arith.mulf %14, %16 : vector<180x8xf32>
    %c0_8 = arith.constant 0 : index
    %c0_9 = arith.constant 0 : index
    %18 = vector.load %arg5[%c0_8, %c0_9] : memref<1x8xf32, #tpu.memory_space<vmem>>, vector<1x8xf32>
    %19 = vector.broadcast %18 : vector<1x8xf32> to vector<180x8xf32>
    %20 = arith.addf %17, %19 : vector<180x8xf32>
    %cst_10 = arith.constant 0.000000e+00 : f32
    %21 = vector.broadcast %cst_10 : f32 to vector<180x8xf32>
    %22 = arith.maximumf %20, %21 : vector<180x8xf32>
    %23 = vector.shape_cast %22 : vector<180x8xf32> to vector<10x18x8xf32>
    %24 = tpu.iota {dimensions = array<i32: 0>} : vector<10x18x1xi32>
    %25 = tpu.iota {dimensions = array<i32: 1>} : vector<10x18x1xi32>
    %c8_i32 = arith.constant 8 : i32
    %26 = arith.muli %arg1, %c8_i32 : i32
    %c1_i32 = arith.constant 1 : i32
    %27 = arith.subi %26, %c1_i32 : i32
    %28 = vector.broadcast %27 : i32 to vector<10x18x1xi32>
    %29 = arith.addi %28, %24 : vector<10x18x1xi32>
    %c0_i32 = arith.constant 0 : i32
    %30 = vector.broadcast %c0_i32 : i32 to vector<10x18x1xi32>
    %31 = arith.cmpi sge, %29, %30 : vector<10x18x1xi32>
    %c16_i32 = arith.constant 16 : i32
    %32 = vector.broadcast %c16_i32 : i32 to vector<10x18x1xi32>
    %33 = arith.cmpi slt, %29, %32 : vector<10x18x1xi32>
    %34 = arith.andi %31, %33 : vector<10x18x1xi1>
    %c1_i32_11 = arith.constant 1 : i32
    %35 = vector.broadcast %c1_i32_11 : i32 to vector<10x18x1xi32>
    %36 = arith.cmpi sge, %25, %35 : vector<10x18x1xi32>
    %37 = arith.andi %34, %36 : vector<10x18x1xi1>
    %c16_i32_12 = arith.constant 16 : i32
    %38 = vector.broadcast %c16_i32_12 : i32 to vector<10x18x1xi32>
    %39 = arith.cmpi sle, %25, %38 : vector<10x18x1xi32>
    %40 = arith.andi %37, %39 : vector<10x18x1xi1>
    %cst_13 = arith.constant 0.000000e+00 : f32
    %41 = vector.shape_cast %40 : vector<10x18x1xi1> to vector<10x18x1xi1>
    %42 = vector.broadcast %41 : vector<10x18x1xi1> to vector<10x18x8xi1>
    %43 = vector.broadcast %cst_13 : f32 to vector<10x18x8xf32>
    %44 = arith.select %42, %23, %43 : vector<10x18x8xi1>, vector<10x18x8xf32>
    %45 = arith.truncf %44 : vector<10x18x8xf32> to vector<10x18x8xbf16>
    %46 = vector.extract_strided_slice %45 {offsets = [0, 0, 0], sizes = [8, 16, 8], strides = [1, 1, 1]} : vector<10x18x8xbf16> to vector<8x16x8xbf16>
    %47 = vector.extract_strided_slice %45 {offsets = [0, 1, 0], sizes = [8, 16, 8], strides = [1, 1, 1]} : vector<10x18x8xbf16> to vector<8x16x8xbf16>
    %48 = vector.extract_strided_slice %45 {offsets = [0, 2, 0], sizes = [8, 16, 8], strides = [1, 1, 1]} : vector<10x18x8xbf16> to vector<8x16x8xbf16>
    %49 = vector.extract_strided_slice %45 {offsets = [1, 0, 0], sizes = [8, 16, 8], strides = [1, 1, 1]} : vector<10x18x8xbf16> to vector<8x16x8xbf16>
    %50 = vector.extract_strided_slice %45 {offsets = [1, 1, 0], sizes = [8, 16, 8], strides = [1, 1, 1]} : vector<10x18x8xbf16> to vector<8x16x8xbf16>
    %51 = vector.extract_strided_slice %45 {offsets = [1, 2, 0], sizes = [8, 16, 8], strides = [1, 1, 1]} : vector<10x18x8xbf16> to vector<8x16x8xbf16>
    %52 = vector.extract_strided_slice %45 {offsets = [2, 0, 0], sizes = [8, 16, 8], strides = [1, 1, 1]} : vector<10x18x8xbf16> to vector<8x16x8xbf16>
    %53 = vector.extract_strided_slice %45 {offsets = [2, 1, 0], sizes = [8, 16, 8], strides = [1, 1, 1]} : vector<10x18x8xbf16> to vector<8x16x8xbf16>
    %54 = vector.extract_strided_slice %45 {offsets = [2, 2, 0], sizes = [8, 16, 8], strides = [1, 1, 1]} : vector<10x18x8xbf16> to vector<8x16x8xbf16>
    %55 = tpu.concatenate %46, %47, %48, %49, %50, %51, %52, %53, %54 in 2 : vector<8x16x8xbf16>, vector<8x16x8xbf16>, vector<8x16x8xbf16>, vector<8x16x8xbf16>, vector<8x16x8xbf16>, vector<8x16x8xbf16>, vector<8x16x8xbf16>, vector<8x16x8xbf16>, vector<8x16x8xbf16> -> vector<8x16x72xbf16>
    %56 = vector.shape_cast %55 : vector<8x16x72xbf16> to vector<128x72xbf16>
    %c0_14 = arith.constant 0 : index
    %c0_15 = arith.constant 0 : index
    %57 = vector.load %arg6[%c0_14, %c0_15] : memref<72x8xbf16, #tpu.memory_space<vmem>>, vector<72x8xbf16>
    %cst_16 = arith.constant dense<0.000000e+00> : vector<128x8xf32>
    %58 = tpu.matmul %56, %57, %cst_16 {dimension_numbers = #tpu.dot_dimension_numbers<[1], [0], [0], [1], [0, 0, 1, 1], [], []>} : vector<128x72xbf16>, vector<72x8xbf16>, vector<128x8xf32> -> vector<128x8xf32>
    %c0_17 = arith.constant 0 : index
    %c0_18 = arith.constant 0 : index
    %59 = vector.load %arg7[%c0_17, %c0_18] : memref<1x8xf32, #tpu.memory_space<vmem>>, vector<1x8xf32>
    %60 = vector.broadcast %59 : vector<1x8xf32> to vector<128x8xf32>
    %61 = arith.mulf %58, %60 : vector<128x8xf32>
    %c0_19 = arith.constant 0 : index
    %c0_20 = arith.constant 0 : index
    %62 = vector.load %arg8[%c0_19, %c0_20] : memref<1x8xf32, #tpu.memory_space<vmem>>, vector<1x8xf32>
    %63 = vector.broadcast %62 : vector<1x8xf32> to vector<128x8xf32>
    %64 = arith.addf %61, %63 : vector<128x8xf32>
    %cst_21 = arith.constant 0.000000e+00 : f32
    %65 = vector.broadcast %cst_21 : f32 to vector<128x8xf32>
    %66 = arith.maximumf %64, %65 : vector<128x8xf32>
    %67 = vector.shape_cast %66 : vector<128x8xf32> to vector<4x2x16x8xf32>
    %68 = vector.extract_strided_slice %67 {offsets = [0, 0, 0, 0], sizes = [4, 1, 16, 8], strides = [1, 1, 1, 1]} : vector<4x2x16x8xf32> to vector<4x1x16x8xf32>
    %69 = vector.shape_cast %68 : vector<4x1x16x8xf32> to vector<4x16x8xf32>
    %70 = vector.shape_cast %69 : vector<4x16x8xf32> to vector<4x8x2x8xf32>
    %71 = vector.extract_strided_slice %67 {offsets = [0, 1, 0, 0], sizes = [4, 1, 16, 8], strides = [1, 1, 1, 1]} : vector<4x2x16x8xf32> to vector<4x1x16x8xf32>
    %72 = vector.shape_cast %71 : vector<4x1x16x8xf32> to vector<4x16x8xf32>
    %73 = vector.shape_cast %72 : vector<4x16x8xf32> to vector<4x8x2x8xf32>
    %74 = vector.extract_strided_slice %70 {offsets = [0, 0, 0, 0], sizes = [4, 8, 1, 8], strides = [1, 1, 1, 1]} : vector<4x8x2x8xf32> to vector<4x8x1x8xf32>
    %75 = vector.shape_cast %74 : vector<4x8x1x8xf32> to vector<4x8x8xf32>
    %76 = vector.extract_strided_slice %70 {offsets = [0, 0, 1, 0], sizes = [4, 8, 1, 8], strides = [1, 1, 1, 1]} : vector<4x8x2x8xf32> to vector<4x8x1x8xf32>
    %77 = vector.shape_cast %76 : vector<4x8x1x8xf32> to vector<4x8x8xf32>
    %78 = vector.extract_strided_slice %73 {offsets = [0, 0, 0, 0], sizes = [4, 8, 1, 8], strides = [1, 1, 1, 1]} : vector<4x8x2x8xf32> to vector<4x8x1x8xf32>
    %79 = vector.shape_cast %78 : vector<4x8x1x8xf32> to vector<4x8x8xf32>
    %80 = vector.extract_strided_slice %73 {offsets = [0, 0, 1, 0], sizes = [4, 8, 1, 8], strides = [1, 1, 1, 1]} : vector<4x8x2x8xf32> to vector<4x8x1x8xf32>
    %81 = vector.shape_cast %80 : vector<4x8x1x8xf32> to vector<4x8x8xf32>
    %82 = tpu.iota {dimensions = array<i32: 0>} : vector<4x8x1xi32>
    %83 = tpu.iota {dimensions = array<i32: 1>} : vector<4x8x1xi32>
    %c8_i32_22 = arith.constant 8 : i32
    %84 = arith.muli %arg1, %c8_i32_22 : i32
    %c2_i32 = arith.constant 2 : i32
    %85 = vector.broadcast %c2_i32 : i32 to vector<4x8x1xi32>
    %86 = arith.muli %85, %82 : vector<4x8x1xi32>
    %87 = vector.broadcast %84 : i32 to vector<4x8x1xi32>
    %88 = arith.addi %87, %86 : vector<4x8x1xi32>
    %c16_i32_23 = arith.constant 16 : i32
    %89 = vector.broadcast %c16_i32_23 : i32 to vector<4x8x1xi32>
    %90 = arith.muli %88, %89 : vector<4x8x1xi32>
    %c2_i32_24 = arith.constant 2 : i32
    %91 = vector.broadcast %c2_i32_24 : i32 to vector<4x8x1xi32>
    %92 = arith.muli %91, %83 : vector<4x8x1xi32>
    %93 = arith.addi %90, %92 : vector<4x8x1xi32>
    %c1_i32_25 = arith.constant 1 : i32
    %94 = vector.broadcast %c1_i32_25 : i32 to vector<4x8x1xi32>
    %95 = arith.addi %93, %94 : vector<4x8x1xi32>
    %c16_i32_26 = arith.constant 16 : i32
    %96 = vector.broadcast %c16_i32_26 : i32 to vector<4x8x1xi32>
    %97 = arith.addi %93, %96 : vector<4x8x1xi32>
    %c16_i32_27 = arith.constant 16 : i32
    %98 = vector.broadcast %c16_i32_27 : i32 to vector<4x8x1xi32>
    %99 = arith.addi %93, %98 : vector<4x8x1xi32>
    %c1_i32_28 = arith.constant 1 : i32
    %100 = vector.broadcast %c1_i32_28 : i32 to vector<4x8x1xi32>
    %101 = arith.addi %99, %100 : vector<4x8x1xi32>
    %102 = arith.cmpf oge, %75, %77 : vector<4x8x8xf32>
    %103 = arith.select %102, %75, %77 : vector<4x8x8xi1>, vector<4x8x8xf32>
    %104 = arith.cmpf oge, %75, %77 : vector<4x8x8xf32>
    %105 = vector.shape_cast %93 : vector<4x8x1xi32> to vector<4x8x1xi32>
    %106 = vector.broadcast %105 : vector<4x8x1xi32> to vector<4x8x8xi32>
    %107 = vector.shape_cast %95 : vector<4x8x1xi32> to vector<4x8x1xi32>
    %108 = vector.broadcast %107 : vector<4x8x1xi32> to vector<4x8x8xi32>
    %109 = arith.select %104, %106, %108 : vector<4x8x8xi1>, vector<4x8x8xi32>
    %110 = arith.cmpf oge, %79, %81 : vector<4x8x8xf32>
    %111 = arith.select %110, %79, %81 : vector<4x8x8xi1>, vector<4x8x8xf32>
    %112 = arith.cmpf oge, %79, %81 : vector<4x8x8xf32>
    %113 = vector.shape_cast %97 : vector<4x8x1xi32> to vector<4x8x1xi32>
    %114 = vector.broadcast %113 : vector<4x8x1xi32> to vector<4x8x8xi32>
    %115 = vector.shape_cast %101 : vector<4x8x1xi32> to vector<4x8x1xi32>
    %116 = vector.broadcast %115 : vector<4x8x1xi32> to vector<4x8x8xi32>
    %117 = arith.select %112, %114, %116 : vector<4x8x8xi1>, vector<4x8x8xi32>
    %118 = arith.cmpf oge, %103, %111 : vector<4x8x8xf32>
    %119 = arith.select %118, %103, %111 : vector<4x8x8xi1>, vector<4x8x8xf32>
    %120 = vector.shape_cast %119 : vector<4x8x8xf32> to vector<4x64xf32>
    %c0_29 = arith.constant 0 : index
    %c0_30 = arith.constant 0 : index
    %c0_31 = arith.constant 0 : index
    %c0_32 = arith.constant 0 : index
    %121 = vector.load %arg9[%c0_29, %c0_30, %c0_31, %c0_32] : memref<1x1x4x64xf32, #tpu.memory_space<vmem>>, vector<1x1x4x64xf32>
    %122 = vector.shape_cast %121 : vector<1x1x4x64xf32> to vector<4x64xf32>
    %123 = vector.shape_cast %120 : vector<4x64xf32> to vector<1x1x4x64xf32>
    tpu.vector_store %arg9[%c0_29, %c0_30, %c0_31, %c0_32], %123 {strides = array<i32>} : memref<1x1x4x64xf32, #tpu.memory_space<vmem>>, vector<1x1x4x64xf32>,
    %124 = arith.select %118, %109, %117 : vector<4x8x8xi1>, vector<4x8x8xi32>
    %125 = vector.shape_cast %124 : vector<4x8x8xi32> to vector<4x64xi32>
    %c0_33 = arith.constant 0 : index
    %c0_34 = arith.constant 0 : index
    %c0_35 = arith.constant 0 : index
    %c0_36 = arith.constant 0 : index
    %126 = vector.load %arg10[%c0_33, %c0_34, %c0_35, %c0_36] : memref<1x1x4x64xi32, #tpu.memory_space<vmem>>, vector<1x1x4x64xi32>
    %127 = vector.shape_cast %126 : vector<1x1x4x64xi32> to vector<4x64xi32>
    %128 = vector.shape_cast %125 : vector<4x64xi32> to vector<1x1x4x64xi32>
    tpu.vector_store %arg10[%c0_33, %c0_34, %c0_35, %c0_36], %128 {strides = array<i32>} : memref<1x1x4x64xi32, #tpu.memory_space<vmem>>, vector<1x1x4x64xi32>,
    return
  }
  func.func @transform_0(%arg0: i32, %arg1: i32) -> (i32, i32, i32, i32, i32) {
    %c0_i32 = arith.constant 0 : i32
    %c0_i32_0 = arith.constant 0 : i32
    %c0_i32_1 = arith.constant 0 : i32
    %c0_i32_2 = arith.constant 0 : i32
    return %arg0, %arg1, %c0_i32, %c0_i32_0, %c0_i32_1 : i32, i32, i32, i32, i32
  }
  func.func @transform_1(%arg0: i32, %arg1: i32) -> (i32, i32) {
    %c0_i32 = arith.constant 0 : i32
    %c0_i32_0 = arith.constant 0 : i32
    %c0_i32_1 = arith.constant 0 : i32
    return %c0_i32, %c0_i32_0 : i32, i32
  }
  func.func @transform_2(%arg0: i32, %arg1: i32) -> (i32, i32) {
    %c0_i32 = arith.constant 0 : i32
    %c0_i32_0 = arith.constant 0 : i32
    %c0_i32_1 = arith.constant 0 : i32
    return %c0_i32, %c0_i32_0 : i32, i32
  }
  func.func @transform_3(%arg0: i32, %arg1: i32) -> (i32, i32) {
    %c0_i32 = arith.constant 0 : i32
    %c0_i32_0 = arith.constant 0 : i32
    %c0_i32_1 = arith.constant 0 : i32
    return %c0_i32, %c0_i32_0 : i32, i32
  }
  func.func @transform_4(%arg0: i32, %arg1: i32) -> (i32, i32) {
    %c0_i32 = arith.constant 0 : i32
    %c0_i32_0 = arith.constant 0 : i32
    %c0_i32_1 = arith.constant 0 : i32
    return %c0_i32, %c0_i32_0 : i32, i32
  }
  func.func @transform_5(%arg0: i32, %arg1: i32) -> (i32, i32) {
    %c0_i32 = arith.constant 0 : i32
    %c0_i32_0 = arith.constant 0 : i32
    %c0_i32_1 = arith.constant 0 : i32
    return %c0_i32, %c0_i32_0 : i32, i32
  }
  func.func @transform_6(%arg0: i32, %arg1: i32) -> (i32, i32) {
    %c0_i32 = arith.constant 0 : i32
    %c0_i32_0 = arith.constant 0 : i32
    %c0_i32_1 = arith.constant 0 : i32
    return %c0_i32, %c0_i32_0 : i32, i32
  }
  func.func @transform_7(%arg0: i32, %arg1: i32) -> (i32, i32, i32, i32) {
    %c0_i32 = arith.constant 0 : i32
    %c0_i32_0 = arith.constant 0 : i32
    %c0_i32_1 = arith.constant 0 : i32
    return %arg0, %arg1, %c0_i32, %c0_i32_0 : i32, i32, i32, i32
  }
  func.func @transform_8(%arg0: i32, %arg1: i32) -> (i32, i32, i32, i32) {
    %c0_i32 = arith.constant 0 : i32
    %c0_i32_0 = arith.constant 0 : i32
    %c0_i32_1 = arith.constant 0 : i32
    return %arg0, %arg1, %c0_i32, %c0_i32_0 : i32, i32, i32, i32
  }
}

</mosaic_0001>

<llo_original>
// kernel: segnet_down2.1
$region0: #{segnet_down2.1}
  #allocation0 [shape = 'u32[]', space=smem, size = 0x4, offset = 0x4, fixed_abs, tag = 'smem constant byte address 0x4 - core index']
  #allocation1 [shape = 'u32[72,128]{1,0:T(1,128)}', space=vmem, size = 0x9000, scoped, tag = 'internal scratch']
  %s0 = inlined_call_operand.vmem [shape: bf16[2,2,12,20,4], index: 0, kind: input, shape index: {}]
  %s1 = inlined_call_operand.vmem [shape: bf16[36,8], index: 1, kind: input, shape index: {}]
  %s2 = inlined_call_operand.vmem [shape: f32[1,8], index: 2, kind: input, shape index: {}]
  %s3 = inlined_call_operand.vmem [shape: f32[1,8], index: 3, kind: input, shape index: {}]
  %s4 = inlined_call_operand.vmem [shape: bf16[72,8], index: 4, kind: input, shape index: {}]
  %s5 = inlined_call_operand.vmem [shape: f32[1,8], index: 5, kind: input, shape index: {}]
  %s6 = inlined_call_operand.vmem [shape: f32[1,8], index: 6, kind: input, shape index: {}]
  %s7 = inlined_call_operand.vmem [shape: f32[2,2,4,64], index: 7, kind: output, shape index: {0}]
  %s8 = inlined_call_operand.vmem [shape: s32[2,2,4,64], index: 8, kind: output, shape index: {1}]
  %9 = xla_tuple %s7, %s8
  %s10 = sld [smem:[#allocation0]]
  $region69: #{segnet_down2.1} parent=0
    _
  %s12 = ssub.s32 1, %s10
  %s13 = scalar_select 0, %s12, %s10
  loop: start=0, step=1, limit=6
  $region2: #{segnet_down2.1} parent=0 // loop_pre_header
    _
  $region3: #{segnet_down2.1} parent=0 // loop_header
    %s15 = sphi 0, %s19
    %p16 = scmp.ge.s32.totalorder %s15, 6
    %s22 = sphi 0, %s34
    %s23 = sphi 0, %s30
    %s24 = sphi 0, %s22
    %s25 = sphi 0, %s23
    %s26 = sphi 0, %s24
    %s27 = sphi 0, %s25
    %s39 = sphi 0, %s41
    %s42 = sphi 0, %s39
    %s43 = sphi 0, %s42
    %s59 = sphi 0, %s43
    %s63 = sphi 0, %s63
    %s65 = sphi 0, %s63
    %s66 = sphi 0, %s65
    %s80 = sphi 0, %s66
    %s84 = sphi 0, %s84
    %s86 = sphi 0, %s84
    %s87 = sphi 0, %s86
    %s101 = sphi 0, %s87
    %s105 = sphi 0, %s105
    %s107 = sphi 0, %s105
    %s108 = sphi 0, %s107
    %s122 = sphi 0, %s108
    %s126 = sphi 0, %s126
    %s128 = sphi 0, %s126
    %s129 = sphi 0, %s128
    %s143 = sphi 0, %s129
    %s147 = sphi 0, %s147
    %s149 = sphi 0, %s147
    %s150 = sphi 0, %s149
    %s164 = sphi 0, %s150
    %s168 = sphi 0, %s168
    %s170 = sphi 0, %s168
    %s171 = sphi 0, %s170
    %s185 = sphi 0, %s171
    %s193 = sphi 0, %s195
    %s196 = sphi 0, %s193
    %s197 = sphi 0, %s196
    %s213 = sphi 0, %s197
    %s221 = sphi 0, %s223
    %s224 = sphi 0, %s221
    %s225 = sphi 0, %s224
    %s241 = sphi 0, %s225
  $region4: #{segnet_down2.1} parent=0 // loop_header_branch
    %18 = sbr.rel (%p16) target = $region8
  $region5: #{segnet_down2.1} parent=0 // loop_body
    %s20 = ssub.s32 %s15, 1
    %s21 = ssub.s32 %s15, 2
    %s28 = sadd.s32 1, %s23
    %p29 = scmp.ge.s32.totalorder %s28, 2
    %s30 = scalar_select %p29, 0, %s28
    %s31 = sadd.s32 1, %s22
    %s32 = scalar_select %p29, %s31, %s22
    %p33 = scmp.ge.s32.totalorder %s32, 2
    %s34 = scalar_select %p33, 0, %s32
    %s35 = ssub.s32 %s22, %s34
    %s36 = ssub.s32 %s23, %s30
    %s37 = sor.u32 %s35, %s36
    %p38 = scmp.eq.s32.totalorder %s37, 0
    %s40 = sadd.s32 %s39, 1
    %s41 = scalar_select %p38, %s39, %s40
    %p44 = pneg %p38
    %p45 = scmp.eq.s32.totalorder %s15, 3
    %p46 = por %p44, %p45
    %p47 = scmp.ne.s32.totalorder %s39, %s42
    %p48 = scmp.eq.s32.totalorder %s15, 0
    %p49 = por %p47, %p48
    %p50 = scmp.ne.s32.totalorder %s39, %s42
    %p51 = scmp.eq.s32.totalorder %s20, 3
    %p52 = por %p50, %p51
    %p53 = scmp.ne.s32.totalorder %s42, %s43
    %p54 = scmp.eq.s32.totalorder %s20, 0
    %p55 = por %p53, %p54
    %p56 = scmp.ne.s32.totalorder %s42, %s43
    %p57 = scmp.eq.s32.totalorder %s21, 3
    %p58 = por %p56, %p57
    %p60 = scmp.ne.s32.totalorder %s43, %s59
    %p61 = scmp.eq.s32.totalorder %s21, 0
    %p62 = por %p60, %p61
    %s64 = sadd.s32 %s63, 1
    %p67 = scmp.eq.s32.totalorder %s15, 3
    %p68 = scmp.ne.s32.totalorder %s63, %s65
    %p69 = scmp.eq.s32.totalorder %s15, 0
    %p70 = por %p68, %p69
    %p71 = scmp.ne.s32.totalorder %s63, %s65
    %p72 = scmp.eq.s32.totalorder %s20, 3
    %p73 = por %p71, %p72
    %p74 = scmp.ne.s32.totalorder %s65, %s66
    %p75 = scmp.eq.s32.totalorder %s20, 0
    %p76 = por %p74, %p75
    %p77 = scmp.ne.s32.totalorder %s65, %s66
    %p78 = scmp.eq.s32.totalorder %s21, 3
    %p79 = por %p77, %p78
    %p81 = scmp.ne.s32.totalorder %s66, %s80
    %p82 = scmp.eq.s32.totalorder %s21, 0
    %p83 = por %p81, %p82
    %s85 = sadd.s32 %s84, 1
    %p88 = scmp.eq.s32.totalorder %s15, 3
    %p89 = scmp.ne.s32.totalorder %s84, %s86
    %p90 = scmp.eq.s32.totalorder %s15, 0
    %p91 = por %p89, %p90
    %p92 = scmp.ne.s32.totalorder %s84, %s86
    %p93 = scmp.eq.s32.totalorder %s20, 3
    %p94 = por %p92, %p93
    %p95 = scmp.ne.s32.totalorder %s86, %s87
    %p96 = scmp.eq.s32.totalorder %s20, 0
    %p97 = por %p95, %p96
    %p98 = scmp.ne.s32.totalorder %s86, %s87
    %p99 = scmp.eq.s32.totalorder %s21, 3
    %p100 = por %p98, %p99
    %p102 = scmp.ne.s32.totalorder %s87, %s101
    %p103 = scmp.eq.s32.totalorder %s21, 0
    %p104 = por %p102, %p103
    %s106 = sadd.s32 %s105, 1
    %p109 = scmp.eq.s32.totalorder %s15, 3
    %p110 = scmp.ne.s32.totalorder %s105, %s107
    %p111 = scmp.eq.s32.totalorder %s15, 0
    %p112 = por %p110, %p111
    %p113 = scmp.ne.s32.totalorder %s105, %s107
    %p114 = scmp.eq.s32.totalorder %s20, 3
    %p115 = por %p113, %p114
    %p116 = scmp.ne.s32.totalorder %s107, %s108
    %p117 = scmp.eq.s32.totalorder %s20, 0
    %p118 = por %p116, %p117
    %p119 = scmp.ne.s32.totalorder %s107, %s108
    %p120 = scmp.eq.s32.totalorder %s21, 3
    %p121 = por %p119, %p120
    %p123 = scmp.ne.s32.totalorder %s108, %s122
    %p124 = scmp.eq.s32.totalorder %s21, 0
    %p125 = por %p123, %p124
    %s127 = sadd.s32 %s126, 1
    %p130 = scmp.eq.s32.totalorder %s15, 3
    %p131 = scmp.ne.s32.totalorder %s126, %s128
    %p132 = scmp.eq.s32.totalorder %s15, 0
    %p133 = por %p131, %p132
    %p134 = scmp.ne.s32.totalorder %s126, %s128
    %p135 = scmp.eq.s32.totalorder %s20, 3
    %p136 = por %p134, %p135
    %p137 = scmp.ne.s32.totalorder %s128, %s129
    %p138 = scmp.eq.s32.totalorder %s20, 0
    %p139 = por %p137, %p138
    %p140 = scmp.ne.s32.totalorder %s128, %s129
    %p141 = scmp.eq.s32.totalorder %s21, 3
    %p142 = por %p140, %p141
    %p144 = scmp.ne.s32.totalorder %s129, %s143
    %p145 = scmp.eq.s32.totalorder %s21, 0
    %p146 = por %p144, %p145
    %s148 = sadd.s32 %s147, 1
    %p151 = scmp.eq.s32.totalorder %s15, 3
    %p152 = scmp.ne.s32.totalorder %s147, %s149
    %p153 = scmp.eq.s32.totalorder %s15, 0
    %p154 = por %p152, %p153
    %p155 = scmp.ne.s32.totalorder %s147, %s149
    %p156 = scmp.eq.s32.totalorder %s20, 3
    %p157 = por %p155, %p156
    %p158 = scmp.ne.s32.totalorder %s149, %s150
    %p159 = scmp.eq.s32.totalorder %s20, 0
    %p160 = por %p158, %p159
    %p161 = scmp.ne.s32.totalorder %s149, %s150
    %p162 = scmp.eq.s32.totalorder %s21, 3
    %p163 = por %p161, %p162
    %p165 = scmp.ne.s32.totalorder %s150, %s164
    %p166 = scmp.eq.s32.totalorder %s21, 0
    %p167 = por %p165, %p166
    %s169 = sadd.s32 %s168, 1
    %p172 = scmp.eq.s32.totalorder %s15, 3
    %p173 = scmp.ne.s32.totalorder %s168, %s170
    %p174 = scmp.eq.s32.totalorder %s15, 0
    %p175 = por %p173, %p174
    %p176 = scmp.ne.s32.totalorder %s168, %s170
    %p177 = scmp.eq.s32.totalorder %s20, 3
    %p178 = por %p176, %p177
    %p179 = scmp.ne.s32.totalorder %s170, %s171
    %p180 = scmp.eq.s32.totalorder %s20, 0
    %p181 = por %p179, %p180
    %p182 = scmp.ne.s32.totalorder %s170, %s171
    %p183 = scmp.eq.s32.totalorder %s21, 3
    %p184 = por %p182, %p183
    %p186 = scmp.ne.s32.totalorder %s171, %s185
    %p187 = scmp.eq.s32.totalorder %s21, 0
    %p188 = por %p186, %p187
    %s189 = ssub.s32 %s22, %s34
    %s190 = ssub.s32 %s23, %s30
    %s191 = sor.u32 %s189, %s190
    %p192 = scmp.eq.s32.totalorder %s191, 0
    %s194 = sadd.s32 %s193, 1
    %s195 = scalar_select %p192, %s193, %s194
    %p198 = pneg %p192
    %p199 = scmp.eq.s32.totalorder %s15, 3
    %p200 = por %p198, %p199
    %p201 = scmp.ne.s32.totalorder %s193, %s196
    %p202 = scmp.eq.s32.totalorder %s15, 0
    %p203 = por %p201, %p202
    %p204 = scmp.ne.s32.totalorder %s193, %s196
    %p205 = scmp.eq.s32.totalorder %s20, 3
    %p206 = por %p204, %p205
    %p207 = scmp.ne.s32.totalorder %s196, %s197
    %p208 = scmp.eq.s32.totalorder %s20, 0
    %p209 = por %p207, %p208
    %p210 = scmp.ne.s32.totalorder %s196, %s197
    %p211 = scmp.eq.s32.totalorder %s21, 3
    %p212 = por %p210, %p211
    %p214 = scmp.ne.s32.totalorder %s197, %s213
    %p215 = scmp.eq.s32.totalorder %s21, 0
    %p216 = por %p214, %p215
    %s217 = ssub.s32 %s22, %s34
    %s218 = ssub.s32 %s23, %s30
    %s219 = sor.u32 %s217, %s218
    %p220 = scmp.eq.s32.totalorder %s219, 0
    %s222 = sadd.s32 %s221, 1
    %s223 = scalar_select %p220, %s221, %s222
    %p226 = pneg %p220
    %p227 = scmp.eq.s32.totalorder %s15, 3
    %p228 = por %p226, %p227
    %p229 = scmp.ne.s32.totalorder %s221, %s224
    %p230 = scmp.eq.s32.totalorder %s15, 0
    %p231 = por %p229, %p230
    %p232 = scmp.ne.s32.totalorder %s221, %s224
    %p233 = scmp.eq.s32.totalorder %s20, 3
    %p234 = por %p232, %p233
    %p235 = scmp.ne.s32.totalorder %s224, %s225
    %p236 = scmp.eq.s32.totalorder %s20, 0
    %p237 = por %p235, %p236
    %p238 = scmp.ne.s32.totalorder %s224, %s225
    %p239 = scmp.eq.s32.totalorder %s21, 3
    %p240 = por %p238, %p239
    %p242 = scmp.ne.s32.totalorder %s225, %s241
    %p243 = scmp.eq.s32.totalorder %s21, 0
    %p244 = por %p242, %p243
    %p245 = scmp.le.s32.totalorder 1, %s15
    %p246 = scmp.lt.s32.totalorder %s15, 5
    %p247 = pnand %p245, %p246
    %p248 = pneg %p247
    // Predicated region
    $region9: #{segnet_down2.1} parent=5 // pred_check
      _
    $region10: #{segnet_down2.1} parent=5 // pred_check_branch
      %250 = sbr.rel (%p247) target = $region12
    $region11: #{segnet_down2.1} parent=5 // pred_region
      %s251 = ssub.s32 %s15, 1
      // Predicated region
      $region13: #{segnet_down2.1} parent=11 // pred_check
        %p252 = pneg %p76
      $region14: #{segnet_down2.1} parent=11 // pred_check_branch
        %254 = sbr.rel (%p252) target = $region16
      $region15: #{segnet_down2.1} parent=11 // pred_region
        _
      $region16: #{segnet_down2.1} parent=11 // pred_fallthru
        _
      // Predicated region
      $region17: #{segnet_down2.1} parent=11 // pred_check
        %p255 = pneg %p97
      $region18: #{segnet_down2.1} parent=11 // pred_check_branch
        %257 = sbr.rel (%p255) target = $region20
      $region19: #{segnet_down2.1} parent=11 // pred_region
        _
      $region20: #{segnet_down2.1} parent=11 // pred_fallthru
        _
      // Predicated region
      $region21: #{segnet_down2.1} parent=11 // pred_check
        %p258 = pneg %p118
      $region22: #{segnet_down2.1} parent=11 // pred_check_branch
        %260 = sbr.rel (%p258) target = $region24
      $region23: #{segnet_down2.1} parent=11 // pred_region
        _
      $region24: #{segnet_down2.1} parent=11 // pred_fallthru
        _
      // Predicated region
      $region25: #{segnet_down2.1} parent=11 // pred_check
        %p261 = pneg %p139
      $region26: #{segnet_down2.1} parent=11 // pred_check_branch
        %263 = sbr.rel (%p261) target = $region28
      $region27: #{segnet_down2.1} parent=11 // pred_region
        _
      $region28: #{segnet_down2.1} parent=11 // pred_fallthru
        _
      // Predicated region
      $region29: #{segnet_down2.1} parent=11 // pred_check
        %p264 = pneg %p160
      $region30: #{segnet_down2.1} parent=11 // pred_check_branch
        %266 = sbr.rel (%p264) target = $region32
      $region31: #{segnet_down2.1} parent=11 // pred_region
        _
      $region32: #{segnet_down2.1} parent=11 // pred_fallthru
        _
      // Predicated region
      $region33: #{segnet_down2.1} parent=11 // pred_check
        %p267 = pneg %p181
      $region34: #{segnet_down2.1} parent=11 // pred_check_branch
        %269 = sbr.rel (%p267) target = $region36
      $region35: #{segnet_down2.1} parent=11 // pred_region
        _
      $region36: #{segnet_down2.1} parent=11 // pred_fallthru
        _
    $region12: #{segnet_down2.1} parent=5 // pred_fallthru
      _
    %p270 = scmp.lt.s32.totalorder %s15, 4
    // Predicated region
    $region37: #{segnet_down2.1} parent=5 // pred_check
      %p271 = pneg %p270
    $region38: #{segnet_down2.1} parent=5 // pred_check_branch
      %273 = sbr.rel (%p271) target = $region40
    $region39: #{segnet_down2.1} parent=5 // pred_region
      // Predicated region
      $region41: #{segnet_down2.1} parent=39 // pred_check
        %p274 = pneg %p49
      $region42: #{segnet_down2.1} parent=39 // pred_check_branch
        %276 = sbr.rel (%p274) target = $region44
      $region43: #{segnet_down2.1} parent=39 // pred_region
        %p277 = scmp.lt.s32.totalorder %s22, 1
        %s278 = scalar_select %p277, %s22, 1
        %p279 = scmp.lt.s32.totalorder %s23, 1
        %s280 = scalar_select %p279, %s23, 1
        %s281 = smul.addr %s280, 36
        %s282 = smul.addr %s278, 72
        %s283 = sadd.s32 %s281, %s282
        %s284 = smul.addr %s283, 4
        %s285 = scalar_lea.vmem %s0, %s284
      $region44: #{segnet_down2.1} parent=39 // pred_fallthru
        _
    $region40: #{segnet_down2.1} parent=5 // pred_fallthru
      _
    %p286 = scmp.le.s32.totalorder 1, %s15
    %p287 = scmp.lt.s32.totalorder %s15, 5
    %p288 = pnand %p286, %p287
    %p289 = pneg %p288
    // Predicated region
    $region45: #{segnet_down2.1} parent=5 // pred_check
      _
    $region46: #{segnet_down2.1} parent=5 // pred_check_branch
      %291 = sbr.rel (%p288) target = $region48
    $region47: #{segnet_down2.1} parent=5 // pred_region
      %s292 = ssub.s32 %s15, 1
      %p293 = scmp.lt.s32.totalorder %s24, 1
      %s294 = scalar_select %p293, %s24, 1
      %p295 = scmp.lt.s32.totalorder %s25, 1
      %s296 = scalar_select %p295, %s25, 1
      %s297 = smul.addr %s296, 36
      %s298 = smul.addr %s294, 72
      %s299 = sadd.s32 %s297, %s298
      %s300 = smul.addr %s299, 4
      %s301 = scalar_lea.vmem %s0, %s300
      %p302 = pneg %p55
      %p303 = pneg %p52
      %p304 = pneg %p76
      %p305 = pneg %p73
      %p306 = pneg %p97
      %p307 = pneg %p94
      %p308 = pneg %p118
      %p309 = pneg %p115
      %p310 = pneg %p139
      %p311 = pneg %p136
      %p312 = pneg %p160
      %p313 = pneg %p157
      %p314 = pneg %p181
      %p315 = pneg %p178
      %p316 = pneg %p209
      %p317 = pneg %p206
      %p318 = scmp.lt.s32.totalorder %s24, 1
      %s319 = scalar_select %p318, %s24, 1
      %p320 = scmp.lt.s32.totalorder %s25, 1
      %s321 = scalar_select %p320, %s25, 1
      %s322 = smul.addr %s319, 2
      %s323 = sadd.s32 %s321, %s322
      %s324 = smul.addr %s323, 4
      %s325 = scalar_lea.vmem %s7, %s324
      %p326 = pneg %p237
      %p327 = pneg %p234
      %p328 = scmp.lt.s32.totalorder %s24, 1
      %s329 = scalar_select %p328, %s24, 1
      %p330 = scmp.lt.s32.totalorder %s25, 1
      %s331 = scalar_select %p330, %s25, 1
      %s332 = smul.addr %s329, 2
      %s333 = sadd.s32 %s331, %s332
      %s334 = smul.addr %s333, 4
      %s335 = scalar_lea.vmem %s8, %s334
      %p336 = scmp.lt.s32.totalorder %s24, 1
      %s337 = scalar_select %p336, %s24, 1
      %p338 = scmp.lt.s32.totalorder %s25, 1
      %s339 = scalar_select %p338, %s25, 1
      %s340 = smul.addr %s339, 36
      %s341 = smul.addr %s337, 72
      %s342 = sadd.s32 %s340, %s341
      %s343 = smul.addr %s342, 4
      %s344 = scalar_lea.vmem %s0, %s343
      %p345 = scmp.lt.s32.totalorder %s24, 1
      %s346 = scalar_select %p345, %s24, 1
      %p347 = scmp.lt.s32.totalorder %s25, 1
      %s348 = scalar_select %p347, %s25, 1
      %s349 = smul.addr %s346, 2
      %s350 = sadd.s32 %s348, %s349
      %s351 = smul.addr %s350, 4
      %s352 = scalar_lea.vmem %s7, %s351
      %p353 = scmp.lt.s32.totalorder %s24, 1
      %s354 = scalar_select %p353, %s24, 1
      %p355 = scmp.lt.s32.totalorder %s25, 1
      %s356 = scalar_select %p355, %s25, 1
      %s357 = smul.addr %s354, 2
      %s358 = sadd.s32 %s356, %s357
      %s359 = smul.addr %s358, 4
      %s360 = scalar_lea.vmem %s8, %s359
      %v362 = vld [vmem:[%s344] sm:$0xf]
      %v363 = vld [vmem:[%s344 + $0x4] sm:$0xf]
      %v364 = vld [vmem:[%s344 + $0x8] sm:$0x3]
      %v365 = vld [vmem:[%s344 + $0xc] sm:$0xf]
      %v366 = vld [vmem:[%s344 + $0x10] sm:$0xf]
      %v367 = vld [vmem:[%s344 + $0x14] sm:$0x3]
      %v368 = vld [vmem:[%s344 + $0x18] sm:$0xf]
      %v369 = vld [vmem:[%s344 + $0x1c] sm:$0xf]
      %v370 = vld [vmem:[%s344 + $0x20] sm:$0x3]
      %v371 = vld [vmem:[%s344 + $0x24] sm:$0xf]
      %v372 = vld [vmem:[%s344 + $0x28] sm:$0xf]
      %v373 = vld [vmem:[%s344 + $0x2c] sm:$0x3]
      %v374 = vld [vmem:[%s344 + $0x30] sm:$0xf]
      %v375 = vld [vmem:[%s344 + $0x34] sm:$0xf]
      %v376 = vld [vmem:[%s344 + $0x38] sm:$0x3]
      %v377 = vld [vmem:[%s344 + $0x3c] sm:$0xf]
      %v378 = vld [vmem:[%s344 + $0x40] sm:$0xf]
      %v379 = vld [vmem:[%s344 + $0x44] sm:$0x3]
      %v380 = vld [vmem:[%s344 + $0x48] sm:$0xf]
      %v381 = vld [vmem:[%s344 + $0x4c] sm:$0xf]
      %v382 = vld [vmem:[%s344 + $0x50] sm:$0x3]
      %v383 = vld [vmem:[%s344 + $0x54] sm:$0xf]
      %v384 = vld [vmem:[%s344 + $0x58] sm:$0xf]
      %v385 = vld [vmem:[%s344 + $0x5c] sm:$0x3]
      %v386 = vld [vmem:[%s344 + $0x60] sm:$0xf]
      %v387 = vld [vmem:[%s344 + $0x64] sm:$0xf]
      %v388 = vld [vmem:[%s344 + $0x68] sm:$0x3]
      %v389 = vld [vmem:[%s344 + $0x6c] sm:$0xf]
      %v390 = vld [vmem:[%s344 + $0x70] sm:$0xf]
      %v391 = vld [vmem:[%s344 + $0x74] sm:$0x3]
      %v392 = vld [vmem:[%s344 + $0x78] sm:$0xf]
      %v393 = vld [vmem:[%s344 + $0x7c] sm:$0xf]
      %v394 = vld [vmem:[%s344 + $0x80] sm:$0x3]
      %v395 = vld [vmem:[%s344 + $0x84] sm:$0xf]
      %v396 = vld [vmem:[%s344 + $0x88] sm:$0xf]
      %v397 = vld [vmem:[%s344 + $0x8c] sm:$0x3]
      %v428 = vunpack.c.l.b16 %v362
      %v429 = vunpack.c.l.b16 %v363
      %v430 = vunpack.c.l.b16 %v364
      %v431 = vunpack.c.l.b16 %v365
      %v432 = vunpack.c.l.b16 %v366
      %v433 = vunpack.c.l.b16 %v367
      %v434 = vunpack.c.l.b16 %v368
      %v435 = vunpack.c.l.b16 %v369
      %v436 = vunpack.c.l.b16 %v370
      %v437 = vunpack.c.l.b16 %v371
      %v438 = vunpack.c.l.b16 %v372
      %v439 = vunpack.c.l.b16 %v373
      %v440 = vunpack.c.l.b16 %v374
      %v441 = vunpack.c.l.b16 %v375
      %v442 = vunpack.c.l.b16 %v376
      %v443 = vunpack.c.l.b16 %v377
      %v444 = vunpack.c.l.b16 %v378
      %v445 = vunpack.c.l.b16 %v379
      %v446 = vunpack.c.l.b16 %v380
      %v447 = vunpack.c.l.b16 %v381
      %v448 = vunpack.c.l.b16 %v382
      %v449 = vunpack.c.l.b16 %v383
      %v450 = vunpack.c.l.b16 %v384
      %v451 = vunpack.c.l.b16 %v385
      %v452 = vunpack.c.l.b16 %v386
      %v453 = vunpack.c.l.b16 %v387
      %v454 = vunpack.c.l.b16 %v388
      %v455 = vunpack.c.l.b16 %v389
      %v456 = vunpack.c.l.b16 %v390
      %v457 = vunpack.c.l.b16 %v391
      %v458 = vpack.c.b16 %v429, %v428
      %v459 = vpack.c.b16 %v430, %v430
      %v460 = vpack.c.b16 %v432, %v431
      %v461 = vpack.c.b16 %v433, %v433
      %v462 = vpack.c.b16 %v435, %v434
      %v463 = vpack.c.b16 %v436, %v436
      %v464 = vpack.c.b16 %v438, %v437
      %v465 = vpack.c.b16 %v439, %v439
      %v466 = vpack.c.b16 %v441, %v440
      %v467 = vpack.c.b16 %v442, %v442
      %v468 = vpack.c.b16 %v444, %v443
      %v469 = vpack.c.b16 %v445, %v445
      %v470 = vpack.c.b16 %v447, %v446
      %v471 = vpack.c.b16 %v448, %v448
      %v472 = vpack.c.b16 %v450, %v449
      %v473 = vpack.c.b16 %v451, %v451
      %v474 = vpack.c.b16 %v453, %v452
      %v475 = vpack.c.b16 %v454, %v454
      %v476 = vpack.c.b16 %v456, %v455
      %v477 = vpack.c.b16 %v457, %v457
      %vm478 = vsmask.f32 7424
      %v480 = vshrl.u32 %v458, 16
      %v482 = vshll.u32 %v458, 16
      %v484 = vrot.slane %v482, 1
      %v485 = vor.u32 %v480, %v484
      %v487 = vshll.u32 %v459, 16
      %v489 = vrot.slane %v487, 1
      %v490 = vsel %vm478, %v485, %v489
      %v491 = vshrl.u32 %v459, 16
      %v493 = vor.u32 %v491, %v489
      %v495 = vshrl.u32 %v460, 16
      %v497 = vshll.u32 %v460, 16
      %v499 = vrot.slane %v497, 1
      %v500 = vor.u32 %v495, %v499
      %v502 = vshll.u32 %v461, 16
      %v504 = vrot.slane %v502, 1
      %v505 = vsel %vm478, %v500, %v504
      %v506 = vshrl.u32 %v461, 16
      %v508 = vor.u32 %v506, %v504
      %v510 = vshrl.u32 %v462, 16
      %v512 = vshll.u32 %v462, 16
      %v514 = vrot.slane %v512, 1
      %v515 = vor.u32 %v510, %v514
      %v517 = vshll.u32 %v463, 16
      %v519 = vrot.slane %v517, 1
      %v520 = vsel %vm478, %v515, %v519
      %v521 = vshrl.u32 %v463, 16
      %v523 = vor.u32 %v521, %v519
      %v525 = vshrl.u32 %v464, 16
      %v527 = vshll.u32 %v464, 16
      %v529 = vrot.slane %v527, 1
      %v530 = vor.u32 %v525, %v529
      %v532 = vshll.u32 %v465, 16
      %v534 = vrot.slane %v532, 1
      %v535 = vsel %vm478, %v530, %v534
      %v536 = vshrl.u32 %v465, 16
      %v538 = vor.u32 %v536, %v534
      %v540 = vshrl.u32 %v466, 16
      %v542 = vshll.u32 %v466, 16
      %v544 = vrot.slane %v542, 1
      %v545 = vor.u32 %v540, %v544
      %v547 = vshll.u32 %v467, 16
      %v549 = vrot.slane %v547, 1
      %v550 = vsel %vm478, %v545, %v549
      %v551 = vshrl.u32 %v467, 16
      %v553 = vor.u32 %v551, %v549
      %v555 = vshrl.u32 %v468, 16
      %v557 = vshll.u32 %v468, 16
      %v559 = vrot.slane %v557, 1
      %v560 = vor.u32 %v555, %v559
      %v562 = vshll.u32 %v469, 16
      %v564 = vrot.slane %v562, 1
      %v565 = vsel %vm478, %v560, %v564
      %v566 = vshrl.u32 %v469, 16
      %v568 = vor.u32 %v566, %v564
      %v570 = vshrl.u32 %v470, 16
      %v572 = vshll.u32 %v470, 16
      %v574 = vrot.slane %v572, 1
      %v575 = vor.u32 %v570, %v574
      %v577 = vshll.u32 %v471, 16
      %v579 = vrot.slane %v577, 1
      %v580 = vsel %vm478, %v575, %v579
      %v581 = vshrl.u32 %v471, 16
      %v583 = vor.u32 %v581, %v579
      %v585 = vshrl.u32 %v472, 16
      %v587 = vshll.u32 %v472, 16
      %v589 = vrot.slane %v587, 1
      %v590 = vor.u32 %v585, %v589
      %v592 = vshll.u32 %v473, 16
      %v594 = vrot.slane %v592, 1
      %v595 = vsel %vm478, %v590, %v594
      %v596 = vshrl.u32 %v473, 16
      %v598 = vor.u32 %v596, %v594
      %v600 = vshrl.u32 %v474, 16
      %v602 = vshll.u32 %v474, 16
      %v604 = vrot.slane %v602, 1
      %v605 = vor.u32 %v600, %v604
      %v607 = vshll.u32 %v475, 16
      %v609 = vrot.slane %v607, 1
      %v610 = vsel %vm478, %v605, %v609
      %v611 = vshrl.u32 %v475, 16
      %v613 = vor.u32 %v611, %v609
      %v615 = vshrl.u32 %v476, 16
      %v617 = vshll.u32 %v476, 16
      %v619 = vrot.slane %v617, 1
      %v620 = vor.u32 %v615, %v619
      %v622 = vshll.u32 %v477, 16
      %v624 = vrot.slane %v622, 1
      %v625 = vsel %vm478, %v620, %v624
      %v626 = vshrl.u32 %v477, 16
      %v628 = vor.u32 %v626, %v624
      %629 = vrot.lane.b32.xlu0 %v490, 4
      %v630 = vpop.permute.xlu0 %629
      %631 = vrot.lane.b32.xlu0 %v493, 4
      %v632 = vpop.permute.xlu0 %631
      %633 = vrot.lane.b32.xlu0 %v505, 4
      %v634 = vpop.permute.xlu0 %633
      %635 = vrot.lane.b32.xlu0 %v508, 4
      %v636 = vpop.permute.xlu0 %635
      %637 = vrot.lane.b32.xlu0 %v520, 4
      %v638 = vpop.permute.xlu0 %637
      %639 = vrot.lane.b32.xlu0 %v523, 4
      %v640 = vpop.permute.xlu0 %639
      %641 = vrot.lane.b32.xlu0 %v535, 4
      %v642 = vpop.permute.xlu0 %641
      %643 = vrot.lane.b32.xlu0 %v538, 4
      %v644 = vpop.permute.xlu0 %643
      %645 = vrot.lane.b32.xlu0 %v550, 4
      %v646 = vpop.permute.xlu0 %645
      %647 = vrot.lane.b32.xlu0 %v553, 4
      %v648 = vpop.permute.xlu0 %647
      %649 = vrot.lane.b32.xlu0 %v565, 4
      %v650 = vpop.permute.xlu0 %649
      %651 = vrot.lane.b32.xlu0 %v568, 4
      %v652 = vpop.permute.xlu0 %651
      %653 = vrot.lane.b32.xlu0 %v580, 4
      %v654 = vpop.permute.xlu0 %653
      %655 = vrot.lane.b32.xlu0 %v583, 4
      %v656 = vpop.permute.xlu0 %655
      %657 = vrot.lane.b32.xlu0 %v595, 4
      %v658 = vpop.permute.xlu0 %657
      %659 = vrot.lane.b32.xlu0 %v598, 4
      %v660 = vpop.permute.xlu0 %659
      %661 = vrot.lane.b32.xlu0 %v610, 4
      %v662 = vpop.permute.xlu0 %661
      %663 = vrot.lane.b32.xlu0 %v613, 4
      %v664 = vpop.permute.xlu0 %663
      %665 = vrot.lane.b32.xlu0 %v625, 4
      %v666 = vpop.permute.xlu0 %665
      %667 = vrot.lane.b32.xlu0 %v628, 4
      %v668 = vpop.permute.xlu0 %667
      %vm669 = vcmask 1046528
      %v670 = vrot.slane %v458, 1
      %v671 = vrot.slane %v459, 1
      %v672 = vsel %vm669, %v670, %v671
      %v673 = vrot.slane %v460, 1
      %v674 = vrot.slane %v461, 1
      %v675 = vsel %vm669, %v673, %v674
      %v676 = vrot.slane %v462, 1
      %v677 = vrot.slane %v463, 1
      %v678 = vsel %vm669, %v676, %v677
      %v679 = vrot.slane %v464, 1
      %v680 = vrot.slane %v465, 1
      %v681 = vsel %vm669, %v679, %v680
      %v682 = vrot.slane %v466, 1
      %v683 = vrot.slane %v467, 1
      %v684 = vsel %vm669, %v682, %v683
      %v685 = vrot.slane %v468, 1
      %v686 = vrot.slane %v469, 1
      %v687 = vsel %vm669, %v685, %v686
      %v688 = vrot.slane %v470, 1
      %v689 = vrot.slane %v471, 1
      %v690 = vsel %vm669, %v688, %v689
      %v691 = vrot.slane %v472, 1
      %v692 = vrot.slane %v473, 1
      %v693 = vsel %vm669, %v691, %v692
      %v694 = vrot.slane %v474, 1
      %v695 = vrot.slane %v475, 1
      %v696 = vsel %vm669, %v694, %v695
      %v697 = vrot.slane %v476, 1
      %v698 = vrot.slane %v477, 1
      %v699 = vsel %vm669, %v697, %v698
      %700 = vrot.lane.b32.xlu0 %v672, 8
      %v701 = vpop.permute.xlu0 %700
      %702 = vrot.lane.b32.xlu0 %v671, 8
      %v703 = vpop.permute.xlu0 %702
      %704 = vrot.lane.b32.xlu0 %v675, 8
      %v705 = vpop.permute.xlu0 %704
      %706 = vrot.lane.b32.xlu0 %v674, 8
      %v707 = vpop.permute.xlu0 %706
      %708 = vrot.lane.b32.xlu0 %v678, 8
      %v709 = vpop.permute.xlu0 %708
      %710 = vrot.lane.b32.xlu0 %v677, 8
      %v711 = vpop.permute.xlu0 %710
      %712 = vrot.lane.b32.xlu0 %v681, 8
      %v713 = vpop.permute.xlu0 %712
      %714 = vrot.lane.b32.xlu0 %v680, 8
      %v715 = vpop.permute.xlu0 %714
      %716 = vrot.lane.b32.xlu0 %v684, 8
      %v717 = vpop.permute.xlu0 %716
      %718 = vrot.lane.b32.xlu0 %v683, 8
      %v719 = vpop.permute.xlu0 %718
      %720 = vrot.lane.b32.xlu0 %v687, 8
      %v721 = vpop.permute.xlu0 %720
      %722 = vrot.lane.b32.xlu0 %v686, 8
      %v723 = vpop.permute.xlu0 %722
      %724 = vrot.lane.b32.xlu0 %v690, 8
      %v725 = vpop.permute.xlu0 %724
      %726 = vrot.lane.b32.xlu0 %v689, 8
      %v727 = vpop.permute.xlu0 %726
      %728 = vrot.lane.b32.xlu0 %v693, 8
      %v729 = vpop.permute.xlu0 %728
      %730 = vrot.lane.b32.xlu0 %v692, 8
      %v731 = vpop.permute.xlu0 %730
      %732 = vrot.lane.b32.xlu0 %v696, 8
      %v733 = vpop.permute.xlu0 %732
      %734 = vrot.lane.b32.xlu0 %v695, 8
      %v735 = vpop.permute.xlu0 %734
      %736 = vrot.lane.b32.xlu0 %v699, 8
      %v737 = vpop.permute.xlu0 %736
      %738 = vrot.lane.b32.xlu0 %v698, 8
      %v739 = vpop.permute.xlu0 %738
      %v743 = vunpack.c.l.b16 %v392
      %v744 = vunpack.c.l.b16 %v393
      %v745 = vunpack.c.l.b16 %v394
      %v746 = vpack.c.b16 %v744, %v743
      %v747 = vpack.c.b16 %v745, %v745
      %748 = vrot.lane.b32.xlu0 %v460, 12
      %v749 = vpop.permute.xlu0 %748
      %750 = vrot.lane.b32.xlu0 %v461, 12
      %v751 = vpop.permute.xlu0 %750
      %752 = vrot.lane.b32.xlu0 %v462, 12
      %v753 = vpop.permute.xlu0 %752
      %754 = vrot.lane.b32.xlu0 %v463, 12
      %v755 = vpop.permute.xlu0 %754
      %756 = vrot.lane.b32.xlu0 %v464, 12
      %v757 = vpop.permute.xlu0 %756
      %758 = vrot.lane.b32.xlu0 %v465, 12
      %v759 = vpop.permute.xlu0 %758
      %760 = vrot.lane.b32.xlu0 %v466, 12
      %v761 = vpop.permute.xlu0 %760
      %762 = vrot.lane.b32.xlu0 %v467, 12
      %v763 = vpop.permute.xlu0 %762
      %764 = vrot.lane.b32.xlu0 %v468, 12
      %v765 = vpop.permute.xlu0 %764
      %766 = vrot.lane.b32.xlu0 %v469, 12
      %v767 = vpop.permute.xlu0 %766
      %768 = vrot.lane.b32.xlu0 %v470, 12
      %v769 = vpop.permute.xlu0 %768
      %770 = vrot.lane.b32.xlu0 %v471, 12
      %v771 = vpop.permute.xlu0 %770
      %772 = vrot.lane.b32.xlu0 %v472, 12
      %v773 = vpop.permute.xlu0 %772
      %774 = vrot.lane.b32.xlu0 %v473, 12
      %v775 = vpop.permute.xlu0 %774
      %776 = vrot.lane.b32.xlu0 %v474, 12
      %v777 = vpop.permute.xlu0 %776
      %778 = vrot.lane.b32.xlu0 %v475, 12
      %v779 = vpop.permute.xlu0 %778
      %780 = vrot.lane.b32.xlu0 %v476, 12
      %v781 = vpop.permute.xlu0 %780
      %782 = vrot.lane.b32.xlu0 %v477, 12
      %v783 = vpop.permute.xlu0 %782
      %784 = vrot.lane.b32.xlu0 %v746, 12
      %v785 = vpop.permute.xlu0 %784
      %786 = vrot.lane.b32.xlu0 %v747, 12
      %v787 = vpop.permute.xlu0 %786
      %v789 = vshrl.u32 %v746, 16
      %v791 = vshll.u32 %v746, 16
      %v793 = vrot.slane %v791, 1
      %v794 = vor.u32 %v789, %v793
      %v796 = vshll.u32 %v747, 16
      %v798 = vrot.slane %v796, 1
      %v799 = vsel %vm478, %v794, %v798
      %v800 = vshrl.u32 %v747, 16
      %v802 = vor.u32 %v800, %v798
      %803 = vrot.lane.b32.xlu0 %v505, 16
      %v804 = vpop.permute.xlu0 %803
      %805 = vrot.lane.b32.xlu0 %v508, 16
      %v806 = vpop.permute.xlu0 %805
      %807 = vrot.lane.b32.xlu0 %v520, 16
      %v808 = vpop.permute.xlu0 %807
      %809 = vrot.lane.b32.xlu0 %v523, 16
      %v810 = vpop.permute.xlu0 %809
      %811 = vrot.lane.b32.xlu0 %v535, 16
      %v812 = vpop.permute.xlu0 %811
      %813 = vrot.lane.b32.xlu0 %v538, 16
      %v814 = vpop.permute.xlu0 %813
      %815 = vrot.lane.b32.xlu0 %v550, 16
      %v816 = vpop.permute.xlu0 %815
      %817 = vrot.lane.b32.xlu0 %v553, 16
      %v818 = vpop.permute.xlu0 %817
      %819 = vrot.lane.b32.xlu0 %v565, 16
      %v820 = vpop.permute.xlu0 %819
      %821 = vrot.lane.b32.xlu0 %v568, 16
      %v822 = vpop.permute.xlu0 %821
      %823 = vrot.lane.b32.xlu0 %v580, 16
      %v824 = vpop.permute.xlu0 %823
      %825 = vrot.lane.b32.xlu0 %v583, 16
      %v826 = vpop.permute.xlu0 %825
      %827 = vrot.lane.b32.xlu0 %v595, 16
      %v828 = vpop.permute.xlu0 %827
      %829 = vrot.lane.b32.xlu0 %v598, 16
      %v830 = vpop.permute.xlu0 %829
      %831 = vrot.lane.b32.xlu0 %v610, 16
      %v832 = vpop.permute.xlu0 %831
      %833 = vrot.lane.b32.xlu0 %v613, 16
      %v834 = vpop.permute.xlu0 %833
      %835 = vrot.lane.b32.xlu0 %v625, 16
      %v836 = vpop.permute.xlu0 %835
      %837 = vrot.lane.b32.xlu0 %v628, 16
      %v838 = vpop.permute.xlu0 %837
      %839 = vrot.lane.b32.xlu0 %v799, 16
      %v840 = vpop.permute.xlu0 %839
      %841 = vrot.lane.b32.xlu0 %v802, 16
      %v842 = vpop.permute.xlu0 %841
      %v843 = vrot.slane %v746, 1
      %v844 = vrot.slane %v747, 1
      %v845 = vsel %vm669, %v843, %v844
      %846 = vrot.lane.b32.xlu0 %v675, 20
      %v847 = vpop.permute.xlu0 %846
      %848 = vrot.lane.b32.xlu0 %v674, 20
      %v849 = vpop.permute.xlu0 %848
      %850 = vrot.lane.b32.xlu0 %v678, 20
      %v851 = vpop.permute.xlu0 %850
      %852 = vrot.lane.b32.xlu0 %v677, 20
      %v853 = vpop.permute.xlu0 %852
      %854 = vrot.lane.b32.xlu0 %v681, 20
      %v855 = vpop.permute.xlu0 %854
      %856 = vrot.lane.b32.xlu0 %v680, 20
      %v857 = vpop.permute.xlu0 %856
      %858 = vrot.lane.b32.xlu0 %v684, 20
      %v859 = vpop.permute.xlu0 %858
      %860 = vrot.lane.b32.xlu0 %v683, 20
      %v861 = vpop.permute.xlu0 %860
      %862 = vrot.lane.b32.xlu0 %v687, 20
      %v863 = vpop.permute.xlu0 %862
      %864 = vrot.lane.b32.xlu0 %v686, 20
      %v865 = vpop.permute.xlu0 %864
      %866 = vrot.lane.b32.xlu0 %v690, 20
      %v867 = vpop.permute.xlu0 %866
      %868 = vrot.lane.b32.xlu0 %v689, 20
      %v869 = vpop.permute.xlu0 %868
      %870 = vrot.lane.b32.xlu0 %v693, 20
      %v871 = vpop.permute.xlu0 %870
      %872 = vrot.lane.b32.xlu0 %v692, 20
      %v873 = vpop.permute.xlu0 %872
      %874 = vrot.lane.b32.xlu0 %v696, 20
      %v875 = vpop.permute.xlu0 %874
      %876 = vrot.lane.b32.xlu0 %v695, 20
      %v877 = vpop.permute.xlu0 %876
      %878 = vrot.lane.b32.xlu0 %v699, 20
      %v879 = vpop.permute.xlu0 %878
      %880 = vrot.lane.b32.xlu0 %v698, 20
      %v881 = vpop.permute.xlu0 %880
      %882 = vrot.lane.b32.xlu0 %v845, 20
      %v883 = vpop.permute.xlu0 %882
      %884 = vrot.lane.b32.xlu0 %v844, 20
      %v885 = vpop.permute.xlu0 %884
      %v889 = vunpack.c.l.b16 %v395
      %v890 = vunpack.c.l.b16 %v396
      %v891 = vunpack.c.l.b16 %v397
      %v892 = vpack.c.b16 %v890, %v889
      %v893 = vpack.c.b16 %v891, %v891
      %894 = vrot.lane.b32.xlu0 %v462, 24
      %v895 = vpop.permute.xlu0 %894
      %896 = vrot.lane.b32.xlu0 %v463, 24
      %v897 = vpop.permute.xlu0 %896
      %898 = vrot.lane.b32.xlu0 %v464, 24
      %v899 = vpop.permute.xlu0 %898
      %900 = vrot.lane.b32.xlu0 %v465, 24
      %v901 = vpop.permute.xlu0 %900
      %902 = vrot.lane.b32.xlu0 %v466, 24
      %v903 = vpop.permute.xlu0 %902
      %904 = vrot.lane.b32.xlu0 %v467, 24
      %v905 = vpop.permute.xlu0 %904
      %906 = vrot.lane.b32.xlu0 %v468, 24
      %v907 = vpop.permute.xlu0 %906
      %908 = vrot.lane.b32.xlu0 %v469, 24
      %v909 = vpop.permute.xlu0 %908
      %910 = vrot.lane.b32.xlu0 %v470, 24
      %v911 = vpop.permute.xlu0 %910
      %912 = vrot.lane.b32.xlu0 %v471, 24
      %v913 = vpop.permute.xlu0 %912
      %914 = vrot.lane.b32.xlu0 %v472, 24
      %v915 = vpop.permute.xlu0 %914
      %916 = vrot.lane.b32.xlu0 %v473, 24
      %v917 = vpop.permute.xlu0 %916
      %918 = vrot.lane.b32.xlu0 %v474, 24
      %v919 = vpop.permute.xlu0 %918
      %920 = vrot.lane.b32.xlu0 %v475, 24
      %v921 = vpop.permute.xlu0 %920
      %922 = vrot.lane.b32.xlu0 %v476, 24
      %v923 = vpop.permute.xlu0 %922
      %924 = vrot.lane.b32.xlu0 %v477, 24
      %v925 = vpop.permute.xlu0 %924
      %926 = vrot.lane.b32.xlu0 %v746, 24
      %v927 = vpop.permute.xlu0 %926
      %928 = vrot.lane.b32.xlu0 %v747, 24
      %v929 = vpop.permute.xlu0 %928
      %930 = vrot.lane.b32.xlu0 %v892, 24
      %v931 = vpop.permute.xlu0 %930
      %932 = vrot.lane.b32.xlu0 %v893, 24
      %v933 = vpop.permute.xlu0 %932
      %v935 = vshrl.u32 %v892, 16
      %v937 = vshll.u32 %v892, 16
      %v939 = vrot.slane %v937, 1
      %v940 = vor.u32 %v935, %v939
      %v942 = vshll.u32 %v893, 16
      %v944 = vrot.slane %v942, 1
      %v945 = vsel %vm478, %v940, %v944
      %v946 = vshrl.u32 %v893, 16
      %v948 = vor.u32 %v946, %v944
      %949 = vrot.lane.b32.xlu0 %v520, 28
      %v950 = vpop.permute.xlu0 %949
      %951 = vrot.lane.b32.xlu0 %v523, 28
      %v952 = vpop.permute.xlu0 %951
      %953 = vrot.lane.b32.xlu0 %v535, 28
      %v954 = vpop.permute.xlu0 %953
      %955 = vrot.lane.b32.xlu0 %v538, 28
      %v956 = vpop.permute.xlu0 %955
      %957 = vrot.lane.b32.xlu0 %v550, 28
      %v958 = vpop.permute.xlu0 %957
      %959 = vrot.lane.b32.xlu0 %v553, 28
      %v960 = vpop.permute.xlu0 %959
      %961 = vrot.lane.b32.xlu0 %v565, 28
      %v962 = vpop.permute.xlu0 %961
      %963 = vrot.lane.b32.xlu0 %v568, 28
      %v964 = vpop.permute.xlu0 %963
      %965 = vrot.lane.b32.xlu0 %v580, 28
      %v966 = vpop.permute.xlu0 %965
      %967 = vrot.lane.b32.xlu0 %v583, 28
      %v968 = vpop.permute.xlu0 %967
      %969 = vrot.lane.b32.xlu0 %v595, 28
      %v970 = vpop.permute.xlu0 %969
      %971 = vrot.lane.b32.xlu0 %v598, 28
      %v972 = vpop.permute.xlu0 %971
      %973 = vrot.lane.b32.xlu0 %v610, 28
      %v974 = vpop.permute.xlu0 %973
      %975 = vrot.lane.b32.xlu0 %v613, 28
      %v976 = vpop.permute.xlu0 %975
      %977 = vrot.lane.b32.xlu0 %v625, 28
      %v978 = vpop.permute.xlu0 %977
      %979 = vrot.lane.b32.xlu0 %v628, 28
      %v980 = vpop.permute.xlu0 %979
      %981 = vrot.lane.b32.xlu0 %v799, 28
      %v982 = vpop.permute.xlu0 %981
      %983 = vrot.lane.b32.xlu0 %v802, 28
      %v984 = vpop.permute.xlu0 %983
      %985 = vrot.lane.b32.xlu0 %v945, 28
      %v986 = vpop.permute.xlu0 %985
      %987 = vrot.lane.b32.xlu0 %v948, 28
      %v988 = vpop.permute.xlu0 %987
      %v989 = vrot.slane %v892, 1
      %v990 = vrot.slane %v893, 1
      %v991 = vsel %vm669, %v989, %v990
      %992 = vrot.lane.b32.xlu0 %v678, 32
      %v993 = vpop.permute.xlu0 %992
      %994 = vrot.lane.b32.xlu0 %v677, 32
      %v995 = vpop.permute.xlu0 %994
      %996 = vrot.lane.b32.xlu0 %v681, 32
      %v997 = vpop.permute.xlu0 %996
      %998 = vrot.lane.b32.xlu0 %v680, 32
      %v999 = vpop.permute.xlu0 %998
      %1000 = vrot.lane.b32.xlu0 %v684, 32
      %v1001 = vpop.permute.xlu0 %1000
      %1002 = vrot.lane.b32.xlu0 %v683, 32
      %v1003 = vpop.permute.xlu0 %1002
      %1004 = vrot.lane.b32.xlu0 %v687, 32
      %v1005 = vpop.permute.xlu0 %1004
      %1006 = vrot.lane.b32.xlu0 %v686, 32
      %v1007 = vpop.permute.xlu0 %1006
      %1008 = vrot.lane.b32.xlu0 %v690, 32
      %v1009 = vpop.permute.xlu0 %1008
      %1010 = vrot.lane.b32.xlu0 %v689, 32
      %v1011 = vpop.permute.xlu0 %1010
      %1012 = vrot.lane.b32.xlu0 %v693, 32
      %v1013 = vpop.permute.xlu0 %1012
      %1014 = vrot.lane.b32.xlu0 %v692, 32
      %v1015 = vpop.permute.xlu0 %1014
      %1016 = vrot.lane.b32.xlu0 %v696, 32
      %v1017 = vpop.permute.xlu0 %1016
      %1018 = vrot.lane.b32.xlu0 %v695, 32
      %v1019 = vpop.permute.xlu0 %1018
      %1020 = vrot.lane.b32.xlu0 %v699, 32
      %v1021 = vpop.permute.xlu0 %1020
      %1022 = vrot.lane.b32.xlu0 %v698, 32
      %v1023 = vpop.permute.xlu0 %1022
      %1024 = vrot.lane.b32.xlu0 %v845, 32
      %v1025 = vpop.permute.xlu0 %1024
      %1026 = vrot.lane.b32.xlu0 %v844, 32
      %v1027 = vpop.permute.xlu0 %1026
      %1028 = vrot.lane.b32.xlu0 %v991, 32
      %v1029 = vpop.permute.xlu0 %1028
      %1030 = vrot.lane.b32.xlu0 %v990, 32
      %v1031 = vpop.permute.xlu0 %1030
      %vm1032 = vcmask 31744
      %v1034 = vsel %vm1032, %v458, %v630
      %v1036 = vsel %vm1032, %v459, %v632
      %v1038 = vsel %vm1032, %v460, %v634
      %v1040 = vsel %vm1032, %v461, %v636
      %v1042 = vsel %vm1032, %v462, %v638
      %v1044 = vsel %vm1032, %v463, %v640
      %v1046 = vsel %vm1032, %v464, %v642
      %v1048 = vsel %vm1032, %v465, %v644
      %v1050 = vsel %vm1032, %v466, %v646
      %v1052 = vsel %vm1032, %v467, %v648
      %v1054 = vsel %vm1032, %v468, %v650
      %v1056 = vsel %vm1032, %v469, %v652
      %v1058 = vsel %vm1032, %v470, %v654
      %v1060 = vsel %vm1032, %v471, %v656
      %v1062 = vsel %vm1032, %v472, %v658
      %v1064 = vsel %vm1032, %v473, %v660
      %v1066 = vsel %vm1032, %v474, %v662
      %v1068 = vsel %vm1032, %v475, %v664
      %v1070 = vsel %vm1032, %v476, %v666
      %v1072 = vsel %vm1032, %v477, %v668
      %vm1073 = vcmask 64512
      %v1075 = vsel %vm1073, %v1034, %v701
      %v1077 = vsel %vm1073, %v1036, %v703
      %v1079 = vsel %vm1073, %v1038, %v705
      %v1081 = vsel %vm1073, %v1040, %v707
      %v1083 = vsel %vm1073, %v1042, %v709
      %v1085 = vsel %vm1073, %v1044, %v711
      %v1087 = vsel %vm1073, %v1046, %v713
      %v1089 = vsel %vm1073, %v1048, %v715
      %v1091 = vsel %vm1073, %v1050, %v717
      %v1093 = vsel %vm1073, %v1052, %v719
      %v1095 = vsel %vm1073, %v1054, %v721
      %v1097 = vsel %vm1073, %v1056, %v723
      %v1099 = vsel %vm1073, %v1058, %v725
      %v1101 = vsel %vm1073, %v1060, %v727
      %v1103 = vsel %vm1073, %v1062, %v729
      %v1105 = vsel %vm1073, %v1064, %v731
      %v1107 = vsel %vm1073, %v1066, %v733
      %v1109 = vsel %vm1073, %v1068, %v735
      %v1111 = vsel %vm1073, %v1070, %v737
      %v1113 = vsel %vm1073, %v1072, %v739
      %vm1114 = vcmask 97280
      %v1116 = vsel %vm1114, %v1075, %v749
      %v1118 = vsel %vm1114, %v1077, %v751
      %v1120 = vsel %vm1114, %v1079, %v753
      %v1122 = vsel %vm1114, %v1081, %v755
      %v1124 = vsel %vm1114, %v1083, %v757
      %v1126 = vsel %vm1114, %v1085, %v759
      %v1128 = vsel %vm1114, %v1087, %v761
      %v1130 = vsel %vm1114, %v1089, %v763
      %v1132 = vsel %vm1114, %v1091, %v765
      %v1134 = vsel %vm1114, %v1093, %v767
      %v1136 = vsel %vm1114, %v1095, %v769
      %v1138 = vsel %vm1114, %v1097, %v771
      %v1140 = vsel %vm1114, %v1099, %v773
      %v1142 = vsel %vm1114, %v1101, %v775
      %v1144 = vsel %vm1114, %v1103, %v777
      %v1146 = vsel %vm1114, %v1105, %v779
      %v1148 = vsel %vm1114, %v1107, %v781
      %v1150 = vsel %vm1114, %v1109, %v783
      %v1152 = vsel %vm1114, %v1111, %v785
      %v1154 = vsel %vm1114, %v1113, %v787
      %vm1155 = vcmask 130048
      %v1157 = vsel %vm1155, %v1116, %v804
      %v1159 = vsel %vm1155, %v1118, %v806
      %v1161 = vsel %vm1155, %v1120, %v808
      %v1163 = vsel %vm1155, %v1122, %v810
      %v1165 = vsel %vm1155, %v1124, %v812
      %v1167 = vsel %vm1155, %v1126, %v814
      %v1169 = vsel %vm1155, %v1128, %v816
      %v1171 = vsel %vm1155, %v1130, %v818
      %v1173 = vsel %vm1155, %v1132, %v820
      %v1175 = vsel %vm1155, %v1134, %v822
      %v1177 = vsel %vm1155, %v1136, %v824
      %v1179 = vsel %vm1155, %v1138, %v826
      %v1181 = vsel %vm1155, %v1140, %v828
      %v1183 = vsel %vm1155, %v1142, %v830
      %v1185 = vsel %vm1155, %v1144, %v832
      %v1187 = vsel %vm1155, %v1146, %v834
      %v1189 = vsel %vm1155, %v1148, %v836
      %v1191 = vsel %vm1155, %v1150, %v838
      %v1193 = vsel %vm1155, %v1152, %v840
      %v1195 = vsel %vm1155, %v1154, %v842
      %vm1196 = vcmask 162816
      %v1198 = vsel %vm1196, %v1157, %v847
      %v1200 = vsel %vm1196, %v1159, %v849
      %v1202 = vsel %vm1196, %v1161, %v851
      %v1204 = vsel %vm1196, %v1163, %v853
      %v1206 = vsel %vm1196, %v1165, %v855
      %v1208 = vsel %vm1196, %v1167, %v857
      %v1210 = vsel %vm1196, %v1169, %v859
      %v1212 = vsel %vm1196, %v1171, %v861
      %v1214 = vsel %vm1196, %v1173, %v863
      %v1216 = vsel %vm1196, %v1175, %v865
      %v1218 = vsel %vm1196, %v1177, %v867
      %v1220 = vsel %vm1196, %v1179, %v869
      %v1222 = vsel %vm1196, %v1181, %v871
      %v1224 = vsel %vm1196, %v1183, %v873
      %v1226 = vsel %vm1196, %v1185, %v875
      %v1228 = vsel %vm1196, %v1187, %v877
      %v1230 = vsel %vm1196, %v1189, %v879
      %v1232 = vsel %vm1196, %v1191, %v881
      %v1234 = vsel %vm1196, %v1193, %v883
      %v1236 = vsel %vm1196, %v1195, %v885
      %vm1237 = vcmask 195584
      %v1239 = vsel %vm1237, %v1198, %v895
      %v1241 = vsel %vm1237, %v1200, %v897
      %v1243 = vsel %vm1237, %v1202, %v899
      %v1245 = vsel %vm1237, %v1204, %v901
      %v1247 = vsel %vm1237, %v1206, %v903
      %v1249 = vsel %vm1237, %v1208, %v905
      %v1251 = vsel %vm1237, %v1210, %v907
      %v1253 = vsel %vm1237, %v1212, %v909
      %v1255 = vsel %vm1237, %v1214, %v911
      %v1257 = vsel %vm1237, %v1216, %v913
      %v1259 = vsel %vm1237, %v1218, %v915
      %v1261 = vsel %vm1237, %v1220, %v917
      %v1263 = vsel %vm1237, %v1222, %v919
      %v1265 = vsel %vm1237, %v1224, %v921
      %v1267 = vsel %vm1237, %v1226, %v923
      %v1269 = vsel %vm1237, %v1228, %v925
      %v1271 = vsel %vm1237, %v1230, %v927
      %v1273 = vsel %vm1237, %v1232, %v929
      %v1275 = vsel %vm1237, %v1234, %v931
      %v1277 = vsel %vm1237, %v1236, %v933
      %vm1278 = vcmask 228352
      %v1280 = vsel %vm1278, %v1239, %v950
      %v1282 = vsel %vm1278, %v1241, %v952
      %v1284 = vsel %vm1278, %v1243, %v954
      %v1286 = vsel %vm1278, %v1245, %v956
      %v1288 = vsel %vm1278, %v1247, %v958
      %v1290 = vsel %vm1278, %v1249, %v960
      %v1292 = vsel %vm1278, %v1251, %v962
      %v1294 = vsel %vm1278, %v1253, %v964
      %v1296 = vsel %vm1278, %v1255, %v966
      %v1298 = vsel %vm1278, %v1257, %v968
      %v1300 = vsel %vm1278, %v1259, %v970
      %v1302 = vsel %vm1278, %v1261, %v972
      %v1304 = vsel %vm1278, %v1263, %v974
      %v1306 = vsel %vm1278, %v1265, %v976
      %v1308 = vsel %vm1278, %v1267, %v978
      %v1310 = vsel %vm1278, %v1269, %v980
      %v1312 = vsel %vm1278, %v1271, %v982
      %v1314 = vsel %vm1278, %v1273, %v984
      %v1316 = vsel %vm1278, %v1275, %v986
      %v1318 = vsel %vm1278, %v1277, %v988
      %vm1319 = vcmask 261120
      %v1321 = vsel %vm1319, %v1280, %v993
      %v1323 = vsel %vm1319, %v1282, %v995
      %v1325 = vsel %vm1319, %v1284, %v997
      %v1327 = vsel %vm1319, %v1286, %v999
      %v1329 = vsel %vm1319, %v1288, %v1001
      %v1331 = vsel %vm1319, %v1290, %v1003
      %v1333 = vsel %vm1319, %v1292, %v1005
      %v1335 = vsel %vm1319, %v1294, %v1007
      %v1337 = vsel %vm1319, %v1296, %v1009
      %v1339 = vsel %vm1319, %v1298, %v1011
      %v1341 = vsel %vm1319, %v1300, %v1013
      %v1343 = vsel %vm1319, %v1302, %v1015
      %v1345 = vsel %vm1319, %v1304, %v1017
      %v1347 = vsel %vm1319, %v1306, %v1019
      %v1349 = vsel %vm1319, %v1308, %v1021
      %v1351 = vsel %vm1319, %v1310, %v1023
      %v1353 = vsel %vm1319, %v1312, %v1025
      %v1355 = vsel %vm1319, %v1314, %v1027
      %v1357 = vsel %vm1319, %v1316, %v1029
      %v1359 = vsel %vm1319, %v1318, %v1031
      %v1370 = vrot.slane %v1321, 1
      %v1371 = vrot.slane %v1321, 2
      %v1372 = vrot.slane %v1321, 3
      %v1373 = vrot.slane %v1321, 4
      %v1374 = vrot.slane %v1321, 5
      %v1375 = vrot.slane %v1321, 6
      %v1376 = vrot.slane %v1321, 7
      %v1377 = vrot.slane %v1325, 1
      %v1378 = vrot.slane %v1325, 2
      %v1379 = vrot.slane %v1325, 3
      %v1380 = vrot.slane %v1325, 4
      %v1381 = vrot.slane %v1325, 5
      %v1382 = vrot.slane %v1325, 6
      %v1383 = vrot.slane %v1325, 7
      %v1384 = vrot.slane %v1329, 1
      %v1385 = vrot.slane %v1329, 2
      %v1386 = vrot.slane %v1329, 3
      %v1387 = vrot.slane %v1329, 4
      %v1388 = vrot.slane %v1329, 5
      %v1389 = vrot.slane %v1329, 6
      %v1390 = vrot.slane %v1329, 7
      %v1391 = vrot.slane %v1333, 1
      %v1392 = vrot.slane %v1333, 2
      %v1393 = vrot.slane %v1333, 3
      %v1394 = vrot.slane %v1333, 4
      %v1395 = vrot.slane %v1333, 5
      %v1396 = vrot.slane %v1333, 6
      %v1397 = vrot.slane %v1333, 7
      %v1398 = vrot.slane %v1337, 1
      %v1399 = vrot.slane %v1337, 2
      %v1400 = vrot.slane %v1337, 3
      %v1401 = vrot.slane %v1337, 4
      %v1402 = vrot.slane %v1337, 5
      %v1403 = vrot.slane %v1337, 6
      %v1404 = vrot.slane %v1337, 7
      %v1405 = vrot.slane %v1341, 1
      %v1406 = vrot.slane %v1341, 2
      %v1407 = vrot.slane %v1341, 3
      %v1408 = vrot.slane %v1341, 4
      %v1409 = vrot.slane %v1341, 5
      %v1410 = vrot.slane %v1341, 6
      %v1411 = vrot.slane %v1341, 7
      %v1412 = vrot.slane %v1345, 1
      %v1413 = vrot.slane %v1345, 2
      %v1414 = vrot.slane %v1345, 3
      %v1415 = vrot.slane %v1345, 4
      %v1416 = vrot.slane %v1345, 5
      %v1417 = vrot.slane %v1345, 6
      %v1418 = vrot.slane %v1345, 7
      %v1419 = vrot.slane %v1349, 1
      %v1420 = vrot.slane %v1349, 2
      %v1421 = vrot.slane %v1349, 3
      %v1422 = vrot.slane %v1349, 4
      %v1423 = vrot.slane %v1349, 5
      %v1424 = vrot.slane %v1349, 6
      %v1425 = vrot.slane %v1349, 7
      %v1426 = vrot.slane %v1353, 1
      %v1427 = vrot.slane %v1353, 2
      %v1428 = vrot.slane %v1353, 3
      %v1429 = vrot.slane %v1353, 4
      %v1430 = vrot.slane %v1353, 5
      %v1431 = vrot.slane %v1353, 6
      %v1432 = vrot.slane %v1353, 7
      %v1433 = vrot.slane %v1357, 1
      %v1434 = vrot.slane %v1357, 2
      %v1435 = vrot.slane %v1357, 3
      %v1436 = vrot.slane %v1357, 4
      %v1437 = vrot.slane %v1357, 5
      %v1438 = vrot.slane %v1357, 6
      %v1439 = vrot.slane %v1357, 7
      %v1440 = vld [vmem:[%s1] sm:$0xf]
      %v1441 = vld [vmem:[%s1 + $0x4] sm:$0xf]
      %v1442 = vld [vmem:[%s1 + $0x8] sm:$0xf]
      %v1443 = vld [vmem:[%s1 + $0xc] sm:$0xf]
      %v1444 = vld [vmem:[%s1 + $0x10] sm:$0x3]
      %1445 = vst [vmem:[#allocation1] ss:$9 sm:$0xff] %v1321
      %s1447 = scalar_lea.vmem [#allocation1], 1
      %1448 = vst [vmem:[%s1447] ss:$9 sm:$0xff] %v1370
      %s1450 = scalar_lea.vmem [#allocation1], 2
      %1451 = vst [vmem:[%s1450] ss:$9 sm:$0xff] %v1371
      %s1453 = scalar_lea.vmem [#allocation1], 3
      %1454 = vst [vmem:[%s1453] ss:$9 sm:$0xff] %v1372
      %s1456 = scalar_lea.vmem [#allocation1], 4
      %1457 = vst [vmem:[%s1456] ss:$9 sm:$0xff] %v1373
      %s1459 = scalar_lea.vmem [#allocation1], 5
      %1460 = vst [vmem:[%s1459] ss:$9 sm:$0xff] %v1374
      %s1462 = scalar_lea.vmem [#allocation1], 6
      %1463 = vst [vmem:[%s1462] ss:$9 sm:$0xff] %v1375
      %s1465 = scalar_lea.vmem [#allocation1], 7
      %1466 = vst [vmem:[%s1465] ss:$9 sm:$0xff] %v1376
      %v1467 = vld [vmem:[#allocation1] sm:$0xff]
      %1468 = vst [vmem:[#allocation1] ss:$9 sm:$0xff] %v1323
      %1469 = vst [vmem:[%s1447] ss:$9 sm:$0xff] %v1325
      %1471 = vst [vmem:[%s1450] ss:$9 sm:$0xff] %v1377
      %1473 = vst [vmem:[%s1453] ss:$9 sm:$0xff] %v1378
      %1475 = vst [vmem:[%s1456] ss:$9 sm:$0xff] %v1379
      %1477 = vst [vmem:[%s1459] ss:$9 sm:$0xff] %v1380
      %1479 = vst [vmem:[%s1462] ss:$9 sm:$0xff] %v1381
      %1481 = vst [vmem:[%s1465] ss:$9 sm:$0xff] %v1382
      %v1482 = vld [vmem:[#allocation1] sm:$0xff]
      %1484 = vst [vmem:[#allocation1] ss:$9 sm:$0xff] %v1383
      %1485 = vst [vmem:[%s1447] ss:$9 sm:$0xff] %v1327
      %1486 = vst [vmem:[%s1450] ss:$9 sm:$0xff] %v1329
      %1488 = vst [vmem:[%s1453] ss:$9 sm:$0xff] %v1384
      %1490 = vst [vmem:[%s1456] ss:$9 sm:$0xff] %v1385
      %1492 = vst [vmem:[%s1459] ss:$9 sm:$0xff] %v1386
      %1494 = vst [vmem:[%s1462] ss:$9 sm:$0xff] %v1387
      %1496 = vst [vmem:[%s1465] ss:$9 sm:$0xff] %v1388
      %v1497 = vld [vmem:[#allocation1] sm:$0xff]
      %1499 = vst [vmem:[#allocation1] ss:$9 sm:$0xff] %v1389
      %1501 = vst [vmem:[%s1447] ss:$9 sm:$0xff] %v1390
      %1502 = vst [vmem:[%s1450] ss:$9 sm:$0xff] %v1331
      %1503 = vst [vmem:[%s1453] ss:$9 sm:$0xff] %v1333
      %1505 = vst [vmem:[%s1456] ss:$9 sm:$0xff] %v1391
      %1507 = vst [vmem:[%s1459] ss:$9 sm:$0xff] %v1392
      %1509 = vst [vmem:[%s1462] ss:$9 sm:$0xff] %v1393
      %1511 = vst [vmem:[%s1465] ss:$9 sm:$0xff] %v1394
      %v1512 = vld [vmem:[#allocation1] sm:$0xff]
      %1514 = vst [vmem:[#allocation1] ss:$9 sm:$0xff] %v1395
      %1516 = vst [vmem:[%s1447] ss:$9 sm:$0xff] %v1396
      %1518 = vst [vmem:[%s1450] ss:$9 sm:$0xff] %v1397
      %1519 = vst [vmem:[%s1453] ss:$9 sm:$0xff] %v1335
      %1520 = vst [vmem:[%s1456] ss:$9 sm:$0xff] %v1337
      %1522 = vst [vmem:[%s1459] ss:$9 sm:$0xff] %v1398
      %1524 = vst [vmem:[%s1462] ss:$9 sm:$0xff] %v1399
      %1526 = vst [vmem:[%s1465] ss:$9 sm:$0xff] %v1400
      %v1527 = vld [vmem:[#allocation1] sm:$0xff]
      %1529 = vst [vmem:[#allocation1] ss:$9 sm:$0xff] %v1401
      %1531 = vst [vmem:[%s1447] ss:$9 sm:$0xff] %v1402
      %1533 = vst [vmem:[%s1450] ss:$9 sm:$0xff] %v1403
      %1535 = vst [vmem:[%s1453] ss:$9 sm:$0xff] %v1404
      %1536 = vst [vmem:[%s1456] ss:$9 sm:$0xff] %v1339
      %1537 = vst [vmem:[%s1459] ss:$9 sm:$0xff] %v1341
      %1539 = vst [vmem:[%s1462] ss:$9 sm:$0xff] %v1405
      %1541 = vst [vmem:[%s1465] ss:$9 sm:$0xff] %v1406
      %v1542 = vld [vmem:[#allocation1] sm:$0xff]
      %1544 = vst [vmem:[#allocation1] ss:$9 sm:$0xff] %v1407
      %1546 = vst [vmem:[%s1447] ss:$9 sm:$0xff] %v1408
      %1548 = vst [vmem:[%s1450] ss:$9 sm:$0xff] %v1409
      %1550 = vst [vmem:[%s1453] ss:$9 sm:$0xff] %v1410
      %1552 = vst [vmem:[%s1456] ss:$9 sm:$0xff] %v1411
      %1553 = vst [vmem:[%s1459] ss:$9 sm:$0xff] %v1343
      %1554 = vst [vmem:[%s1462] ss:$9 sm:$0xff] %v1345
      %1556 = vst [vmem:[%s1465] ss:$9 sm:$0xff] %v1412
      %v1557 = vld [vmem:[#allocation1] sm:$0xff]
      %1559 = vst [vmem:[#allocation1] ss:$9 sm:$0xff] %v1413
      %1561 = vst [vmem:[%s1447] ss:$9 sm:$0xff] %v1414
      %1563 = vst [vmem:[%s1450] ss:$9 sm:$0xff] %v1415
      %1565 = vst [vmem:[%s1453] ss:$9 sm:$0xff] %v1416
      %1567 = vst [vmem:[%s1456] ss:$9 sm:$0xff] %v1417
      %1569 = vst [vmem:[%s1459] ss:$9 sm:$0xff] %v1418
      %1570 = vst [vmem:[%s1462] ss:$9 sm:$0xff] %v1347
      %1571 = vst [vmem:[%s1465] ss:$9 sm:$0xff] %v1349
      %v1572 = vld [vmem:[#allocation1] sm:$0xff]
      %1574 = vst [vmem:[#allocation1] ss:$9 sm:$0xff] %v1419
      %1576 = vst [vmem:[%s1447] ss:$9 sm:$0xff] %v1420
      %1578 = vst [vmem:[%s1450] ss:$9 sm:$0xff] %v1421
      %1580 = vst [vmem:[%s1453] ss:$9 sm:$0xff] %v1422
      %1582 = vst [vmem:[%s1456] ss:$9 sm:$0xff] %v1423
      %1584 = vst [vmem:[%s1459] ss:$9 sm:$0xff] %v1424
      %1586 = vst [vmem:[%s1462] ss:$9 sm:$0xff] %v1425
      %1587 = vst [vmem:[%s1465] ss:$9 sm:$0xff] %v1351
      %v1588 = vld [vmem:[#allocation1] sm:$0xff]
      %1589 = vst [vmem:[#allocation1] ss:$9 sm:$0xff] %v1353
      %1591 = vst [vmem:[%s1447] ss:$9 sm:$0xff] %v1426
      %1593 = vst [vmem:[%s1450] ss:$9 sm:$0xff] %v1427
      %1595 = vst [vmem:[%s1453] ss:$9 sm:$0xff] %v1428
      %1597 = vst [vmem:[%s1456] ss:$9 sm:$0xff] %v1429
      %1599 = vst [vmem:[%s1459] ss:$9 sm:$0xff] %v1430
      %1601 = vst [vmem:[%s1462] ss:$9 sm:$0xff] %v1431
      %1603 = vst [vmem:[%s1465] ss:$9 sm:$0xff] %v1432
      %v1604 = vld [vmem:[#allocation1] sm:$0xff]
      %1605 = vst [vmem:[#allocation1] ss:$9 sm:$0xff] %v1355
      %1606 = vst [vmem:[%s1447] ss:$9 sm:$0xff] %v1357
      %1608 = vst [vmem:[%s1450] ss:$9 sm:$0xff] %v1433
      %1610 = vst [vmem:[%s1453] ss:$9 sm:$0xff] %v1434
      %1612 = vst [vmem:[%s1456] ss:$9 sm:$0xff] %v1435
      %1614 = vst [vmem:[%s1459] ss:$9 sm:$0xff] %v1436
      %1616 = vst [vmem:[%s1462] ss:$9 sm:$0xff] %v1437
      %1618 = vst [vmem:[%s1465] ss:$9 sm:$0xff] %v1438
      %v1619 = vld [vmem:[#allocation1] sm:$0xff]
      %1621 = vst [vmem:[#allocation1] ss:$9 sm:$0xff] %v1439
      %1622 = vst [vmem:[%s1447] ss:$9 sm:$0xff] %v1359
      %v1623 = vld [vmem:[#allocation1] sm:$0xff]
      %v1629 = vunpack.c.l.b16 %v1440
      %v1630 = vunpack.c.l.b16 %v1441
      %v1631 = vunpack.c.l.b16 %v1442
      %v1632 = vunpack.c.l.b16 %v1443
      %v1633 = vunpack.c.l.b16 %v1444
      %v1634 = vpack.c.b16 %v1630, %v1629
      %v1635 = vpack.c.b16 %v1632, %v1631
      %v1636 = vpack.c.b16 %v1633, %v1633
      %vm1639 = vcmask 293888
      %v1640 = vsel %vm1639, %v1467, 0
      %v1642 = vsel %vm1639, %v1482, 0
      %v1644 = vsel %vm1639, %v1497, 0
      %v1646 = vsel %vm1639, %v1512, 0
      %v1648 = vsel %vm1639, %v1527, 0
      %v1650 = vsel %vm1639, %v1542, 0
      %v1652 = vsel %vm1639, %v1557, 0
      %v1654 = vsel %vm1639, %v1572, 0
      %v1656 = vsel %vm1639, %v1588, 0
      %v1658 = vsel %vm1639, %v1604, 0
      %v1660 = vsel %vm1639, %v1619, 0
      %v1662 = vsel %vm1639, %v1623, 0
      %vm1664 = vcmask 1041408
      %v1666 = vsel %vm1664, %v1636, 0
      %1668 = vmatpush.bf16.msra.mxu0 0
      %1669 = vmatpush.bf16.msra.mxu0 0
      %1670 = vmatpush.bf16.msra.mxu0 0
      %1671 = vmatpush.bf16.msra.mxu0 0
      %1672 = vmatpush.bf16.msra.mxu0 0
      %1673 = vmatpush.bf16.msra.mxu0 %v1666
      %1674 = vmatpush.bf16.msra.mxu0 %v1635
      %1675 = vmatpush.bf16.msra.mxu0 %v1634
      %1676 = vmatmul.bf16.gmra.mxu0 %v1640
      %v1677 = vpop.f32.mrf.mxu0
      %v1678 = vadd.f32 0.0, %v1677
      %v1679 = vpop.f32.mrf.mxu0
      %v1680 = vadd.f32 0.0, %v1679
      %1681 = vmatmul.bf16.gmra.mxu0 %v1642
      %v1682 = vpop.f32.mrf.mxu0
      %v1683 = vadd.f32 0.0, %v1682
      %v1684 = vpop.f32.mrf.mxu0
      %v1685 = vadd.f32 0.0, %v1684
      %1686 = vmatmul.bf16.gmra.mxu0 %v1644
      %v1687 = vpop.f32.mrf.mxu0
      %v1688 = vadd.f32 0.0, %v1687
      %v1689 = vpop.f32.mrf.mxu0
      %v1690 = vadd.f32 0.0, %v1689
      %1691 = vmatmul.bf16.gmra.mxu0 %v1646
      %v1692 = vpop.f32.mrf.mxu0
      %v1693 = vadd.f32 0.0, %v1692
      %v1694 = vpop.f32.mrf.mxu0
      %v1695 = vadd.f32 0.0, %v1694
      %1696 = vmatmul.bf16.gmra.mxu0 %v1648
      %v1697 = vpop.f32.mrf.mxu0
      %v1698 = vadd.f32 0.0, %v1697
      %v1699 = vpop.f32.mrf.mxu0
      %v1700 = vadd.f32 0.0, %v1699
      %1701 = vmatmul.bf16.gmra.mxu0 %v1650
      %v1702 = vpop.f32.mrf.mxu0
      %v1703 = vadd.f32 0.0, %v1702
      %v1704 = vpop.f32.mrf.mxu0
      %v1705 = vadd.f32 0.0, %v1704
      %1706 = vmatmul.bf16.gmra.mxu0 %v1652
      %v1707 = vpop.f32.mrf.mxu0
      %v1708 = vadd.f32 0.0, %v1707
      %v1709 = vpop.f32.mrf.mxu0
      %v1710 = vadd.f32 0.0, %v1709
      %1711 = vmatmul.bf16.gmra.mxu0 %v1654
      %v1712 = vpop.f32.mrf.mxu0
      %v1713 = vadd.f32 0.0, %v1712
      %v1714 = vpop.f32.mrf.mxu0
      %v1715 = vadd.f32 0.0, %v1714
      %1716 = vmatmul.bf16.gmra.mxu0 %v1656
      %v1717 = vpop.f32.mrf.mxu0
      %v1718 = vadd.f32 0.0, %v1717
      %v1719 = vpop.f32.mrf.mxu0
      %v1720 = vadd.f32 0.0, %v1719
      %1721 = vmatmul.bf16.gmra.mxu0 %v1658
      %v1722 = vpop.f32.mrf.mxu0
      %v1723 = vadd.f32 0.0, %v1722
      %v1724 = vpop.f32.mrf.mxu0
      %v1725 = vadd.f32 0.0, %v1724
      %1726 = vmatmul.bf16.gmra.mxu0 %v1660
      %v1727 = vpop.f32.mrf.mxu0
      %v1728 = vadd.f32 0.0, %v1727
      %v1729 = vpop.f32.mrf.mxu0
      %v1730 = vadd.f32 0.0, %v1729
      %1731 = vmatmul.bf16.gmra.mxu0 %v1662
      %v1732 = vpop.f32.mrf.mxu0
      %v1733 = vadd.f32 0.0, %v1732
      %v1734 = vpop.f32.mrf.mxu0
      %1735 = vdwg.mxu0
      %v1736 = vld [vmem:[%s2] sm:$0x1]
      %v1738 = vperm.slane %v1736, 0
      %v1740 = vmul.f32 %v1678, %v1738
      %v1741 = vmul.f32 %v1680, %v1738
      %v1742 = vmul.f32 %v1683, %v1738
      %v1743 = vmul.f32 %v1685, %v1738
      %v1744 = vmul.f32 %v1688, %v1738
      %v1745 = vmul.f32 %v1690, %v1738
      %v1746 = vmul.f32 %v1693, %v1738
      %v1747 = vmul.f32 %v1695, %v1738
      %v1748 = vmul.f32 %v1698, %v1738
      %v1749 = vmul.f32 %v1700, %v1738
      %v1750 = vmul.f32 %v1703, %v1738
      %v1751 = vmul.f32 %v1705, %v1738
      %v1752 = vmul.f32 %v1708, %v1738
      %v1753 = vmul.f32 %v1710, %v1738
      %v1754 = vmul.f32 %v1713, %v1738
      %v1755 = vmul.f32 %v1715, %v1738
      %v1756 = vmul.f32 %v1718, %v1738
      %v1757 = vmul.f32 %v1720, %v1738
      %v1758 = vmul.f32 %v1723, %v1738
      %v1759 = vmul.f32 %v1725, %v1738
      %v1760 = vmul.f32 %v1728, %v1738
      %v1761 = vmul.f32 %v1730, %v1738
      %v1762 = vmul.f32 %v1733, %v1738
      %v1763 = vld [vmem:[%s3] sm:$0x1]
      %v1765 = vperm.slane %v1763, 0
      %v1767 = vadd.f32 %v1740, %v1765
      %v1768 = vadd.f32 %v1741, %v1765
      %v1769 = vadd.f32 %v1742, %v1765
      %v1770 = vadd.f32 %v1743, %v1765
      %v1771 = vadd.f32 %v1744, %v1765
      %v1772 = vadd.f32 %v1745, %v1765
      %v1773 = vadd.f32 %v1746, %v1765
      %v1774 = vadd.f32 %v1747, %v1765
      %v1775 = vadd.f32 %v1748, %v1765
      %v1776 = vadd.f32 %v1749, %v1765
      %v1777 = vadd.f32 %v1750, %v1765
      %v1778 = vadd.f32 %v1751, %v1765
      %v1779 = vadd.f32 %v1752, %v1765
      %v1780 = vadd.f32 %v1753, %v1765
      %v1781 = vadd.f32 %v1754, %v1765
      %v1782 = vadd.f32 %v1755, %v1765
      %v1783 = vadd.f32 %v1756, %v1765
      %v1784 = vadd.f32 %v1757, %v1765
      %v1785 = vadd.f32 %v1758, %v1765
      %v1786 = vadd.f32 %v1759, %v1765
      %v1787 = vadd.f32 %v1760, %v1765
      %v1788 = vadd.f32 %v1761, %v1765
      %v1789 = vadd.f32 %v1762, %v1765
      %v1790 = vmax.f32 %v1767, 0.0
      %v1791 = vmax.f32 %v1768, 0.0
      %v1792 = vmax.f32 %v1769, 0.0
      %v1793 = vmax.f32 %v1770, 0.0
      %v1794 = vmax.f32 %v1771, 0.0
      %v1795 = vmax.f32 %v1772, 0.0
      %v1796 = vmax.f32 %v1773, 0.0
      %v1797 = vmax.f32 %v1774, 0.0
      %v1798 = vmax.f32 %v1775, 0.0
      %v1799 = vmax.f32 %v1776, 0.0
      %v1800 = vmax.f32 %v1777, 0.0
      %v1801 = vmax.f32 %v1778, 0.0
      %v1802 = vmax.f32 %v1779, 0.0
      %v1803 = vmax.f32 %v1780, 0.0
      %v1804 = vmax.f32 %v1781, 0.0
      %v1805 = vmax.f32 %v1782, 0.0
      %v1806 = vmax.f32 %v1783, 0.0
      %v1807 = vmax.f32 %v1784, 0.0
      %v1808 = vmax.f32 %v1785, 0.0
      %v1809 = vmax.f32 %v1786, 0.0
      %v1810 = vmax.f32 %v1787, 0.0
      %v1811 = vmax.f32 %v1788, 0.0
      %v1812 = vmax.f32 %v1789, 0.0
      %v1836 = vrot.slane %v1790, 2
      %v1837 = vrot.slane %v1790, 4
      %v1838 = vrot.slane %v1790, 6
      %v1839 = vrot.slane %v1791, 2
      %v1840 = vrot.slane %v1791, 4
      %v1841 = vrot.slane %v1791, 6
      %v1842 = vrot.slane %v1792, 2
      %v1843 = vrot.slane %v1792, 4
      %v1844 = vrot.slane %v1792, 6
      %v1845 = vrot.slane %v1793, 2
      %v1846 = vrot.slane %v1793, 4
      %v1847 = vrot.slane %v1793, 6
      %v1848 = vrot.slane %v1794, 2
      %v1849 = vrot.slane %v1794, 4
      %v1850 = vrot.slane %v1794, 6
      %v1851 = vrot.slane %v1795, 2
      %v1852 = vrot.slane %v1795, 4
      %v1853 = vrot.slane %v1795, 6
      %v1854 = vrot.slane %v1796, 2
      %v1855 = vrot.slane %v1796, 4
      %v1856 = vrot.slane %v1796, 6
      %v1857 = vrot.slane %v1797, 2
      %v1858 = vrot.slane %v1797, 4
      %v1859 = vrot.slane %v1797, 6
      %v1860 = vrot.slane %v1798, 2
      %v1861 = vrot.slane %v1798, 4
      %v1862 = vrot.slane %v1798, 6
      %v1863 = vrot.slane %v1799, 2
      %v1864 = vrot.slane %v1799, 4
      %v1865 = vrot.slane %v1799, 6
      %v1866 = vrot.slane %v1800, 2
      %v1867 = vrot.slane %v1800, 4
      %v1868 = vrot.slane %v1800, 6
      %v1869 = vrot.slane %v1801, 2
      %v1870 = vrot.slane %v1801, 4
      %v1871 = vrot.slane %v1801, 6
      %v1872 = vrot.slane %v1802, 2
      %v1873 = vrot.slane %v1802, 4
      %v1874 = vrot.slane %v1802, 6
      %v1875 = vrot.slane %v1803, 2
      %v1876 = vrot.slane %v1803, 4
      %v1877 = vrot.slane %v1803, 6
      %v1878 = vrot.slane %v1804, 2
      %v1879 = vrot.slane %v1804, 4
      %v1880 = vrot.slane %v1804, 6
      %v1881 = vrot.slane %v1805, 2
      %v1882 = vrot.slane %v1805, 4
      %v1883 = vrot.slane %v1805, 6
      %v1884 = vrot.slane %v1806, 2
      %v1885 = vrot.slane %v1806, 4
      %v1886 = vrot.slane %v1806, 6
      %v1887 = vrot.slane %v1807, 2
      %v1888 = vrot.slane %v1807, 4
      %v1889 = vrot.slane %v1807, 6
      %v1890 = vrot.slane %v1808, 2
      %v1891 = vrot.slane %v1808, 4
      %v1892 = vrot.slane %v1808, 6
      %v1893 = vrot.slane %v1809, 2
      %v1894 = vrot.slane %v1809, 4
      %v1895 = vrot.slane %v1809, 6
      %v1896 = vrot.slane %v1810, 2
      %v1897 = vrot.slane %v1810, 4
      %v1898 = vrot.slane %v1810, 6
      %v1899 = vrot.slane %v1811, 2
      %v1900 = vrot.slane %v1811, 4
      %v1901 = vrot.slane %v1811, 6
      %v1902 = vrot.slane %v1812, 2
      %v1903 = vlaneseq
      %v1904 = vshrl.u32 %v1903, 7
      %v1905 = vadd.s32 %v1904, 8
      %v1906 = vadd.s32 %v1904, 16
      %s1907 = smul.u32 %s25, 8
      %s1908 = ssub.s32 %s1907, 1
      %v1909 = vstv %s1908
      %v1910 = vadd.s32 %v1909, 1
      %v1911 = vadd.s32 %v1909, 2
      %v1912 = vadd.s32 %v1909, 3
      %v1913 = vadd.s32 %v1909, 4
      %v1914 = vadd.s32 %v1909, 5
      %v1915 = vadd.s32 %v1909, 6
      %v1916 = vadd.s32 %v1909, 7
      %v1917 = vadd.s32 %v1909, 8
      %v1918 = vadd.s32 %v1909, 9
      %vm1919 = vcmp.ge.s32.totalorder %v1909, 0
      %vm1920 = vcmp.ge.s32.totalorder %v1910, 0
      %vm1921 = vcmp.ge.s32.totalorder %v1911, 0
      %vm1922 = vcmp.ge.s32.totalorder %v1912, 0
      %vm1923 = vcmp.ge.s32.totalorder %v1913, 0
      %vm1924 = vcmp.ge.s32.totalorder %v1914, 0
      %vm1925 = vcmp.ge.s32.totalorder %v1915, 0
      %vm1926 = vcmp.ge.s32.totalorder %v1916, 0
      %vm1927 = vcmp.ge.s32.totalorder %v1917, 0
      %vm1928 = vcmp.ge.s32.totalorder %v1918, 0
      %vm1929 = vcmp.lt.s32.totalorder %v1909, 16
      %vm1930 = vcmp.lt.s32.totalorder %v1910, 16
      %vm1931 = vcmp.lt.s32.totalorder %v1911, 16
      %vm1932 = vcmp.lt.s32.totalorder %v1912, 16
      %vm1933 = vcmp.lt.s32.totalorder %v1913, 16
      %vm1934 = vcmp.lt.s32.totalorder %v1914, 16
      %vm1935 = vcmp.lt.s32.totalorder %v1915, 16
      %vm1936 = vcmp.lt.s32.totalorder %v1916, 16
      %vm1937 = vcmp.lt.s32.totalorder %v1917, 16
      %vm1938 = vcmp.lt.s32.totalorder %v1918, 16
      %vm1939 = vmand %vm1919, %vm1929
      %vm1940 = vmand %vm1920, %vm1930
      %vm1941 = vmand %vm1921, %vm1931
      %vm1942 = vmand %vm1922, %vm1932
      %vm1943 = vmand %vm1923, %vm1933
      %vm1944 = vmand %vm1924, %vm1934
      %vm1945 = vmand %vm1925, %vm1935
      %vm1946 = vmand %vm1926, %vm1936
      %vm1947 = vmand %vm1927, %vm1937
      %vm1948 = vmand %vm1928, %vm1938
      %vm1949 = vcmp.ge.s32.totalorder %v1904, 1
      %vm1950 = vcmp.ge.s32.totalorder %v1905, 1
      %vm1951 = vcmp.ge.s32.totalorder %v1906, 1
      %vm1952 = vmand %vm1939, %vm1949
      %vm1953 = vmand %vm1939, %vm1950
      %vm1954 = vmand %vm1939, %vm1951
      %vm1955 = vmand %vm1940, %vm1949
      %vm1956 = vmand %vm1940, %vm1950
      %vm1957 = vmand %vm1940, %vm1951
      %vm1958 = vmand %vm1941, %vm1949
      %vm1959 = vmand %vm1941, %vm1950
      %vm1960 = vmand %vm1941, %vm1951
      %vm1961 = vmand %vm1942, %vm1949
      %vm1962 = vmand %vm1942, %vm1950
      %vm1963 = vmand %vm1942, %vm1951
      %vm1964 = vmand %vm1943, %vm1949
      %vm1965 = vmand %vm1943, %vm1950
      %vm1966 = vmand %vm1943, %vm1951
      %vm1967 = vmand %vm1944, %vm1949
      %vm1968 = vmand %vm1944, %vm1950
      %vm1969 = vmand %vm1944, %vm1951
      %vm1970 = vmand %vm1945, %vm1949
      %vm1971 = vmand %vm1945, %vm1950
      %vm1972 = vmand %vm1945, %vm1951
      %vm1973 = vmand %vm1946, %vm1949
      %vm1974 = vmand %vm1946, %vm1950
      %vm1975 = vmand %vm1946, %vm1951
      %vm1976 = vmand %vm1947, %vm1949
      %vm1977 = vmand %vm1947, %vm1950
      %vm1978 = vmand %vm1947, %vm1951
      %vm1979 = vmand %vm1948, %vm1949
      %vm1980 = vmand %vm1948, %vm1950
      %vm1981 = vmand %vm1948, %vm1951
      %vm1982 = vcmp.le.s32.totalorder %v1904, 16
      %vm1983 = vcmp.le.s32.totalorder %v1905, 16
      %vm1984 = vcmp.le.s32.totalorder %v1906, 16
      %vm1985 = vmand %vm1952, %vm1982
      %vm1986 = vmand %vm1953, %vm1983
      %vm1987 = vmand %vm1954, %vm1984
      %vm1988 = vmand %vm1955, %vm1982
      %vm1989 = vmand %vm1956, %vm1983
      %vm1990 = vmand %vm1957, %vm1984
      %vm1991 = vmand %vm1958, %vm1982
      %vm1992 = vmand %vm1959, %vm1983
      %vm1993 = vmand %vm1960, %vm1984
      %vm1994 = vmand %vm1961, %vm1982
      %vm1995 = vmand %vm1962, %vm1983
      %vm1996 = vmand %vm1963, %vm1984
      %vm1997 = vmand %vm1964, %vm1982
      %vm1998 = vmand %vm1965, %vm1983
      %vm1999 = vmand %vm1966, %vm1984
      %vm2000 = vmand %vm1967, %vm1982
      %vm2001 = vmand %vm1968, %vm1983
      %vm2002 = vmand %vm1969, %vm1984
      %vm2003 = vmand %vm1970, %vm1982
      %vm2004 = vmand %vm1971, %vm1983
      %vm2005 = vmand %vm1972, %vm1984
      %vm2006 = vmand %vm1973, %vm1982
      %vm2007 = vmand %vm1974, %vm1983
      %vm2008 = vmand %vm1975, %vm1984
      %vm2009 = vmand %vm1976, %vm1982
      %vm2010 = vmand %vm1977, %vm1983
      %vm2011 = vmand %vm1978, %vm1984
      %vm2012 = vmand %vm1979, %vm1982
      %vm2013 = vmand %vm1980, %vm1983
      %vm2014 = vmand %vm1981, %vm1984
      %v2015 = vsel %vm1985, 1, 0
      %v2016 = vsel %vm1986, 1, 0
      %v2017 = vsel %vm1987, 1, 0
      %v2018 = vsel %vm1988, 1, 0
      %v2019 = vsel %vm1989, 1, 0
      %v2020 = vsel %vm1990, 1, 0
      %v2021 = vsel %vm1991, 1, 0
      %v2022 = vsel %vm1992, 1, 0
      %v2023 = vsel %vm1993, 1, 0
      %v2024 = vsel %vm1994, 1, 0
      %v2025 = vsel %vm1995, 1, 0
      %v2026 = vsel %vm1996, 1, 0
      %v2027 = vsel %vm1997, 1, 0
      %v2028 = vsel %vm1998, 1, 0
      %v2029 = vsel %vm1999, 1, 0
      %v2030 = vsel %vm2000, 1, 0
      %v2031 = vsel %vm2001, 1, 0
      %v2032 = vsel %vm2002, 1, 0
      %v2033 = vsel %vm2003, 1, 0
      %v2034 = vsel %vm2004, 1, 0
      %v2035 = vsel %vm2005, 1, 0
      %v2036 = vsel %vm2006, 1, 0
      %v2037 = vsel %vm2007, 1, 0
      %v2038 = vsel %vm2008, 1, 0
      %v2039 = vsel %vm2009, 1, 0
      %v2040 = vsel %vm2010, 1, 0
      %v2041 = vsel %vm2011, 1, 0
      %v2042 = vsel %vm2012, 1, 0
      %v2043 = vsel %vm2013, 1, 0
      %v2044 = vsel %vm2014, 1, 0
      %vm2045 = vcmp.eq.s32.totalorder %v2015, 1
      %vm2046 = vcmp.eq.s32.totalorder %v2016, 1
      %vm2047 = vcmp.eq.s32.totalorder %v2017, 1
      %vm2048 = vcmp.eq.s32.totalorder %v2018, 1
      %vm2049 = vcmp.eq.s32.totalorder %v2019, 1
      %vm2050 = vcmp.eq.s32.totalorder %v2020, 1
      %vm2051 = vcmp.eq.s32.totalorder %v2021, 1
      %vm2052 = vcmp.eq.s32.totalorder %v2022, 1
      %vm2053 = vcmp.eq.s32.totalorder %v2023, 1
      %vm2054 = vcmp.eq.s32.totalorder %v2024, 1
      %vm2055 = vcmp.eq.s32.totalorder %v2025, 1
      %vm2056 = vcmp.eq.s32.totalorder %v2026, 1
      %vm2057 = vcmp.eq.s32.totalorder %v2027, 1
      %vm2058 = vcmp.eq.s32.totalorder %v2028, 1
      %vm2059 = vcmp.eq.s32.totalorder %v2029, 1
      %vm2060 = vcmp.eq.s32.totalorder %v2030, 1
      %vm2061 = vcmp.eq.s32.totalorder %v2031, 1
      %vm2062 = vcmp.eq.s32.totalorder %v2032, 1
      %vm2063 = vcmp.eq.s32.totalorder %v2033, 1
      %vm2064 = vcmp.eq.s32.totalorder %v2034, 1
      %vm2065 = vcmp.eq.s32.totalorder %v2035, 1
      %vm2066 = vcmp.eq.s32.totalorder %v2036, 1
      %vm2067 = vcmp.eq.s32.totalorder %v2037, 1
      %vm2068 = vcmp.eq.s32.totalorder %v2038, 1
      %vm2069 = vcmp.eq.s32.totalorder %v2039, 1
      %vm2070 = vcmp.eq.s32.totalorder %v2040, 1
      %vm2071 = vcmp.eq.s32.totalorder %v2041, 1
      %vm2072 = vcmp.eq.s32.totalorder %v2042, 1
      %vm2073 = vcmp.eq.s32.totalorder %v2043, 1
      %vm2074 = vcmp.eq.s32.totalorder %v2044, 1
      %2075 = vst [vmem:[#allocation1] ss:$4 sm:$0xff] %v1790
      %s2076 = scalar_lea.vmem [#allocation1], 1
      %2077 = vst [vmem:[%s2076] ss:$4 sm:$0xff] %v1836
      %s2078 = scalar_lea.vmem [#allocation1], 2
      %2079 = vst [vmem:[%s2078] ss:$4 sm:$0xff] %v1837
      %s2080 = scalar_lea.vmem [#allocation1], 3
      %2081 = vst [vmem:[%s2080] ss:$4 sm:$0xff] %v1838
      %s2082 = scalar_lea.vmem [#allocation1], 32
      %2083 = vst [vmem:[%s2082] ss:$4 sm:$0xff] %v1791
      %s2084 = scalar_lea.vmem [#allocation1], 33
      %2085 = vst [vmem:[%s2084] ss:$4 sm:$0xff] %v1839
      %s2086 = scalar_lea.vmem [#allocation1], 34
      %2087 = vst [vmem:[%s2086] ss:$4 sm:$0xff] %v1840
      %s2088 = scalar_lea.vmem [#allocation1], 35
      %2089 = vst [vmem:[%s2088] ss:$4 sm:$0xff] %v1841
      %v2090 = vld.sshfl [vmem:[#allocation1] sm:$0xff pattern:$0x73625140]
      %v2091 = vld.sshfl [vmem:[#allocation1 + $0x20] sm:$0xff pattern:$0x73625140]
      %2092 = vst [vmem:[#allocation1] ss:$4 sm:$0xff] %v1792
      %v2093 = vld.sshfl [vmem:[#allocation1] sm:$0xff pattern:$0x73625140]
      %2094 = vst [vmem:[%s2082] ss:$4 sm:$0xff] %v1842
      %2095 = vst [vmem:[%s2084] ss:$4 sm:$0xff] %v1843
      %2096 = vst [vmem:[%s2086] ss:$4 sm:$0xff] %v1844
      %2097 = vst [vmem:[%s2088] ss:$4 sm:$0xff] %v1793
      %v2098 = vld.sshfl [vmem:[#allocation1 + $0x20] sm:$0xff pattern:$0x73625140]
      %2099 = vst [vmem:[#allocation1] ss:$4 sm:$0xff] %v1845
      %2100 = vst [vmem:[%s2076] ss:$4 sm:$0xff] %v1846
      %2101 = vst [vmem:[%s2078] ss:$4 sm:$0xff] %v1847
      %2102 = vst [vmem:[%s2080] ss:$4 sm:$0xff] %v1794
      %2103 = vst [vmem:[%s2082] ss:$4 sm:$0xff] %v1848
      %v2104 = vld.sshfl [vmem:[#allocation1] sm:$0xff pattern:$0x73625140]
      %v2105 = vld.sshfl [vmem:[#allocation1 + $0x20] sm:$0xff pattern:$0x73625140]
      %2106 = vst [vmem:[#allocation1] ss:$4 sm:$0xff] %v1849
      %2107 = vst [vmem:[%s2076] ss:$4 sm:$0xff] %v1850
      %2108 = vst [vmem:[%s2078] ss:$4 sm:$0xff] %v1795
      %2109 = vst [vmem:[%s2080] ss:$4 sm:$0xff] %v1851
      %2110 = vst [vmem:[%s2082] ss:$4 sm:$0xff] %v1852
      %2111 = vst [vmem:[%s2084] ss:$4 sm:$0xff] %v1853
      %2112 = vst [vmem:[%s2086] ss:$4 sm:$0xff] %v1796
      %2113 = vst [vmem:[%s2088] ss:$4 sm:$0xff] %v1854
      %v2114 = vld.sshfl [vmem:[#allocation1] sm:$0xff pattern:$0x73625140]
      %v2115 = vld.sshfl [vmem:[#allocation1 + $0x20] sm:$0xff pattern:$0x73625140]
      %2116 = vst [vmem:[#allocation1] ss:$4 sm:$0xff] %v1855
      %v2117 = vld.sshfl [vmem:[#allocation1] sm:$0xff pattern:$0x73625140]
      %2118 = vst [vmem:[%s2082] ss:$4 sm:$0xff] %v1856
      %2119 = vst [vmem:[%s2084] ss:$4 sm:$0xff] %v1797
      %2120 = vst [vmem:[%s2086] ss:$4 sm:$0xff] %v1857
      %2121 = vst [vmem:[%s2088] ss:$4 sm:$0xff] %v1858
      %v2122 = vld.sshfl [vmem:[#allocation1 + $0x20] sm:$0xff pattern:$0x73625140]
      %2123 = vst [vmem:[#allocation1] ss:$4 sm:$0xff] %v1859
      %2124 = vst [vmem:[%s2076] ss:$4 sm:$0xff] %v1798
      %2125 = vst [vmem:[%s2078] ss:$4 sm:$0xff] %v1860
      %2126 = vst [vmem:[%s2080] ss:$4 sm:$0xff] %v1861
      %2127 = vst [vmem:[%s2082] ss:$4 sm:$0xff] %v1862
      %v2128 = vld.sshfl [vmem:[#allocation1] sm:$0xff pattern:$0x73625140]
      %v2129 = vld.sshfl [vmem:[#allocation1 + $0x20] sm:$0xff pattern:$0x73625140]
      %2130 = vst [vmem:[#allocation1] ss:$4 sm:$0xff] %v1799
      %2131 = vst [vmem:[%s2076] ss:$4 sm:$0xff] %v1863
      %2132 = vst [vmem:[%s2078] ss:$4 sm:$0xff] %v1864
      %2133 = vst [vmem:[%s2080] ss:$4 sm:$0xff] %v1865
      %2134 = vst [vmem:[%s2082] ss:$4 sm:$0xff] %v1800
      %2135 = vst [vmem:[%s2084] ss:$4 sm:$0xff] %v1866
      %2136 = vst [vmem:[%s2086] ss:$4 sm:$0xff] %v1867
      %2137 = vst [vmem:[%s2088] ss:$4 sm:$0xff] %v1868
      %v2138 = vld.sshfl [vmem:[#allocation1] sm:$0xff pattern:$0x73625140]
      %v2139 = vld.sshfl [vmem:[#allocation1 + $0x20] sm:$0xff pattern:$0x73625140]
      %2140 = vst [vmem:[#allocation1] ss:$4 sm:$0xff] %v1801
      %v2141 = vld.sshfl [vmem:[#allocation1] sm:$0xff pattern:$0x73625140]
      %2142 = vst [vmem:[%s2082] ss:$4 sm:$0xff] %v1869
      %2143 = vst [vmem:[%s2084] ss:$4 sm:$0xff] %v1870
      %2144 = vst [vmem:[%s2086] ss:$4 sm:$0xff] %v1871
      %2145 = vst [vmem:[%s2088] ss:$4 sm:$0xff] %v1802
      %v2146 = vld.sshfl [vmem:[#allocation1 + $0x20] sm:$0xff pattern:$0x73625140]
      %2147 = vst [vmem:[#allocation1] ss:$4 sm:$0xff] %v1872
      %2148 = vst [vmem:[%s2076] ss:$4 sm:$0xff] %v1873
      %2149 = vst [vmem:[%s2078] ss:$4 sm:$0xff] %v1874
      %2150 = vst [vmem:[%s2080] ss:$4 sm:$0xff] %v1803
      %2151 = vst [vmem:[%s2082] ss:$4 sm:$0xff] %v1875
      %v2152 = vld.sshfl [vmem:[#allocation1] sm:$0xff pattern:$0x73625140]
      %v2153 = vld.sshfl [vmem:[#allocation1 + $0x20] sm:$0xff pattern:$0x73625140]
      %2154 = vst [vmem:[#allocation1] ss:$4 sm:$0xff] %v1876
      %2155 = vst [vmem:[%s2076] ss:$4 sm:$0xff] %v1877
      %2156 = vst [vmem:[%s2078] ss:$4 sm:$0xff] %v1804
      %2157 = vst [vmem:[%s2080] ss:$4 sm:$0xff] %v1878
      %2158 = vst [vmem:[%s2082] ss:$4 sm:$0xff] %v1879
      %2159 = vst [vmem:[%s2084] ss:$4 sm:$0xff] %v1880
      %2160 = vst [vmem:[%s2086] ss:$4 sm:$0xff] %v1805
      %2161 = vst [vmem:[%s2088] ss:$4 sm:$0xff] %v1881
      %v2162 = vld.sshfl [vmem:[#allocation1] sm:$0xff pattern:$0x73625140]
      %v2163 = vld.sshfl [vmem:[#allocation1 + $0x20] sm:$0xff pattern:$0x73625140]
      %2164 = vst [vmem:[#allocation1] ss:$4 sm:$0xff] %v1882
      %v2165 = vld.sshfl [vmem:[#allocation1] sm:$0xff pattern:$0x73625140]
      %2166 = vst [vmem:[%s2082] ss:$4 sm:$0xff] %v1883
      %2167 = vst [vmem:[%s2084] ss:$4 sm:$0xff] %v1806
      %2168 = vst [vmem:[%s2086] ss:$4 sm:$0xff] %v1884
      %2169 = vst [vmem:[%s2088] ss:$4 sm:$0xff] %v1885
      %v2170 = vld.sshfl [vmem:[#allocation1 + $0x20] sm:$0xff pattern:$0x73625140]
      %2171 = vst [vmem:[#allocation1] ss:$4 sm:$0xff] %v1886
      %2172 = vst [vmem:[%s2076] ss:$4 sm:$0xff] %v1807
      %2173 = vst [vmem:[%s2078] ss:$4 sm:$0xff] %v1887
      %2174 = vst [vmem:[%s2080] ss:$4 sm:$0xff] %v1888
      %2175 = vst [vmem:[%s2082] ss:$4 sm:$0xff] %v1889
      %v2176 = vld.sshfl [vmem:[#allocation1] sm:$0xff pattern:$0x73625140]
      %v2177 = vld.sshfl [vmem:[#allocation1 + $0x20] sm:$0xff pattern:$0x73625140]
      %2178 = vst [vmem:[#allocation1] ss:$4 sm:$0xff] %v1808
      %2179 = vst [vmem:[%s2076] ss:$4 sm:$0xff] %v1890
      %2180 = vst [vmem:[%s2078] ss:$4 sm:$0xff] %v1891
      %2181 = vst [vmem:[%s2080] ss:$4 sm:$0xff] %v1892
      %2182 = vst [vmem:[%s2082] ss:$4 sm:$0xff] %v1809
      %2183 = vst [vmem:[%s2084] ss:$4 sm:$0xff] %v1893
      %2184 = vst [vmem:[%s2086] ss:$4 sm:$0xff] %v1894
      %2185 = vst [vmem:[%s2088] ss:$4 sm:$0xff] %v1895
      %v2186 = vld.sshfl [vmem:[#allocation1] sm:$0xff pattern:$0x73625140]
      %v2187 = vld.sshfl [vmem:[#allocation1 + $0x20] sm:$0xff pattern:$0x73625140]
      %2188 = vst [vmem:[#allocation1] ss:$4 sm:$0xff] %v1810
      %v2189 = vld.sshfl [vmem:[#allocation1] sm:$0xff pattern:$0x73625140]
      %2190 = vst [vmem:[%s2082] ss:$4 sm:$0xff] %v1896
      %2191 = vst [vmem:[%s2084] ss:$4 sm:$0xff] %v1897
      %2192 = vst [vmem:[%s2086] ss:$4 sm:$0xff] %v1898
      %2193 = vst [vmem:[%s2088] ss:$4 sm:$0xff] %v1811
      %v2194 = vld.sshfl [vmem:[#allocation1 + $0x20] sm:$0xff pattern:$0x73625140]
      %2195 = vst [vmem:[#allocation1] ss:$4 sm:$0xff] %v1899
      %2196 = vst [vmem:[%s2076] ss:$4 sm:$0xff] %v1900
      %2197 = vst [vmem:[%s2078] ss:$4 sm:$0xff] %v1901
      %2198 = vst [vmem:[%s2080] ss:$4 sm:$0xff] %v1812
      %2199 = vst [vmem:[%s2082] ss:$4 sm:$0xff] %v1902
      %v2200 = vld.sshfl [vmem:[#allocation1] sm:$0xff pattern:$0x73625140]
      %v2201 = vld.sshfl [vmem:[#allocation1 + $0x20] sm:$0xff pattern:$0x73625140]
      %v2232 = vsel %vm2045, %v2090, 0.0
      %v2233 = vsel %vm2046, %v2091, 0.0
      %v2234 = vsel %vm2047, %v2093, 0.0
      %v2235 = vsel %vm2048, %v2098, 0.0
      %v2236 = vsel %vm2049, %v2104, 0.0
      %v2237 = vsel %vm2050, %v2105, 0.0
      %v2238 = vsel %vm2051, %v2114, 0.0
      %v2239 = vsel %vm2052, %v2115, 0.0
      %v2240 = vsel %vm2053, %v2117, 0.0
      %v2241 = vsel %vm2054, %v2122, 0.0
      %v2242 = vsel %vm2055, %v2128, 0.0
      %v2243 = vsel %vm2056, %v2129, 0.0
      %v2244 = vsel %vm2057, %v2138, 0.0
      %v2245 = vsel %vm2058, %v2139, 0.0
      %v2246 = vsel %vm2059, %v2141, 0.0
      %v2247 = vsel %vm2060, %v2146, 0.0
      %v2248 = vsel %vm2061, %v2152, 0.0
      %v2249 = vsel %vm2062, %v2153, 0.0
      %v2250 = vsel %vm2063, %v2162, 0.0
      %v2251 = vsel %vm2064, %v2163, 0.0
      %v2252 = vsel %vm2065, %v2165, 0.0
      %v2253 = vsel %vm2066, %v2170, 0.0
      %v2254 = vsel %vm2067, %v2176, 0.0
      %v2255 = vsel %vm2068, %v2177, 0.0
      %v2256 = vsel %vm2069, %v2186, 0.0
      %v2257 = vsel %vm2070, %v2187, 0.0
      %v2258 = vsel %vm2071, %v2189, 0.0
      %v2259 = vsel %vm2072, %v2194, 0.0
      %v2260 = vsel %vm2073, %v2200, 0.0
      %v2261 = vsel %vm2074, %v2201, 0.0
      %v2262 = vpack.c.bf16 %v2232, %v2232
      %v2263 = vpack.c.bf16 %v2233, %v2233
      %v2264 = vpack.c.bf16 %v2234, %v2234
      %v2265 = vpack.c.bf16 %v2235, %v2235
      %v2266 = vpack.c.bf16 %v2236, %v2236
      %v2267 = vpack.c.bf16 %v2237, %v2237
      %v2268 = vpack.c.bf16 %v2238, %v2238
      %v2269 = vpack.c.bf16 %v2239, %v2239
      %v2270 = vpack.c.bf16 %v2240, %v2240
      %v2271 = vpack.c.bf16 %v2241, %v2241
      %v2272 = vpack.c.bf16 %v2242, %v2242
      %v2273 = vpack.c.bf16 %v2243, %v2243
      %v2274 = vpack.c.bf16 %v2244, %v2244
      %v2275 = vpack.c.bf16 %v2245, %v2245
      %v2276 = vpack.c.bf16 %v2246, %v2246
      %v2277 = vpack.c.bf16 %v2247, %v2247
      %v2278 = vpack.c.bf16 %v2248, %v2248
      %v2279 = vpack.c.bf16 %v2249, %v2249
      %v2280 = vpack.c.bf16 %v2250, %v2250
      %v2281 = vpack.c.bf16 %v2251, %v2251
      %v2282 = vpack.c.bf16 %v2252, %v2252
      %v2283 = vpack.c.bf16 %v2253, %v2253
      %v2284 = vpack.c.bf16 %v2254, %v2254
      %v2285 = vpack.c.bf16 %v2255, %v2255
      %v2286 = vpack.c.bf16 %v2256, %v2256
      %v2287 = vpack.c.bf16 %v2257, %v2257
      %v2288 = vpack.c.bf16 %v2258, %v2258
      %v2289 = vpack.c.bf16 %v2259, %v2259
      %v2290 = vpack.c.bf16 %v2260, %v2260
      %v2291 = vpack.c.bf16 %v2261, %v2261
      %v2308 = vunpack.c.l.b16 %v2262
      %v2309 = vunpack.c.l.b16 %v2263
      %v2310 = vunpack.c.l.b16 %v2265
      %v2311 = vunpack.c.l.b16 %v2266
      %v2312 = vunpack.c.l.b16 %v2268
      %v2313 = vunpack.c.l.b16 %v2269
      %v2314 = vunpack.c.l.b16 %v2271
      %v2315 = vunpack.c.l.b16 %v2272
      %v2316 = vunpack.c.l.b16 %v2274
      %v2317 = vunpack.c.l.b16 %v2275
      %v2318 = vunpack.c.l.b16 %v2277
      %v2319 = vunpack.c.l.b16 %v2278
      %v2320 = vunpack.c.l.b16 %v2280
      %v2321 = vunpack.c.l.b16 %v2281
      %v2322 = vunpack.c.l.b16 %v2283
      %v2323 = vunpack.c.l.b16 %v2284
      %v2324 = vpack.c.b16 %v2309, %v2308
      %v2325 = vpack.c.b16 %v2311, %v2310
      %v2326 = vpack.c.b16 %v2313, %v2312
      %v2327 = vpack.c.b16 %v2315, %v2314
      %v2328 = vpack.c.b16 %v2317, %v2316
      %v2329 = vpack.c.b16 %v2319, %v2318
      %v2330 = vpack.c.b16 %v2321, %v2320
      %v2331 = vpack.c.b16 %v2323, %v2322
      %v2340 = vunpack.c.l.b16 %v2264
      %v2341 = vunpack.c.l.b16 %v2267
      %v2342 = vunpack.c.l.b16 %v2270
      %v2343 = vunpack.c.l.b16 %v2273
      %v2344 = vunpack.c.l.b16 %v2276
      %v2345 = vunpack.c.l.b16 %v2279
      %v2346 = vunpack.c.l.b16 %v2282
      %v2347 = vunpack.c.l.b16 %v2285
      %v2348 = vpack.c.b16 %v2340, %v2340
      %v2349 = vpack.c.b16 %v2341, %v2341
      %v2350 = vpack.c.b16 %v2342, %v2342
      %v2351 = vpack.c.b16 %v2343, %v2343
      %v2352 = vpack.c.b16 %v2344, %v2344
      %v2353 = vpack.c.b16 %v2345, %v2345
      %v2354 = vpack.c.b16 %v2346, %v2346
      %v2355 = vpack.c.b16 %v2347, %v2347
      %v2357 = vshrl.u32 %v2324, 16
      %v2359 = vshll.u32 %v2324, 16
      %v2361 = vrot.slane %v2359, 1
      %v2362 = vor.u32 %v2357, %v2361
      %v2364 = vshll.u32 %v2348, 16
      %v2366 = vrot.slane %v2364, 1
      %v2367 = vsel %vm478, %v2362, %v2366
      %v2369 = vshrl.u32 %v2325, 16
      %v2371 = vshll.u32 %v2325, 16
      %v2373 = vrot.slane %v2371, 1
      %v2374 = vor.u32 %v2369, %v2373
      %v2376 = vshll.u32 %v2349, 16
      %v2378 = vrot.slane %v2376, 1
      %v2379 = vsel %vm478, %v2374, %v2378
      %v2381 = vshrl.u32 %v2326, 16
      %v2383 = vshll.u32 %v2326, 16
      %v2385 = vrot.slane %v2383, 1
      %v2386 = vor.u32 %v2381, %v2385
      %v2388 = vshll.u32 %v2350, 16
      %v2390 = vrot.slane %v2388, 1
      %v2391 = vsel %vm478, %v2386, %v2390
      %v2393 = vshrl.u32 %v2327, 16
      %v2395 = vshll.u32 %v2327, 16
      %v2397 = vrot.slane %v2395, 1
      %v2398 = vor.u32 %v2393, %v2397
      %v2400 = vshll.u32 %v2351, 16
      %v2402 = vrot.slane %v2400, 1
      %v2403 = vsel %vm478, %v2398, %v2402
      %v2405 = vshrl.u32 %v2328, 16
      %v2407 = vshll.u32 %v2328, 16
      %v2409 = vrot.slane %v2407, 1
      %v2410 = vor.u32 %v2405, %v2409
      %v2412 = vshll.u32 %v2352, 16
      %v2414 = vrot.slane %v2412, 1
      %v2415 = vsel %vm478, %v2410, %v2414
      %v2417 = vshrl.u32 %v2329, 16
      %v2419 = vshll.u32 %v2329, 16
      %v2421 = vrot.slane %v2419, 1
      %v2422 = vor.u32 %v2417, %v2421
      %v2424 = vshll.u32 %v2353, 16
      %v2426 = vrot.slane %v2424, 1
      %v2427 = vsel %vm478, %v2422, %v2426
      %v2429 = vshrl.u32 %v2330, 16
      %v2431 = vshll.u32 %v2330, 16
      %v2433 = vrot.slane %v2431, 1
      %v2434 = vor.u32 %v2429, %v2433
      %v2436 = vshll.u32 %v2354, 16
      %v2438 = vrot.slane %v2436, 1
      %v2439 = vsel %vm478, %v2434, %v2438
      %v2441 = vshrl.u32 %v2331, 16
      %v2443 = vshll.u32 %v2331, 16
      %v2445 = vrot.slane %v2443, 1
      %v2446 = vor.u32 %v2441, %v2445
      %v2448 = vshll.u32 %v2355, 16
      %v2450 = vrot.slane %v2448, 1
      %v2451 = vsel %vm478, %v2446, %v2450
      %2452 = vrot.lane.b32.xlu0 %v2367, 8
      %v2453 = vpop.permute.xlu0 %2452
      %2454 = vrot.lane.b32.xlu0 %v2379, 8
      %v2455 = vpop.permute.xlu0 %2454
      %2456 = vrot.lane.b32.xlu0 %v2391, 8
      %v2457 = vpop.permute.xlu0 %2456
      %2458 = vrot.lane.b32.xlu0 %v2403, 8
      %v2459 = vpop.permute.xlu0 %2458
      %2460 = vrot.lane.b32.xlu0 %v2415, 8
      %v2461 = vpop.permute.xlu0 %2460
      %2462 = vrot.lane.b32.xlu0 %v2427, 8
      %v2463 = vpop.permute.xlu0 %2462
      %2464 = vrot.lane.b32.xlu0 %v2439, 8
      %v2465 = vpop.permute.xlu0 %2464
      %2466 = vrot.lane.b32.xlu0 %v2451, 8
      %v2467 = vpop.permute.xlu0 %2466
      %v2468 = vrot.slane %v2324, 1
      %v2469 = vrot.slane %v2348, 1
      %v2470 = vsel %vm669, %v2468, %v2469
      %v2471 = vrot.slane %v2325, 1
      %v2472 = vrot.slane %v2349, 1
      %v2473 = vsel %vm669, %v2471, %v2472
      %v2474 = vrot.slane %v2326, 1
      %v2475 = vrot.slane %v2350, 1
      %v2476 = vsel %vm669, %v2474, %v2475
      %v2477 = vrot.slane %v2327, 1
      %v2478 = vrot.slane %v2351, 1
      %v2479 = vsel %vm669, %v2477, %v2478
      %v2480 = vrot.slane %v2328, 1
      %v2481 = vrot.slane %v2352, 1
      %v2482 = vsel %vm669, %v2480, %v2481
      %v2483 = vrot.slane %v2329, 1
      %v2484 = vrot.slane %v2353, 1
      %v2485 = vsel %vm669, %v2483, %v2484
      %v2486 = vrot.slane %v2330, 1
      %v2487 = vrot.slane %v2354, 1
      %v2488 = vsel %vm669, %v2486, %v2487
      %v2489 = vrot.slane %v2331, 1
      %v2490 = vrot.slane %v2355, 1
      %v2491 = vsel %vm669, %v2489, %v2490
      %2492 = vrot.lane.b32.xlu0 %v2470, 16
      %v2493 = vpop.permute.xlu0 %2492
      %2494 = vrot.lane.b32.xlu0 %v2473, 16
      %v2495 = vpop.permute.xlu0 %2494
      %2496 = vrot.lane.b32.xlu0 %v2476, 16
      %v2497 = vpop.permute.xlu0 %2496
      %2498 = vrot.lane.b32.xlu0 %v2479, 16
      %v2499 = vpop.permute.xlu0 %2498
      %2500 = vrot.lane.b32.xlu0 %v2482, 16
      %v2501 = vpop.permute.xlu0 %2500
      %2502 = vrot.lane.b32.xlu0 %v2485, 16
      %v2503 = vpop.permute.xlu0 %2502
      %2504 = vrot.lane.b32.xlu0 %v2488, 16
      %v2505 = vpop.permute.xlu0 %2504
      %2506 = vrot.lane.b32.xlu0 %v2491, 16
      %v2507 = vpop.permute.xlu0 %2506
      %v2510 = vunpack.c.l.b16 %v2286
      %v2511 = vunpack.c.l.b16 %v2287
      %v2512 = vpack.c.b16 %v2511, %v2510
      %2513 = vrot.lane.b32.xlu0 %v2325, 24
      %v2514 = vpop.permute.xlu0 %2513
      %2515 = vrot.lane.b32.xlu0 %v2326, 24
      %v2516 = vpop.permute.xlu0 %2515
      %2517 = vrot.lane.b32.xlu0 %v2327, 24
      %v2518 = vpop.permute.xlu0 %2517
      %2519 = vrot.lane.b32.xlu0 %v2328, 24
      %v2520 = vpop.permute.xlu0 %2519
      %2521 = vrot.lane.b32.xlu0 %v2329, 24
      %v2522 = vpop.permute.xlu0 %2521
      %2523 = vrot.lane.b32.xlu0 %v2330, 24
      %v2524 = vpop.permute.xlu0 %2523
      %2525 = vrot.lane.b32.xlu0 %v2331, 24
      %v2526 = vpop.permute.xlu0 %2525
      %2527 = vrot.lane.b32.xlu0 %v2512, 24
      %v2528 = vpop.permute.xlu0 %2527
      %v2530 = vunpack.c.l.b16 %v2288
      %v2531 = vpack.c.b16 %v2530, %v2530
      %v2533 = vshrl.u32 %v2512, 16
      %v2535 = vshll.u32 %v2512, 16
      %v2537 = vrot.slane %v2535, 1
      %v2538 = vor.u32 %v2533, %v2537
      %v2540 = vshll.u32 %v2531, 16
      %v2542 = vrot.slane %v2540, 1
      %v2543 = vsel %vm478, %v2538, %v2542
      %2544 = vrot.lane.b32.xlu0 %v2379, 32
      %v2545 = vpop.permute.xlu0 %2544
      %2546 = vrot.lane.b32.xlu0 %v2391, 32
      %v2547 = vpop.permute.xlu0 %2546
      %2548 = vrot.lane.b32.xlu0 %v2403, 32
      %v2549 = vpop.permute.xlu0 %2548
      %2550 = vrot.lane.b32.xlu0 %v2415, 32
      %v2551 = vpop.permute.xlu0 %2550
      %2552 = vrot.lane.b32.xlu0 %v2427, 32
      %v2553 = vpop.permute.xlu0 %2552
      %2554 = vrot.lane.b32.xlu0 %v2439, 32
      %v2555 = vpop.permute.xlu0 %2554
      %2556 = vrot.lane.b32.xlu0 %v2451, 32
      %v2557 = vpop.permute.xlu0 %2556
      %2558 = vrot.lane.b32.xlu0 %v2543, 32
      %v2559 = vpop.permute.xlu0 %2558
      %v2560 = vrot.slane %v2512, 1
      %v2561 = vrot.slane %v2531, 1
      %v2562 = vsel %vm669, %v2560, %v2561
      %2563 = vrot.lane.b32.xlu0 %v2473, 40
      %v2564 = vpop.permute.xlu0 %2563
      %2565 = vrot.lane.b32.xlu0 %v2476, 40
      %v2566 = vpop.permute.xlu0 %2565
      %2567 = vrot.lane.b32.xlu0 %v2479, 40
      %v2568 = vpop.permute.xlu0 %2567
      %2569 = vrot.lane.b32.xlu0 %v2482, 40
      %v2570 = vpop.permute.xlu0 %2569
      %2571 = vrot.lane.b32.xlu0 %v2485, 40
      %v2572 = vpop.permute.xlu0 %2571
      %2573 = vrot.lane.b32.xlu0 %v2488, 40
      %v2574 = vpop.permute.xlu0 %2573
      %2575 = vrot.lane.b32.xlu0 %v2491, 40
      %v2576 = vpop.permute.xlu0 %2575
      %2577 = vrot.lane.b32.xlu0 %v2562, 40
      %v2578 = vpop.permute.xlu0 %2577
      %v2581 = vunpack.c.l.b16 %v2289
      %v2582 = vunpack.c.l.b16 %v2290
      %v2583 = vpack.c.b16 %v2582, %v2581
      %2584 = vrot.lane.b32.xlu0 %v2326, 48
      %v2585 = vpop.permute.xlu0 %2584
      %2586 = vrot.lane.b32.xlu0 %v2327, 48
      %v2587 = vpop.permute.xlu0 %2586
      %2588 = vrot.lane.b32.xlu0 %v2328, 48
      %v2589 = vpop.permute.xlu0 %2588
      %2590 = vrot.lane.b32.xlu0 %v2329, 48
      %v2591 = vpop.permute.xlu0 %2590
      %2592 = vrot.lane.b32.xlu0 %v2330, 48
      %v2593 = vpop.permute.xlu0 %2592
      %2594 = vrot.lane.b32.xlu0 %v2331, 48
      %v2595 = vpop.permute.xlu0 %2594
      %2596 = vrot.lane.b32.xlu0 %v2512, 48
      %v2597 = vpop.permute.xlu0 %2596
      %2598 = vrot.lane.b32.xlu0 %v2583, 48
      %v2599 = vpop.permute.xlu0 %2598
      %v2601 = vunpack.c.l.b16 %v2291
      %v2602 = vpack.c.b16 %v2601, %v2601
      %v2604 = vshrl.u32 %v2583, 16
      %v2606 = vshll.u32 %v2583, 16
      %v2608 = vrot.slane %v2606, 1
      %v2609 = vor.u32 %v2604, %v2608
      %v2611 = vshll.u32 %v2602, 16
      %v2613 = vrot.slane %v2611, 1
      %v2614 = vsel %vm478, %v2609, %v2613
      %2615 = vrot.lane.b32.xlu0 %v2391, 56
      %v2616 = vpop.permute.xlu0 %2615
      %2617 = vrot.lane.b32.xlu0 %v2403, 56
      %v2618 = vpop.permute.xlu0 %2617
      %2619 = vrot.lane.b32.xlu0 %v2415, 56
      %v2620 = vpop.permute.xlu0 %2619
      %2621 = vrot.lane.b32.xlu0 %v2427, 56
      %v2622 = vpop.permute.xlu0 %2621
      %2623 = vrot.lane.b32.xlu0 %v2439, 56
      %v2624 = vpop.permute.xlu0 %2623
      %2625 = vrot.lane.b32.xlu0 %v2451, 56
      %v2626 = vpop.permute.xlu0 %2625
      %2627 = vrot.lane.b32.xlu0 %v2543, 56
      %v2628 = vpop.permute.xlu0 %2627
      %2629 = vrot.lane.b32.xlu0 %v2614, 56
      %v2630 = vpop.permute.xlu0 %2629
      %v2631 = vrot.slane %v2583, 1
      %v2632 = vrot.slane %v2602, 1
      %v2633 = vsel %vm669, %v2631, %v2632
      %2634 = vrot.lane.b32.xlu0 %v2476, 64
      %v2635 = vpop.permute.xlu0 %2634
      %2636 = vrot.lane.b32.xlu0 %v2479, 64
      %v2637 = vpop.permute.xlu0 %2636
      %2638 = vrot.lane.b32.xlu0 %v2482, 64
      %v2639 = vpop.permute.xlu0 %2638
      %2640 = vrot.lane.b32.xlu0 %v2485, 64
      %v2641 = vpop.permute.xlu0 %2640
      %2642 = vrot.lane.b32.xlu0 %v2488, 64
      %v2643 = vpop.permute.xlu0 %2642
      %2644 = vrot.lane.b32.xlu0 %v2491, 64
      %v2645 = vpop.permute.xlu0 %2644
      %2646 = vrot.lane.b32.xlu0 %v2562, 64
      %v2647 = vpop.permute.xlu0 %2646
      %2648 = vrot.lane.b32.xlu0 %v2633, 64
      %v2649 = vpop.permute.xlu0 %2648
      %v2651 = vsel %vm1073, %v2324, %v2453
      %v2653 = vsel %vm1073, %v2325, %v2455
      %v2655 = vsel %vm1073, %v2326, %v2457
      %v2657 = vsel %vm1073, %v2327, %v2459
      %v2659 = vsel %vm1073, %v2328, %v2461
      %v2661 = vsel %vm1073, %v2329, %v2463
      %v2663 = vsel %vm1073, %v2330, %v2465
      %v2665 = vsel %vm1073, %v2331, %v2467
      %v2667 = vsel %vm1155, %v2651, %v2493
      %v2669 = vsel %vm1155, %v2653, %v2495
      %v2671 = vsel %vm1155, %v2655, %v2497
      %v2673 = vsel %vm1155, %v2657, %v2499
      %v2675 = vsel %vm1155, %v2659, %v2501
      %v2677 = vsel %vm1155, %v2661, %v2503
      %v2679 = vsel %vm1155, %v2663, %v2505
      %v2681 = vsel %vm1155, %v2665, %v2507
      %v2683 = vsel %vm1237, %v2667, %v2514
      %v2685 = vsel %vm1237, %v2669, %v2516
      %v2687 = vsel %vm1237, %v2671, %v2518
      %v2689 = vsel %vm1237, %v2673, %v2520
      %v2691 = vsel %vm1237, %v2675, %v2522
      %v2693 = vsel %vm1237, %v2677, %v2524
      %v2695 = vsel %vm1237, %v2679, %v2526
      %v2697 = vsel %vm1237, %v2681, %v2528
      %v2699 = vsel %vm1319, %v2683, %v2545
      %v2701 = vsel %vm1319, %v2685, %v2547
      %v2703 = vsel %vm1319, %v2687, %v2549
      %v2705 = vsel %vm1319, %v2689, %v2551
      %v2707 = vsel %vm1319, %v2691, %v2553
      %v2709 = vsel %vm1319, %v2693, %v2555
      %v2711 = vsel %vm1319, %v2695, %v2557
      %v2713 = vsel %vm1319, %v2697, %v2559
      %vm2714 = vcmask 326656
      %v2716 = vsel %vm2714, %v2699, %v2564
      %v2718 = vsel %vm2714, %v2701, %v2566
      %v2720 = vsel %vm2714, %v2703, %v2568
      %v2722 = vsel %vm2714, %v2705, %v2570
      %v2724 = vsel %vm2714, %v2707, %v2572
      %v2726 = vsel %vm2714, %v2709, %v2574
      %v2728 = vsel %vm2714, %v2711, %v2576
      %v2730 = vsel %vm2714, %v2713, %v2578
      %vm2731 = vcmask 392192
      %v2733 = vsel %vm2731, %v2716, %v2585
      %v2735 = vsel %vm2731, %v2718, %v2587
      %v2737 = vsel %vm2731, %v2720, %v2589
      %v2739 = vsel %vm2731, %v2722, %v2591
      %v2741 = vsel %vm2731, %v2724, %v2593
      %v2743 = vsel %vm2731, %v2726, %v2595
      %v2745 = vsel %vm2731, %v2728, %v2597
      %v2747 = vsel %vm2731, %v2730, %v2599
      %vm2748 = vcmask 457728
      %v2750 = vsel %vm2748, %v2733, %v2616
      %v2752 = vsel %vm2748, %v2735, %v2618
      %v2754 = vsel %vm2748, %v2737, %v2620
      %v2756 = vsel %vm2748, %v2739, %v2622
      %v2758 = vsel %vm2748, %v2741, %v2624
      %v2760 = vsel %vm2748, %v2743, %v2626
      %v2762 = vsel %vm2748, %v2745, %v2628
      %v2764 = vsel %vm2748, %v2747, %v2630
      %vm2765 = vcmask 523264
      %v2767 = vsel %vm2765, %v2750, %v2635
      %v2769 = vsel %vm2765, %v2752, %v2637
      %v2771 = vsel %vm2765, %v2754, %v2639
      %v2773 = vsel %vm2765, %v2756, %v2641
      %v2775 = vsel %vm2765, %v2758, %v2643
      %v2777 = vsel %vm2765, %v2760, %v2645
      %v2779 = vsel %vm2765, %v2762, %v2647
      %v2781 = vsel %vm2765, %v2764, %v2649
      %v2782 = vld [vmem:[%s4] sm:$0xf]
      %v2783 = vld [vmem:[%s4 + $0x4] sm:$0xf]
      %v2784 = vld [vmem:[%s4 + $0x8] sm:$0xf]
      %v2785 = vld [vmem:[%s4 + $0xc] sm:$0xf]
      %v2786 = vld [vmem:[%s4 + $0x10] sm:$0xf]
      %v2787 = vld [vmem:[%s4 + $0x14] sm:$0xf]
      %v2788 = vld [vmem:[%s4 + $0x18] sm:$0xf]
      %v2789 = vld [vmem:[%s4 + $0x1c] sm:$0xf]
      %v2790 = vld [vmem:[%s4 + $0x20] sm:$0xf]
      %v2800 = vunpack.c.l.b16 %v2782
      %v2801 = vunpack.c.l.b16 %v2783
      %v2802 = vunpack.c.l.b16 %v2784
      %v2803 = vunpack.c.l.b16 %v2785
      %v2804 = vunpack.c.l.b16 %v2786
      %v2805 = vunpack.c.l.b16 %v2787
      %v2806 = vunpack.c.l.b16 %v2788
      %v2807 = vunpack.c.l.b16 %v2789
      %v2808 = vunpack.c.l.b16 %v2790
      %v2809 = vpack.c.b16 %v2801, %v2800
      %v2810 = vpack.c.b16 %v2803, %v2802
      %v2811 = vpack.c.b16 %v2805, %v2804
      %v2812 = vpack.c.b16 %v2807, %v2806
      %v2813 = vpack.c.b16 %v2808, %v2808
      %vm2818 = vcmask 588800
      %v2819 = vsel %vm2818, %v2767, 0
      %v2821 = vsel %vm2818, %v2769, 0
      %v2823 = vsel %vm2818, %v2771, 0
      %v2825 = vsel %vm2818, %v2773, 0
      %v2827 = vsel %vm2818, %v2775, 0
      %v2829 = vsel %vm2818, %v2777, 0
      %v2831 = vsel %vm2818, %v2779, 0
      %v2833 = vsel %vm2818, %v2781, 0
      %vm2835 = vcmask 1043456
      %v2837 = vsel %vm2835, %v2813, 0
      %2839 = vmatpush.bf16.msra.mxu0 0
      %2840 = vmatpush.bf16.msra.mxu0 0
      %2841 = vmatpush.bf16.msra.mxu0 0
      %2842 = vmatpush.bf16.msra.mxu0 %v2837
      %2843 = vmatpush.bf16.msra.mxu0 %v2812
      %2844 = vmatpush.bf16.msra.mxu0 %v2811
      %2845 = vmatpush.bf16.msra.mxu0 %v2810
      %2846 = vmatpush.bf16.msra.mxu0 %v2809
      %2847 = vmatmul.bf16.gmra.mxu0 %v2819
      %v2848 = vpop.f32.mrf.mxu0
      %v2849 = vadd.f32 0.0, %v2848
      %v2850 = vpop.f32.mrf.mxu0
      %v2851 = vadd.f32 0.0, %v2850
      %2852 = vmatmul.bf16.gmra.mxu0 %v2821
      %v2853 = vpop.f32.mrf.mxu0
      %v2854 = vadd.f32 0.0, %v2853
      %v2855 = vpop.f32.mrf.mxu0
      %v2856 = vadd.f32 0.0, %v2855
      %2857 = vmatmul.bf16.gmra.mxu0 %v2823
      %v2858 = vpop.f32.mrf.mxu0
      %v2859 = vadd.f32 0.0, %v2858
      %v2860 = vpop.f32.mrf.mxu0
      %v2861 = vadd.f32 0.0, %v2860
      %2862 = vmatmul.bf16.gmra.mxu0 %v2825
      %v2863 = vpop.f32.mrf.mxu0
      %v2864 = vadd.f32 0.0, %v2863
      %v2865 = vpop.f32.mrf.mxu0
      %v2866 = vadd.f32 0.0, %v2865
      %2867 = vmatmul.bf16.gmra.mxu0 %v2827
      %v2868 = vpop.f32.mrf.mxu0
      %v2869 = vadd.f32 0.0, %v2868
      %v2870 = vpop.f32.mrf.mxu0
      %v2871 = vadd.f32 0.0, %v2870
      %2872 = vmatmul.bf16.gmra.mxu0 %v2829
      %v2873 = vpop.f32.mrf.mxu0
      %v2874 = vadd.f32 0.0, %v2873
      %v2875 = vpop.f32.mrf.mxu0
      %v2876 = vadd.f32 0.0, %v2875
      %2877 = vmatmul.bf16.gmra.mxu0 %v2831
      %v2878 = vpop.f32.mrf.mxu0
      %v2879 = vadd.f32 0.0, %v2878
      %v2880 = vpop.f32.mrf.mxu0
      %v2881 = vadd.f32 0.0, %v2880
      %2882 = vmatmul.bf16.gmra.mxu0 %v2833
      %v2883 = vpop.f32.mrf.mxu0
      %v2884 = vadd.f32 0.0, %v2883
      %v2885 = vpop.f32.mrf.mxu0
      %v2886 = vadd.f32 0.0, %v2885
      %2887 = vdwg.mxu0
      %v2888 = vld [vmem:[%s5] sm:$0x1]
      %v2890 = vperm.slane %v2888, 0
      %v2892 = vmul.f32 %v2849, %v2890
      %v2893 = vmul.f32 %v2851, %v2890
      %v2894 = vmul.f32 %v2854, %v2890
      %v2895 = vmul.f32 %v2856, %v2890
      %v2896 = vmul.f32 %v2859, %v2890
      %v2897 = vmul.f32 %v2861, %v2890
      %v2898 = vmul.f32 %v2864, %v2890
      %v2899 = vmul.f32 %v2866, %v2890
      %v2900 = vmul.f32 %v2869, %v2890
      %v2901 = vmul.f32 %v2871, %v2890
      %v2902 = vmul.f32 %v2874, %v2890
      %v2903 = vmul.f32 %v2876, %v2890
      %v2904 = vmul.f32 %v2879, %v2890
      %v2905 = vmul.f32 %v2881, %v2890
      %v2906 = vmul.f32 %v2884, %v2890
      %v2907 = vmul.f32 %v2886, %v2890
      %v2908 = vld [vmem:[%s6] sm:$0x1]
      %v2910 = vperm.slane %v2908, 0
      %v2912 = vadd.f32 %v2892, %v2910
      %v2913 = vadd.f32 %v2893, %v2910
      %v2914 = vadd.f32 %v2894, %v2910
      %v2915 = vadd.f32 %v2895, %v2910
      %v2916 = vadd.f32 %v2896, %v2910
      %v2917 = vadd.f32 %v2897, %v2910
      %v2918 = vadd.f32 %v2898, %v2910
      %v2919 = vadd.f32 %v2899, %v2910
      %v2920 = vadd.f32 %v2900, %v2910
      %v2921 = vadd.f32 %v2901, %v2910
      %v2922 = vadd.f32 %v2902, %v2910
      %v2923 = vadd.f32 %v2903, %v2910
      %v2924 = vadd.f32 %v2904, %v2910
      %v2925 = vadd.f32 %v2905, %v2910
      %v2926 = vadd.f32 %v2906, %v2910
      %v2927 = vadd.f32 %v2907, %v2910
      %v2928 = vmax.f32 %v2912, 0.0
      %v2929 = vmax.f32 %v2913, 0.0
      %v2930 = vmax.f32 %v2914, 0.0
      %v2931 = vmax.f32 %v2915, 0.0
      %v2932 = vmax.f32 %v2916, 0.0
      %v2933 = vmax.f32 %v2917, 0.0
      %v2934 = vmax.f32 %v2918, 0.0
      %v2935 = vmax.f32 %v2919, 0.0
      %v2936 = vmax.f32 %v2920, 0.0
      %v2937 = vmax.f32 %v2921, 0.0
      %v2938 = vmax.f32 %v2922, 0.0
      %v2939 = vmax.f32 %v2923, 0.0
      %v2940 = vmax.f32 %v2924, 0.0
      %v2941 = vmax.f32 %v2925, 0.0
      %v2942 = vmax.f32 %v2926, 0.0
      %v2943 = vmax.f32 %v2927, 0.0
      %v2952 = vrot.slane %v2928, 2
      %v2953 = vrot.slane %v2928, 4
      %v2954 = vrot.slane %v2928, 6
      %v2955 = vrot.slane %v2929, 2
      %v2956 = vrot.slane %v2929, 4
      %v2957 = vrot.slane %v2929, 6
      %v2958 = vrot.slane %v2932, 2
      %v2959 = vrot.slane %v2932, 4
      %v2960 = vrot.slane %v2932, 6
      %v2961 = vrot.slane %v2933, 2
      %v2962 = vrot.slane %v2933, 4
      %v2963 = vrot.slane %v2933, 6
      %v2964 = vrot.slane %v2936, 2
      %v2965 = vrot.slane %v2936, 4
      %v2966 = vrot.slane %v2936, 6
      %v2967 = vrot.slane %v2937, 2
      %v2968 = vrot.slane %v2937, 4
      %v2969 = vrot.slane %v2937, 6
      %v2970 = vrot.slane %v2940, 2
      %v2971 = vrot.slane %v2940, 4
      %v2972 = vrot.slane %v2940, 6
      %v2973 = vrot.slane %v2941, 2
      %v2974 = vrot.slane %v2941, 4
      %v2975 = vrot.slane %v2941, 6
      %v3008 = vrot.slane %v2930, 2
      %v3009 = vrot.slane %v2930, 4
      %v3010 = vrot.slane %v2930, 6
      %v3011 = vrot.slane %v2931, 2
      %v3012 = vrot.slane %v2931, 4
      %v3013 = vrot.slane %v2931, 6
      %v3014 = vrot.slane %v2934, 2
      %v3015 = vrot.slane %v2934, 4
      %v3016 = vrot.slane %v2934, 6
      %v3017 = vrot.slane %v2935, 2
      %v3018 = vrot.slane %v2935, 4
      %v3019 = vrot.slane %v2935, 6
      %v3020 = vrot.slane %v2938, 2
      %v3021 = vrot.slane %v2938, 4
      %v3022 = vrot.slane %v2938, 6
      %v3023 = vrot.slane %v2939, 2
      %v3024 = vrot.slane %v2939, 4
      %v3025 = vrot.slane %v2939, 6
      %v3026 = vrot.slane %v2942, 2
      %v3027 = vrot.slane %v2942, 4
      %v3028 = vrot.slane %v2942, 6
      %v3029 = vrot.slane %v2943, 2
      %v3030 = vrot.slane %v2943, 4
      %v3031 = vrot.slane %v2943, 6
      %v3056 = vstv %s1907
      %v3057 = vadd.s32 %v3056, 2
      %v3058 = vadd.s32 %v3056, 4
      %v3059 = vadd.s32 %v3056, 6
      %v3060 = vmul.u32 %v3056, 16
      %v3061 = vmul.u32 %v3057, 16
      %v3062 = vmul.u32 %v3058, 16
      %v3063 = vmul.u32 %v3059, 16
      %v3064 = vmul.u32 %v1904, 2
      %v3065 = vadd.s32 %v3060, %v3064
      %v3066 = vadd.s32 %v3061, %v3064
      %v3067 = vadd.s32 %v3062, %v3064
      %v3068 = vadd.s32 %v3063, %v3064
      %v3069 = vadd.s32 %v3065, 1
      %v3070 = vadd.s32 %v3066, 1
      %v3071 = vadd.s32 %v3067, 1
      %v3072 = vadd.s32 %v3068, 1
      %v3073 = vadd.s32 %v3065, 16
      %v3074 = vadd.s32 %v3066, 16
      %v3075 = vadd.s32 %v3067, 16
      %v3076 = vadd.s32 %v3068, 16
      %v3077 = vadd.s32 %v3073, 1
      %v3078 = vadd.s32 %v3074, 1
      %v3079 = vadd.s32 %v3075, 1
      %v3080 = vadd.s32 %v3076, 1
      %v3081 = vrot.slane %v2928, 7
      %v3082 = vrot.slane %v3081, 2
      %v3083 = vrot.slane %v2952, 7
      %v3084 = vrot.slane %v3083, 2
      %v3085 = vrot.slane %v2953, 7
      %v3086 = vrot.slane %v3085, 2
      %v3087 = vrot.slane %v2954, 7
      %v3088 = vrot.slane %v3087, 2
      %v3089 = vrot.slane %v2929, 7
      %v3090 = vrot.slane %v3089, 2
      %v3091 = vrot.slane %v2955, 7
      %v3092 = vrot.slane %v3091, 2
      %v3093 = vrot.slane %v2956, 7
      %v3094 = vrot.slane %v3093, 2
      %v3095 = vrot.slane %v2957, 7
      %v3096 = vrot.slane %v3095, 2
      %v3097 = vrot.slane %v2932, 7
      %v3098 = vrot.slane %v3097, 2
      %v3099 = vrot.slane %v2958, 7
      %v3100 = vrot.slane %v3099, 2
      %v3101 = vrot.slane %v2959, 7
      %v3102 = vrot.slane %v3101, 2
      %v3103 = vrot.slane %v2960, 7
      %v3104 = vrot.slane %v3103, 2
      %v3105 = vrot.slane %v2933, 7
      %v3106 = vrot.slane %v3105, 2
      %v3107 = vrot.slane %v2961, 7
      %v3108 = vrot.slane %v3107, 2
      %v3109 = vrot.slane %v2962, 7
      %v3110 = vrot.slane %v3109, 2
      %v3111 = vrot.slane %v2963, 7
      %v3112 = vrot.slane %v3111, 2
      %v3113 = vrot.slane %v2936, 7
      %v3114 = vrot.slane %v3113, 2
      %v3115 = vrot.slane %v2964, 7
      %v3116 = vrot.slane %v3115, 2
      %v3117 = vrot.slane %v2965, 7
      %v3118 = vrot.slane %v3117, 2
      %v3119 = vrot.slane %v2966, 7
      %v3120 = vrot.slane %v3119, 2
      %v3121 = vrot.slane %v2937, 7
      %v3122 = vrot.slane %v3121, 2
      %v3123 = vrot.slane %v2967, 7
      %v3124 = vrot.slane %v3123, 2
      %v3125 = vrot.slane %v2968, 7
      %v3126 = vrot.slane %v3125, 2
      %v3127 = vrot.slane %v2969, 7
      %v3128 = vrot.slane %v3127, 2
      %v3129 = vrot.slane %v2940, 7
      %v3130 = vrot.slane %v3129, 2
      %v3131 = vrot.slane %v2970, 7
      %v3132 = vrot.slane %v3131, 2
      %v3133 = vrot.slane %v2971, 7
      %v3134 = vrot.slane %v3133, 2
      %v3135 = vrot.slane %v2972, 7
      %v3136 = vrot.slane %v3135, 2
      %v3137 = vrot.slane %v2941, 7
      %v3138 = vrot.slane %v3137, 2
      %v3139 = vrot.slane %v2973, 7
      %v3140 = vrot.slane %v3139, 2
      %v3141 = vrot.slane %v2974, 7
      %v3142 = vrot.slane %v3141, 2
      %v3143 = vrot.slane %v2975, 7
      %v3144 = vrot.slane %v3143, 2
      %vm3177 = vcmp.ge.f32.partialorder %v2928, %v3082
      %vm3178 = vcmp.ge.f32.partialorder %v2952, %v3084
      %vm3179 = vcmp.ge.f32.partialorder %v2953, %v3086
      %vm3180 = vcmp.ge.f32.partialorder %v2954, %v3088
      %vm3181 = vcmp.ge.f32.partialorder %v2929, %v3090
      %vm3182 = vcmp.ge.f32.partialorder %v2955, %v3092
      %vm3183 = vcmp.ge.f32.partialorder %v2956, %v3094
      %vm3184 = vcmp.ge.f32.partialorder %v2957, %v3096
      %vm3185 = vcmp.ge.f32.partialorder %v2932, %v3098
      %vm3186 = vcmp.ge.f32.partialorder %v2958, %v3100
      %vm3187 = vcmp.ge.f32.partialorder %v2959, %v3102
      %vm3188 = vcmp.ge.f32.partialorder %v2960, %v3104
      %vm3189 = vcmp.ge.f32.partialorder %v2933, %v3106
      %vm3190 = vcmp.ge.f32.partialorder %v2961, %v3108
      %vm3191 = vcmp.ge.f32.partialorder %v2962, %v3110
      %vm3192 = vcmp.ge.f32.partialorder %v2963, %v3112
      %vm3193 = vcmp.ge.f32.partialorder %v2936, %v3114
      %vm3194 = vcmp.ge.f32.partialorder %v2964, %v3116
      %vm3195 = vcmp.ge.f32.partialorder %v2965, %v3118
      %vm3196 = vcmp.ge.f32.partialorder %v2966, %v3120
      %vm3197 = vcmp.ge.f32.partialorder %v2937, %v3122
      %vm3198 = vcmp.ge.f32.partialorder %v2967, %v3124
      %vm3199 = vcmp.ge.f32.partialorder %v2968, %v3126
      %vm3200 = vcmp.ge.f32.partialorder %v2969, %v3128
      %vm3201 = vcmp.ge.f32.partialorder %v2940, %v3130
      %vm3202 = vcmp.ge.f32.partialorder %v2970, %v3132
      %vm3203 = vcmp.ge.f32.partialorder %v2971, %v3134
      %vm3204 = vcmp.ge.f32.partialorder %v2972, %v3136
      %vm3205 = vcmp.ge.f32.partialorder %v2941, %v3138
      %vm3206 = vcmp.ge.f32.partialorder %v2973, %v3140
      %vm3207 = vcmp.ge.f32.partialorder %v2974, %v3142
      %vm3208 = vcmp.ge.f32.partialorder %v2975, %v3144
      %v3209 = vsel %vm3177, %v2928, %v3082
      %v3210 = vsel %vm3178, %v2952, %v3084
      %v3211 = vsel %vm3179, %v2953, %v3086
      %v3212 = vsel %vm3180, %v2954, %v3088
      %v3213 = vsel %vm3181, %v2929, %v3090
      %v3214 = vsel %vm3182, %v2955, %v3092
      %v3215 = vsel %vm3183, %v2956, %v3094
      %v3216 = vsel %vm3184, %v2957, %v3096
      %v3217 = vsel %vm3185, %v2932, %v3098
      %v3218 = vsel %vm3186, %v2958, %v3100
      %v3219 = vsel %vm3187, %v2959, %v3102
      %v3220 = vsel %vm3188, %v2960, %v3104
      %v3221 = vsel %vm3189, %v2933, %v3106
      %v3222 = vsel %vm3190, %v2961, %v3108
      %v3223 = vsel %vm3191, %v2962, %v3110
      %v3224 = vsel %vm3192, %v2963, %v3112
      %v3225 = vsel %vm3193, %v2936, %v3114
      %v3226 = vsel %vm3194, %v2964, %v3116
      %v3227 = vsel %vm3195, %v2965, %v3118
      %v3228 = vsel %vm3196, %v2966, %v3120
      %v3229 = vsel %vm3197, %v2937, %v3122
      %v3230 = vsel %vm3198, %v2967, %v3124
      %v3231 = vsel %vm3199, %v2968, %v3126
      %v3232 = vsel %vm3200, %v2969, %v3128
      %v3233 = vsel %vm3201, %v2940, %v3130
      %v3234 = vsel %vm3202, %v2970, %v3132
      %v3235 = vsel %vm3203, %v2971, %v3134
      %v3236 = vsel %vm3204, %v2972, %v3136
      %v3237 = vsel %vm3205, %v2941, %v3138
      %v3238 = vsel %vm3206, %v2973, %v3140
      %v3239 = vsel %vm3207, %v2974, %v3142
      %v3240 = vsel %vm3208, %v2975, %v3144
      %v3242 = vunpack.c.l.s4 269488144
      %v3243 = vunpack.c.0.s8 %v3242
      %v3244 = vperm.slane %v3065, %v3243
      %v3246 = vunpack.c.l.s4 842150450
      %v3247 = vunpack.c.0.s8 %v3246
      %v3248 = vperm.slane %v3065, %v3247
      %v3250 = vunpack.c.l.s4 1414812756
      %v3251 = vunpack.c.0.s8 %v3250
      %v3252 = vperm.slane %v3065, %v3251
      %v3254 = vunpack.c.l.s4 1987475062
      %v3255 = vunpack.c.0.s8 %v3254
      %v3256 = vperm.slane %v3065, %v3255
      %v3258 = vunpack.c.l.s4 269488144
      %v3259 = vunpack.c.0.s8 %v3258
      %v3260 = vperm.slane %v3066, %v3259
      %v3262 = vunpack.c.l.s4 842150450
      %v3263 = vunpack.c.0.s8 %v3262
      %v3264 = vperm.slane %v3066, %v3263
      %v3266 = vunpack.c.l.s4 1414812756
      %v3267 = vunpack.c.0.s8 %v3266
      %v3268 = vperm.slane %v3066, %v3267
      %v3270 = vunpack.c.l.s4 1987475062
      %v3271 = vunpack.c.0.s8 %v3270
      %v3272 = vperm.slane %v3066, %v3271
      %v3274 = vunpack.c.l.s4 269488144
      %v3275 = vunpack.c.0.s8 %v3274
      %v3276 = vperm.slane %v3067, %v3275
      %v3278 = vunpack.c.l.s4 842150450
      %v3279 = vunpack.c.0.s8 %v3278
      %v3280 = vperm.slane %v3067, %v3279
      %v3282 = vunpack.c.l.s4 1414812756
      %v3283 = vunpack.c.0.s8 %v3282
      %v3284 = vperm.slane %v3067, %v3283
      %v3286 = vunpack.c.l.s4 1987475062
      %v3287 = vunpack.c.0.s8 %v3286
      %v3288 = vperm.slane %v3067, %v3287
      %v3290 = vunpack.c.l.s4 269488144
      %v3291 = vunpack.c.0.s8 %v3290
      %v3292 = vperm.slane %v3068, %v3291
      %v3294 = vunpack.c.l.s4 842150450
      %v3295 = vunpack.c.0.s8 %v3294
      %v3296 = vperm.slane %v3068, %v3295
      %v3298 = vunpack.c.l.s4 1414812756
      %v3299 = vunpack.c.0.s8 %v3298
      %v3300 = vperm.slane %v3068, %v3299
      %v3302 = vunpack.c.l.s4 1987475062
      %v3303 = vunpack.c.0.s8 %v3302
      %v3304 = vperm.slane %v3068, %v3303
      %v3305 = vrot.slane %v3244, 1
      %v3306 = vrot.slane %v3248, 1
      %v3307 = vrot.slane %v3252, 1
      %v3308 = vrot.slane %v3256, 1
      %v3309 = vrot.slane %v3260, 1
      %v3310 = vrot.slane %v3264, 1
      %v3311 = vrot.slane %v3268, 1
      %v3312 = vrot.slane %v3272, 1
      %v3313 = vrot.slane %v3276, 1
      %v3314 = vrot.slane %v3280, 1
      %v3315 = vrot.slane %v3284, 1
      %v3316 = vrot.slane %v3288, 1
      %v3317 = vrot.slane %v3292, 1
      %v3318 = vrot.slane %v3296, 1
      %v3319 = vrot.slane %v3300, 1
      %v3320 = vrot.slane %v3304, 1
      %v3322 = vunpack.c.l.s4 269488144
      %v3323 = vunpack.c.0.s8 %v3322
      %v3324 = vperm.slane %v3069, %v3323
      %v3326 = vunpack.c.l.s4 842150450
      %v3327 = vunpack.c.0.s8 %v3326
      %v3328 = vperm.slane %v3069, %v3327
      %v3330 = vunpack.c.l.s4 1414812756
      %v3331 = vunpack.c.0.s8 %v3330
      %v3332 = vperm.slane %v3069, %v3331
      %v3334 = vunpack.c.l.s4 1987475062
      %v3335 = vunpack.c.0.s8 %v3334
      %v3336 = vperm.slane %v3069, %v3335
      %v3338 = vunpack.c.l.s4 269488144
      %v3339 = vunpack.c.0.s8 %v3338
      %v3340 = vperm.slane %v3070, %v3339
      %v3342 = vunpack.c.l.s4 842150450
      %v3343 = vunpack.c.0.s8 %v3342
      %v3344 = vperm.slane %v3070, %v3343
      %v3346 = vunpack.c.l.s4 1414812756
      %v3347 = vunpack.c.0.s8 %v3346
      %v3348 = vperm.slane %v3070, %v3347
      %v3350 = vunpack.c.l.s4 1987475062
      %v3351 = vunpack.c.0.s8 %v3350
      %v3352 = vperm.slane %v3070, %v3351
      %v3354 = vunpack.c.l.s4 269488144
      %v3355 = vunpack.c.0.s8 %v3354
      %v3356 = vperm.slane %v3071, %v3355
      %v3358 = vunpack.c.l.s4 842150450
      %v3359 = vunpack.c.0.s8 %v3358
      %v3360 = vperm.slane %v3071, %v3359
      %v3362 = vunpack.c.l.s4 1414812756
      %v3363 = vunpack.c.0.s8 %v3362
      %v3364 = vperm.slane %v3071, %v3363
      %v3366 = vunpack.c.l.s4 1987475062
      %v3367 = vunpack.c.0.s8 %v3366
      %v3368 = vperm.slane %v3071, %v3367
      %v3370 = vunpack.c.l.s4 269488144
      %v3371 = vunpack.c.0.s8 %v3370
      %v3372 = vperm.slane %v3072, %v3371
      %v3374 = vunpack.c.l.s4 842150450
      %v3375 = vunpack.c.0.s8 %v3374
      %v3376 = vperm.slane %v3072, %v3375
      %v3378 = vunpack.c.l.s4 1414812756
      %v3379 = vunpack.c.0.s8 %v3378
      %v3380 = vperm.slane %v3072, %v3379
      %v3382 = vunpack.c.l.s4 1987475062
      %v3383 = vunpack.c.0.s8 %v3382
      %v3384 = vperm.slane %v3072, %v3383
      %v3385 = vrot.slane %v3324, 1
      %v3386 = vrot.slane %v3328, 1
      %v3387 = vrot.slane %v3332, 1
      %v3388 = vrot.slane %v3336, 1
      %v3389 = vrot.slane %v3340, 1
      %v3390 = vrot.slane %v3344, 1
      %v3391 = vrot.slane %v3348, 1
      %v3392 = vrot.slane %v3352, 1
      %v3393 = vrot.slane %v3356, 1
      %v3394 = vrot.slane %v3360, 1
      %v3395 = vrot.slane %v3364, 1
      %v3396 = vrot.slane %v3368, 1
      %v3397 = vrot.slane %v3372, 1
      %v3398 = vrot.slane %v3376, 1
      %v3399 = vrot.slane %v3380, 1
      %v3400 = vrot.slane %v3384, 1
      %v3401 = vsel %vm3177, %v3244, %v3324
      %v3402 = vsel %vm3178, %v3305, %v3385
      %v3403 = vsel %vm3179, %v3248, %v3328
      %v3404 = vsel %vm3180, %v3306, %v3386
      %v3405 = vsel %vm3181, %v3252, %v3332
      %v3406 = vsel %vm3182, %v3307, %v3387
      %v3407 = vsel %vm3183, %v3256, %v3336
      %v3408 = vsel %vm3184, %v3308, %v3388
      %v3409 = vsel %vm3185, %v3260, %v3340
      %v3410 = vsel %vm3186, %v3309, %v3389
      %v3411 = vsel %vm3187, %v3264, %v3344
      %v3412 = vsel %vm3188, %v3310, %v3390
      %v3413 = vsel %vm3189, %v3268, %v3348
      %v3414 = vsel %vm3190, %v3311, %v3391
      %v3415 = vsel %vm3191, %v3272, %v3352
      %v3416 = vsel %vm3192, %v3312, %v3392
      %v3417 = vsel %vm3193, %v3276, %v3356
      %v3418 = vsel %vm3194, %v3313, %v3393
      %v3419 = vsel %vm3195, %v3280, %v3360
      %v3420 = vsel %vm3196, %v3314, %v3394
      %v3421 = vsel %vm3197, %v3284, %v3364
      %v3422 = vsel %vm3198, %v3315, %v3395
      %v3423 = vsel %vm3199, %v3288, %v3368
      %v3424 = vsel %vm3200, %v3316, %v3396
      %v3425 = vsel %vm3201, %v3292, %v3372
      %v3426 = vsel %vm3202, %v3317, %v3397
      %v3427 = vsel %vm3203, %v3296, %v3376
      %v3428 = vsel %vm3204, %v3318, %v3398
      %v3429 = vsel %vm3205, %v3300, %v3380
      %v3430 = vsel %vm3206, %v3319, %v3399
      %v3431 = vsel %vm3207, %v3304, %v3384
      %v3432 = vsel %vm3208, %v3320, %v3400
      %v3433 = vrot.slane %v2930, 7
      %v3434 = vrot.slane %v3433, 2
      %v3435 = vrot.slane %v3008, 7
      %v3436 = vrot.slane %v3435, 2
      %v3437 = vrot.slane %v3009, 7
      %v3438 = vrot.slane %v3437, 2
      %v3439 = vrot.slane %v3010, 7
      %v3440 = vrot.slane %v3439, 2
      %v3441 = vrot.slane %v2931, 7
      %v3442 = vrot.slane %v3441, 2
      %v3443 = vrot.slane %v3011, 7
      %v3444 = vrot.slane %v3443, 2
      %v3445 = vrot.slane %v3012, 7
      %v3446 = vrot.slane %v3445, 2
      %v3447 = vrot.slane %v3013, 7
      %v3448 = vrot.slane %v3447, 2
      %v3449 = vrot.slane %v2934, 7
      %v3450 = vrot.slane %v3449, 2
      %v3451 = vrot.slane %v3014, 7
      %v3452 = vrot.slane %v3451, 2
      %v3453 = vrot.slane %v3015, 7
      %v3454 = vrot.slane %v3453, 2
      %v3455 = vrot.slane %v3016, 7
      %v3456 = vrot.slane %v3455, 2
      %v3457 = vrot.slane %v2935, 7
      %v3458 = vrot.slane %v3457, 2
      %v3459 = vrot.slane %v3017, 7
      %v3460 = vrot.slane %v3459, 2
      %v3461 = vrot.slane %v3018, 7
      %v3462 = vrot.slane %v3461, 2
      %v3463 = vrot.slane %v3019, 7
      %v3464 = vrot.slane %v3463, 2
      %v3465 = vrot.slane %v2938, 7
      %v3466 = vrot.slane %v3465, 2
      %v3467 = vrot.slane %v3020, 7
      %v3468 = vrot.slane %v3467, 2
      %v3469 = vrot.slane %v3021, 7
      %v3470 = vrot.slane %v3469, 2
      %v3471 = vrot.slane %v3022, 7
      %v3472 = vrot.slane %v3471, 2
      %v3473 = vrot.slane %v2939, 7
      %v3474 = vrot.slane %v3473, 2
      %v3475 = vrot.slane %v3023, 7
      %v3476 = vrot.slane %v3475, 2
      %v3477 = vrot.slane %v3024, 7
      %v3478 = vrot.slane %v3477, 2
      %v3479 = vrot.slane %v3025, 7
      %v3480 = vrot.slane %v3479, 2
      %v3481 = vrot.slane %v2942, 7
      %v3482 = vrot.slane %v3481, 2
      %v3483 = vrot.slane %v3026, 7
      %v3484 = vrot.slane %v3483, 2
      %v3485 = vrot.slane %v3027, 7
      %v3486 = vrot.slane %v3485, 2
      %v3487 = vrot.slane %v3028, 7
      %v3488 = vrot.slane %v3487, 2
      %v3489 = vrot.slane %v2943, 7
      %v3490 = vrot.slane %v3489, 2
      %v3491 = vrot.slane %v3029, 7
      %v3492 = vrot.slane %v3491, 2
      %v3493 = vrot.slane %v3030, 7
      %v3494 = vrot.slane %v3493, 2
      %v3495 = vrot.slane %v3031, 7
      %v3496 = vrot.slane %v3495, 2
      %vm3529 = vcmp.ge.f32.partialorder %v2930, %v3434
      %vm3530 = vcmp.ge.f32.partialorder %v3008, %v3436
      %vm3531 = vcmp.ge.f32.partialorder %v3009, %v3438
      %vm3532 = vcmp.ge.f32.partialorder %v3010, %v3440
      %vm3533 = vcmp.ge.f32.partialorder %v2931, %v3442
      %vm3534 = vcmp.ge.f32.partialorder %v3011, %v3444
      %vm3535 = vcmp.ge.f32.partialorder %v3012, %v3446
      %vm3536 = vcmp.ge.f32.partialorder %v3013, %v3448
      %vm3537 = vcmp.ge.f32.partialorder %v2934, %v3450
      %vm3538 = vcmp.ge.f32.partialorder %v3014, %v3452
      %vm3539 = vcmp.ge.f32.partialorder %v3015, %v3454
      %vm3540 = vcmp.ge.f32.partialorder %v3016, %v3456
      %vm3541 = vcmp.ge.f32.partialorder %v2935, %v3458
      %vm3542 = vcmp.ge.f32.partialorder %v3017, %v3460
      %vm3543 = vcmp.ge.f32.partialorder %v3018, %v3462
      %vm3544 = vcmp.ge.f32.partialorder %v3019, %v3464
      %vm3545 = vcmp.ge.f32.partialorder %v2938, %v3466
      %vm3546 = vcmp.ge.f32.partialorder %v3020, %v3468
      %vm3547 = vcmp.ge.f32.partialorder %v3021, %v3470
      %vm3548 = vcmp.ge.f32.partialorder %v3022, %v3472
      %vm3549 = vcmp.ge.f32.partialorder %v2939, %v3474
      %vm3550 = vcmp.ge.f32.partialorder %v3023, %v3476
      %vm3551 = vcmp.ge.f32.partialorder %v3024, %v3478
      %vm3552 = vcmp.ge.f32.partialorder %v3025, %v3480
      %vm3553 = vcmp.ge.f32.partialorder %v2942, %v3482
      %vm3554 = vcmp.ge.f32.partialorder %v3026, %v3484
      %vm3555 = vcmp.ge.f32.partialorder %v3027, %v3486
      %vm3556 = vcmp.ge.f32.partialorder %v3028, %v3488
      %vm3557 = vcmp.ge.f32.partialorder %v2943, %v3490
      %vm3558 = vcmp.ge.f32.partialorder %v3029, %v3492
      %vm3559 = vcmp.ge.f32.partialorder %v3030, %v3494
      %vm3560 = vcmp.ge.f32.partialorder %v3031, %v3496
      %v3561 = vsel %vm3529, %v2930, %v3434
      %v3562 = vsel %vm3530, %v3008, %v3436
      %v3563 = vsel %vm3531, %v3009, %v3438
      %v3564 = vsel %vm3532, %v3010, %v3440
      %v3565 = vsel %vm3533, %v2931, %v3442
      %v3566 = vsel %vm3534, %v3011, %v3444
      %v3567 = vsel %vm3535, %v3012, %v3446
      %v3568 = vsel %vm3536, %v3013, %v3448
      %v3569 = vsel %vm3537, %v2934, %v3450
      %v3570 = vsel %vm3538, %v3014, %v3452
      %v3571 = vsel %vm3539, %v3015, %v3454
      %v3572 = vsel %vm3540, %v3016, %v3456
      %v3573 = vsel %vm3541, %v2935, %v3458
      %v3574 = vsel %vm3542, %v3017, %v3460
      %v3575 = vsel %vm3543, %v3018, %v3462
      %v3576 = vsel %vm3544, %v3019, %v3464
      %v3577 = vsel %vm3545, %v2938, %v3466
      %v3578 = vsel %vm3546, %v3020, %v3468
      %v3579 = vsel %vm3547, %v3021, %v3470
      %v3580 = vsel %vm3548, %v3022, %v3472
      %v3581 = vsel %vm3549, %v2939, %v3474
      %v3582 = vsel %vm3550, %v3023, %v3476
      %v3583 = vsel %vm3551, %v3024, %v3478
      %v3584 = vsel %vm3552, %v3025, %v3480
      %v3585 = vsel %vm3553, %v2942, %v3482
      %v3586 = vsel %vm3554, %v3026, %v3484
      %v3587 = vsel %vm3555, %v3027, %v3486
      %v3588 = vsel %vm3556, %v3028, %v3488
      %v3589 = vsel %vm3557, %v2943, %v3490
      %v3590 = vsel %vm3558, %v3029, %v3492
      %v3591 = vsel %vm3559, %v3030, %v3494
      %v3592 = vsel %vm3560, %v3031, %v3496
      %v3594 = vunpack.c.l.s4 269488144
      %v3595 = vunpack.c.0.s8 %v3594
      %v3596 = vperm.slane %v3073, %v3595
      %v3598 = vunpack.c.l.s4 842150450
      %v3599 = vunpack.c.0.s8 %v3598
      %v3600 = vperm.slane %v3073, %v3599
      %v3602 = vunpack.c.l.s4 1414812756
      %v3603 = vunpack.c.0.s8 %v3602
      %v3604 = vperm.slane %v3073, %v3603
      %v3606 = vunpack.c.l.s4 1987475062
      %v3607 = vunpack.c.0.s8 %v3606
      %v3608 = vperm.slane %v3073, %v3607
      %v3610 = vunpack.c.l.s4 269488144
      %v3611 = vunpack.c.0.s8 %v3610
      %v3612 = vperm.slane %v3074, %v3611
      %v3614 = vunpack.c.l.s4 842150450
      %v3615 = vunpack.c.0.s8 %v3614
      %v3616 = vperm.slane %v3074, %v3615
      %v3618 = vunpack.c.l.s4 1414812756
      %v3619 = vunpack.c.0.s8 %v3618
      %v3620 = vperm.slane %v3074, %v3619
      %v3622 = vunpack.c.l.s4 1987475062
      %v3623 = vunpack.c.0.s8 %v3622
      %v3624 = vperm.slane %v3074, %v3623
      %v3626 = vunpack.c.l.s4 269488144
      %v3627 = vunpack.c.0.s8 %v3626
      %v3628 = vperm.slane %v3075, %v3627
      %v3630 = vunpack.c.l.s4 842150450
      %v3631 = vunpack.c.0.s8 %v3630
      %v3632 = vperm.slane %v3075, %v3631
      %v3634 = vunpack.c.l.s4 1414812756
      %v3635 = vunpack.c.0.s8 %v3634
      %v3636 = vperm.slane %v3075, %v3635
      %v3638 = vunpack.c.l.s4 1987475062
      %v3639 = vunpack.c.0.s8 %v3638
      %v3640 = vperm.slane %v3075, %v3639
      %v3642 = vunpack.c.l.s4 269488144
      %v3643 = vunpack.c.0.s8 %v3642
      %v3644 = vperm.slane %v3076, %v3643
      %v3646 = vunpack.c.l.s4 842150450
      %v3647 = vunpack.c.0.s8 %v3646
      %v3648 = vperm.slane %v3076, %v3647
      %v3650 = vunpack.c.l.s4 1414812756
      %v3651 = vunpack.c.0.s8 %v3650
      %v3652 = vperm.slane %v3076, %v3651
      %v3654 = vunpack.c.l.s4 1987475062
      %v3655 = vunpack.c.0.s8 %v3654
      %v3656 = vperm.slane %v3076, %v3655
      %v3657 = vrot.slane %v3596, 1
      %v3658 = vrot.slane %v3600, 1
      %v3659 = vrot.slane %v3604, 1
      %v3660 = vrot.slane %v3608, 1
      %v3661 = vrot.slane %v3612, 1
      %v3662 = vrot.slane %v3616, 1
      %v3663 = vrot.slane %v3620, 1
      %v3664 = vrot.slane %v3624, 1
      %v3665 = vrot.slane %v3628, 1
      %v3666 = vrot.slane %v3632, 1
      %v3667 = vrot.slane %v3636, 1
      %v3668 = vrot.slane %v3640, 1
      %v3669 = vrot.slane %v3644, 1
      %v3670 = vrot.slane %v3648, 1
      %v3671 = vrot.slane %v3652, 1
      %v3672 = vrot.slane %v3656, 1
      %v3674 = vunpack.c.l.s4 269488144
      %v3675 = vunpack.c.0.s8 %v3674
      %v3676 = vperm.slane %v3077, %v3675
      %v3678 = vunpack.c.l.s4 842150450
      %v3679 = vunpack.c.0.s8 %v3678
      %v3680 = vperm.slane %v3077, %v3679
      %v3682 = vunpack.c.l.s4 1414812756
      %v3683 = vunpack.c.0.s8 %v3682
      %v3684 = vperm.slane %v3077, %v3683
      %v3686 = vunpack.c.l.s4 1987475062
      %v3687 = vunpack.c.0.s8 %v3686
      %v3688 = vperm.slane %v3077, %v3687
      %v3690 = vunpack.c.l.s4 269488144
      %v3691 = vunpack.c.0.s8 %v3690
      %v3692 = vperm.slane %v3078, %v3691
      %v3694 = vunpack.c.l.s4 842150450
      %v3695 = vunpack.c.0.s8 %v3694
      %v3696 = vperm.slane %v3078, %v3695
      %v3698 = vunpack.c.l.s4 1414812756
      %v3699 = vunpack.c.0.s8 %v3698
      %v3700 = vperm.slane %v3078, %v3699
      %v3702 = vunpack.c.l.s4 1987475062
      %v3703 = vunpack.c.0.s8 %v3702
      %v3704 = vperm.slane %v3078, %v3703
      %v3706 = vunpack.c.l.s4 269488144
      %v3707 = vunpack.c.0.s8 %v3706
      %v3708 = vperm.slane %v3079, %v3707
      %v3710 = vunpack.c.l.s4 842150450
      %v3711 = vunpack.c.0.s8 %v3710
      %v3712 = vperm.slane %v3079, %v3711
      %v3714 = vunpack.c.l.s4 1414812756
      %v3715 = vunpack.c.0.s8 %v3714
      %v3716 = vperm.slane %v3079, %v3715
      %v3718 = vunpack.c.l.s4 1987475062
      %v3719 = vunpack.c.0.s8 %v3718
      %v3720 = vperm.slane %v3079, %v3719
      %v3722 = vunpack.c.l.s4 269488144
      %v3723 = vunpack.c.0.s8 %v3722
      %v3724 = vperm.slane %v3080, %v3723
      %v3726 = vunpack.c.l.s4 842150450
      %v3727 = vunpack.c.0.s8 %v3726
      %v3728 = vperm.slane %v3080, %v3727
      %v3730 = vunpack.c.l.s4 1414812756
      %v3731 = vunpack.c.0.s8 %v3730
      %v3732 = vperm.slane %v3080, %v3731
      %v3734 = vunpack.c.l.s4 1987475062
      %v3735 = vunpack.c.0.s8 %v3734
      %v3736 = vperm.slane %v3080, %v3735
      %v3737 = vrot.slane %v3676, 1
      %v3738 = vrot.slane %v3680, 1
      %v3739 = vrot.slane %v3684, 1
      %v3740 = vrot.slane %v3688, 1
      %v3741 = vrot.slane %v3692, 1
      %v3742 = vrot.slane %v3696, 1
      %v3743 = vrot.slane %v3700, 1
      %v3744 = vrot.slane %v3704, 1
      %v3745 = vrot.slane %v3708, 1
      %v3746 = vrot.slane %v3712, 1
      %v3747 = vrot.slane %v3716, 1
      %v3748 = vrot.slane %v3720, 1
      %v3749 = vrot.slane %v3724, 1
      %v3750 = vrot.slane %v3728, 1
      %v3751 = vrot.slane %v3732, 1
      %v3752 = vrot.slane %v3736, 1
      %v3753 = vsel %vm3529, %v3596, %v3676
      %v3754 = vsel %vm3530, %v3657, %v3737
      %v3755 = vsel %vm3531, %v3600, %v3680
      %v3756 = vsel %vm3532, %v3658, %v3738
      %v3757 = vsel %vm3533, %v3604, %v3684
      %v3758 = vsel %vm3534, %v3659, %v3739
      %v3759 = vsel %vm3535, %v3608, %v3688
      %v3760 = vsel %vm3536, %v3660, %v3740
      %v3761 = vsel %vm3537, %v3612, %v3692
      %v3762 = vsel %vm3538, %v3661, %v3741
      %v3763 = vsel %vm3539, %v3616, %v3696
      %v3764 = vsel %vm3540, %v3662, %v3742
      %v3765 = vsel %vm3541, %v3620, %v3700
      %v3766 = vsel %vm3542, %v3663, %v3743
      %v3767 = vsel %vm3543, %v3624, %v3704
      %v3768 = vsel %vm3544, %v3664, %v3744
      %v3769 = vsel %vm3545, %v3628, %v3708
      %v3770 = vsel %vm3546, %v3665, %v3745
      %v3771 = vsel %vm3547, %v3632, %v3712
      %v3772 = vsel %vm3548, %v3666, %v3746
      %v3773 = vsel %vm3549, %v3636, %v3716
      %v3774 = vsel %vm3550, %v3667, %v3747
      %v3775 = vsel %vm3551, %v3640, %v3720
      %v3776 = vsel %vm3552, %v3668, %v3748
      %v3777 = vsel %vm3553, %v3644, %v3724
      %v3778 = vsel %vm3554, %v3669, %v3749
      %v3779 = vsel %vm3555, %v3648, %v3728
      %v3780 = vsel %vm3556, %v3670, %v3750
      %v3781 = vsel %vm3557, %v3652, %v3732
      %v3782 = vsel %vm3558, %v3671, %v3751
      %v3783 = vsel %vm3559, %v3656, %v3736
      %v3784 = vsel %vm3560, %v3672, %v3752
      %vm3785 = vcmp.ge.f32.partialorder %v3209, %v3561
      %vm3786 = vcmp.ge.f32.partialorder %v3210, %v3562
      %vm3787 = vcmp.ge.f32.partialorder %v3211, %v3563
      %vm3788 = vcmp.ge.f32.partialorder %v3212, %v3564
      %vm3789 = vcmp.ge.f32.partialorder %v3213, %v3565
      %vm3790 = vcmp.ge.f32.partialorder %v3214, %v3566
      %vm3791 = vcmp.ge.f32.partialorder %v3215, %v3567
      %vm3792 = vcmp.ge.f32.partialorder %v3216, %v3568
      %vm3793 = vcmp.ge.f32.partialorder %v3217, %v3569
      %vm3794 = vcmp.ge.f32.partialorder %v3218, %v3570
      %vm3795 = vcmp.ge.f32.partialorder %v3219, %v3571
      %vm3796 = vcmp.ge.f32.partialorder %v3220, %v3572
      %vm3797 = vcmp.ge.f32.partialorder %v3221, %v3573
      %vm3798 = vcmp.ge.f32.partialorder %v3222, %v3574
      %vm3799 = vcmp.ge.f32.partialorder %v3223, %v3575
      %vm3800 = vcmp.ge.f32.partialorder %v3224, %v3576
      %vm3801 = vcmp.ge.f32.partialorder %v3225, %v3577
      %vm3802 = vcmp.ge.f32.partialorder %v3226, %v3578
      %vm3803 = vcmp.ge.f32.partialorder %v3227, %v3579
      %vm3804 = vcmp.ge.f32.partialorder %v3228, %v3580
      %vm3805 = vcmp.ge.f32.partialorder %v3229, %v3581
      %vm3806 = vcmp.ge.f32.partialorder %v3230, %v3582
      %vm3807 = vcmp.ge.f32.partialorder %v3231, %v3583
      %vm3808 = vcmp.ge.f32.partialorder %v3232, %v3584
      %vm3809 = vcmp.ge.f32.partialorder %v3233, %v3585
      %vm3810 = vcmp.ge.f32.partialorder %v3234, %v3586
      %vm3811 = vcmp.ge.f32.partialorder %v3235, %v3587
      %vm3812 = vcmp.ge.f32.partialorder %v3236, %v3588
      %vm3813 = vcmp.ge.f32.partialorder %v3237, %v3589
      %vm3814 = vcmp.ge.f32.partialorder %v3238, %v3590
      %vm3815 = vcmp.ge.f32.partialorder %v3239, %v3591
      %vm3816 = vcmp.ge.f32.partialorder %v3240, %v3592
      %v3817 = vsel %vm3785, %v3209, %v3561
      %v3818 = vsel %vm3786, %v3210, %v3562
      %v3819 = vsel %vm3787, %v3211, %v3563
      %v3820 = vsel %vm3788, %v3212, %v3564
      %v3821 = vsel %vm3789, %v3213, %v3565
      %v3822 = vsel %vm3790, %v3214, %v3566
      %v3823 = vsel %vm3791, %v3215, %v3567
      %v3824 = vsel %vm3792, %v3216, %v3568
      %v3825 = vsel %vm3793, %v3217, %v3569
      %v3826 = vsel %vm3794, %v3218, %v3570
      %v3827 = vsel %vm3795, %v3219, %v3571
      %v3828 = vsel %vm3796, %v3220, %v3572
      %v3829 = vsel %vm3797, %v3221, %v3573
      %v3830 = vsel %vm3798, %v3222, %v3574
      %v3831 = vsel %vm3799, %v3223, %v3575
      %v3832 = vsel %vm3800, %v3224, %v3576
      %v3833 = vsel %vm3801, %v3225, %v3577
      %v3834 = vsel %vm3802, %v3226, %v3578
      %v3835 = vsel %vm3803, %v3227, %v3579
      %v3836 = vsel %vm3804, %v3228, %v3580
      %v3837 = vsel %vm3805, %v3229, %v3581
      %v3838 = vsel %vm3806, %v3230, %v3582
      %v3839 = vsel %vm3807, %v3231, %v3583
      %v3840 = vsel %vm3808, %v3232, %v3584
      %v3841 = vsel %vm3809, %v3233, %v3585
      %v3842 = vsel %vm3810, %v3234, %v3586
      %v3843 = vsel %vm3811, %v3235, %v3587
      %v3844 = vsel %vm3812, %v3236, %v3588
      %v3845 = vsel %vm3813, %v3237, %v3589
      %v3846 = vsel %vm3814, %v3238, %v3590
      %v3847 = vsel %vm3815, %v3239, %v3591
      %v3848 = vsel %vm3816, %v3240, %v3592
      %vm3881 = vcmask 1044484
      %v3882 = vsel %vm3881, %v3817, %v3817
      %vm3883 = vcmask 1046534
      %v3884 = vsel %vm3883, %v3817, %v3882
      %v3885 = vrot.slane %v3818, 7
      %vm3886 = vcmask 1041409
      %v3887 = vsel %vm3886, %v3885, %v3884
      %vm3888 = vcmask 1043459
      %v3889 = vsel %vm3888, %v3885, %v3887
      %vm3890 = vcmask 1045509
      %v3891 = vsel %vm3890, %v3885, %v3889
      %vm3892 = vcmask 1047559
      %v3893 = vsel %vm3892, %v3885, %v3891
      %v3894 = vsel %vm3881, %v3819, %v3819
      %v3895 = vsel %vm3883, %v3819, %v3894
      %v3896 = vrot.slane %v3820, 7
      %v3897 = vsel %vm3886, %v3896, %v3895
      %v3898 = vsel %vm3888, %v3896, %v3897
      %v3899 = vsel %vm3890, %v3896, %v3898
      %v3900 = vsel %vm3892, %v3896, %v3899
      %v3901 = vsel %vm3881, %v3821, %v3821
      %v3902 = vsel %vm3883, %v3821, %v3901
      %v3903 = vrot.slane %v3822, 7
      %v3904 = vsel %vm3886, %v3903, %v3902
      %v3905 = vsel %vm3888, %v3903, %v3904
      %v3906 = vsel %vm3890, %v3903, %v3905
      %v3907 = vsel %vm3892, %v3903, %v3906
      %v3908 = vsel %vm3881, %v3823, %v3823
      %v3909 = vsel %vm3883, %v3823, %v3908
      %v3910 = vrot.slane %v3824, 7
      %v3911 = vsel %vm3886, %v3910, %v3909
      %v3912 = vsel %vm3888, %v3910, %v3911
      %v3913 = vsel %vm3890, %v3910, %v3912
      %v3914 = vsel %vm3892, %v3910, %v3913
      %v3915 = vsel %vm3881, %v3825, %v3825
      %v3916 = vsel %vm3883, %v3825, %v3915
      %v3917 = vrot.slane %v3826, 7
      %v3918 = vsel %vm3886, %v3917, %v3916
      %v3919 = vsel %vm3888, %v3917, %v3918
      %v3920 = vsel %vm3890, %v3917, %v3919
      %v3921 = vsel %vm3892, %v3917, %v3920
      %v3922 = vsel %vm3881, %v3827, %v3827
      %v3923 = vsel %vm3883, %v3827, %v3922
      %v3924 = vrot.slane %v3828, 7
      %v3925 = vsel %vm3886, %v3924, %v3923
      %v3926 = vsel %vm3888, %v3924, %v3925
      %v3927 = vsel %vm3890, %v3924, %v3926
      %v3928 = vsel %vm3892, %v3924, %v3927
      %v3929 = vsel %vm3881, %v3829, %v3829
      %v3930 = vsel %vm3883, %v3829, %v3929
      %v3931 = vrot.slane %v3830, 7
      %v3932 = vsel %vm3886, %v3931, %v3930
      %v3933 = vsel %vm3888, %v3931, %v3932
      %v3934 = vsel %vm3890, %v3931, %v3933
      %v3935 = vsel %vm3892, %v3931, %v3934
      %v3936 = vsel %vm3881, %v3831, %v3831
      %v3937 = vsel %vm3883, %v3831, %v3936
      %v3938 = vrot.slane %v3832, 7
      %v3939 = vsel %vm3886, %v3938, %v3937
      %v3940 = vsel %vm3888, %v3938, %v3939
      %v3941 = vsel %vm3890, %v3938, %v3940
      %v3942 = vsel %vm3892, %v3938, %v3941
      %v3943 = vsel %vm3881, %v3833, %v3833
      %v3944 = vsel %vm3883, %v3833, %v3943
      %v3945 = vrot.slane %v3834, 7
      %v3946 = vsel %vm3886, %v3945, %v3944
      %v3947 = vsel %vm3888, %v3945, %v3946
      %v3948 = vsel %vm3890, %v3945, %v3947
      %v3949 = vsel %vm3892, %v3945, %v3948
      %v3950 = vsel %vm3881, %v3835, %v3835
      %v3951 = vsel %vm3883, %v3835, %v3950
      %v3952 = vrot.slane %v3836, 7
      %v3953 = vsel %vm3886, %v3952, %v3951
      %v3954 = vsel %vm3888, %v3952, %v3953
      %v3955 = vsel %vm3890, %v3952, %v3954
      %v3956 = vsel %vm3892, %v3952, %v3955
      %v3957 = vsel %vm3881, %v3837, %v3837
      %v3958 = vsel %vm3883, %v3837, %v3957
      %v3959 = vrot.slane %v3838, 7
      %v3960 = vsel %vm3886, %v3959, %v3958
      %v3961 = vsel %vm3888, %v3959, %v3960
      %v3962 = vsel %vm3890, %v3959, %v3961
      %v3963 = vsel %vm3892, %v3959, %v3962
      %v3964 = vsel %vm3881, %v3839, %v3839
      %v3965 = vsel %vm3883, %v3839, %v3964
      %v3966 = vrot.slane %v3840, 7
      %v3967 = vsel %vm3886, %v3966, %v3965
      %v3968 = vsel %vm3888, %v3966, %v3967
      %v3969 = vsel %vm3890, %v3966, %v3968
      %v3970 = vsel %vm3892, %v3966, %v3969
      %v3971 = vsel %vm3881, %v3841, %v3841
      %v3972 = vsel %vm3883, %v3841, %v3971
      %v3973 = vrot.slane %v3842, 7
      %v3974 = vsel %vm3886, %v3973, %v3972
      %v3975 = vsel %vm3888, %v3973, %v3974
      %v3976 = vsel %vm3890, %v3973, %v3975
      %v3977 = vsel %vm3892, %v3973, %v3976
      %v3978 = vsel %vm3881, %v3843, %v3843
      %v3979 = vsel %vm3883, %v3843, %v3978
      %v3980 = vrot.slane %v3844, 7
      %v3981 = vsel %vm3886, %v3980, %v3979
      %v3982 = vsel %vm3888, %v3980, %v3981
      %v3983 = vsel %vm3890, %v3980, %v3982
      %v3984 = vsel %vm3892, %v3980, %v3983
      %v3985 = vsel %vm3881, %v3845, %v3845
      %v3986 = vsel %vm3883, %v3845, %v3985
      %v3987 = vrot.slane %v3846, 7
      %v3988 = vsel %vm3886, %v3987, %v3986
      %v3989 = vsel %vm3888, %v3987, %v3988
      %v3990 = vsel %vm3890, %v3987, %v3989
      %v3991 = vsel %vm3892, %v3987, %v3990
      %v3992 = vsel %vm3881, %v3847, %v3847
      %v3993 = vsel %vm3883, %v3847, %v3992
      %v3994 = vrot.slane %v3848, 7
      %v3995 = vsel %vm3886, %v3994, %v3993
      %v3996 = vsel %vm3888, %v3994, %v3995
      %v3997 = vsel %vm3890, %v3994, %v3996
      %v3998 = vsel %vm3892, %v3994, %v3997
      %v4015 = vrot.slane %v3921, 4
      %vm4016 = vcmask 1047556
      %v4017 = vsel %vm4016, %v4015, %v3893
      %v4019 = vunpack.c.l.s4 1934713408
      %v4020 = vunpack.c.0.s8 %v4019
      %v4021 = vperm.slane %v4017, %v4020
      %v4022 = vrot.slane %v4021, 4
      %v4023 = vsel %vm4016, 0.0, %v4022
      %v4024 = vrot.slane %v3977, 4
      %v4025 = vsel %vm4016, %v4024, %v3949
      %v4027 = vunpack.c.l.s4 1934713408
      %v4028 = vunpack.c.0.s8 %v4027
      %v4029 = vperm.slane %v4025, %v4028
      %v4030 = vrot.slane %v4029, 4
      %v4031 = vsel %vm4016, 0.0, %v4030
      %v4032 = vrot.slane %v3928, 4
      %v4033 = vsel %vm4016, %v4032, %v3900
      %v4035 = vunpack.c.l.s4 1934713408
      %v4036 = vunpack.c.0.s8 %v4035
      %v4037 = vperm.slane %v4033, %v4036
      %v4038 = vrot.slane %v4037, 4
      %v4039 = vsel %vm4016, 0.0, %v4038
      %v4040 = vrot.slane %v3984, 4
      %v4041 = vsel %vm4016, %v4040, %v3956
      %v4043 = vunpack.c.l.s4 1934713408
      %v4044 = vunpack.c.0.s8 %v4043
      %v4045 = vperm.slane %v4041, %v4044
      %v4046 = vrot.slane %v4045, 4
      %v4047 = vsel %vm4016, 0.0, %v4046
      %v4048 = vrot.slane %v3935, 4
      %v4049 = vsel %vm4016, %v4048, %v3907
      %v4051 = vunpack.c.l.s4 1934713408
      %v4052 = vunpack.c.0.s8 %v4051
      %v4053 = vperm.slane %v4049, %v4052
      %v4054 = vrot.slane %v4053, 4
      %v4055 = vsel %vm4016, 0.0, %v4054
      %v4056 = vrot.slane %v3991, 4
      %v4057 = vsel %vm4016, %v4056, %v3963
      %v4059 = vunpack.c.l.s4 1934713408
      %v4060 = vunpack.c.0.s8 %v4059
      %v4061 = vperm.slane %v4057, %v4060
      %v4062 = vrot.slane %v4061, 4
      %v4063 = vsel %vm4016, 0.0, %v4062
      %v4064 = vrot.slane %v3942, 4
      %v4065 = vsel %vm4016, %v4064, %v3914
      %v4067 = vunpack.c.l.s4 1934713408
      %v4068 = vunpack.c.0.s8 %v4067
      %v4069 = vperm.slane %v4065, %v4068
      %v4070 = vrot.slane %v4069, 4
      %v4071 = vsel %vm4016, 0.0, %v4070
      %v4072 = vrot.slane %v3998, 4
      %v4073 = vsel %vm4016, %v4072, %v3970
      %v4075 = vunpack.c.l.s4 1934713408
      %v4076 = vunpack.c.0.s8 %v4075
      %v4077 = vperm.slane %v4073, %v4076
      %v4078 = vrot.slane %v4077, 4
      %v4079 = vsel %vm4016, 0.0, %v4078
      %4082 = vst [vmem:[#allocation1] ss:$4 sm:$0xff] %v4021
      %s4083 = scalar_lea.vmem [#allocation1], 1
      %4084 = vst [vmem:[%s4083] ss:$4 sm:$0xff] %v4029
      %v4085 = vld.sshfl [vmem:[#allocation1] sm:$0xff pattern:$0x73625140]
      %4089 = vst [vmem:[#allocation1] ss:$4 sm:$0xff] %v4023
      %s4090 = scalar_lea.vmem [#allocation1], 1
      %4091 = vst [vmem:[%s4090] ss:$4 sm:$0xff] %v4031
      %v4092 = vld.sshfl [vmem:[#allocation1] sm:$0xff pattern:$0x73625140]
      %4093 = vrot.lane.b32.xlu0 %v4092, 8
      %v4094 = vpop.permute.xlu0 %4093
      %4098 = vst [vmem:[#allocation1] ss:$4 sm:$0xff] %v4037
      %s4099 = scalar_lea.vmem [#allocation1], 1
      %4100 = vst [vmem:[%s4099] ss:$4 sm:$0xff] %v4045
      %v4101 = vld.sshfl [vmem:[#allocation1] sm:$0xff pattern:$0x73625140]
      %4102 = vrot.lane.b32.xlu0 %v4101, 16
      %v4103 = vpop.permute.xlu0 %4102
      %4107 = vst [vmem:[#allocation1] ss:$4 sm:$0xff] %v4039
      %s4108 = scalar_lea.vmem [#allocation1], 1
      %4109 = vst [vmem:[%s4108] ss:$4 sm:$0xff] %v4047
      %v4110 = vld.sshfl [vmem:[#allocation1] sm:$0xff pattern:$0x73625140]
      %4111 = vrot.lane.b32.xlu0 %v4110, 24
      %v4112 = vpop.permute.xlu0 %4111
      %4116 = vst [vmem:[#allocation1] ss:$4 sm:$0xff] %v4053
      %s4117 = scalar_lea.vmem [#allocation1], 1
      %4118 = vst [vmem:[%s4117] ss:$4 sm:$0xff] %v4061
      %v4119 = vld.sshfl [vmem:[#allocation1] sm:$0xff pattern:$0x73625140]
      %4120 = vrot.lane.b32.xlu0 %v4119, 32
      %v4121 = vpop.permute.xlu0 %4120
      %4125 = vst [vmem:[#allocation1] ss:$4 sm:$0xff] %v4055
      %s4126 = scalar_lea.vmem [#allocation1], 1
      %4127 = vst [vmem:[%s4126] ss:$4 sm:$0xff] %v4063
      %v4128 = vld.sshfl [vmem:[#allocation1] sm:$0xff pattern:$0x73625140]
      %4129 = vrot.lane.b32.xlu0 %v4128, 40
      %v4130 = vpop.permute.xlu0 %4129
      %4134 = vst [vmem:[#allocation1] ss:$4 sm:$0xff] %v4069
      %s4135 = scalar_lea.vmem [#allocation1], 1
      %4136 = vst [vmem:[%s4135] ss:$4 sm:$0xff] %v4077
      %v4137 = vld.sshfl [vmem:[#allocation1] sm:$0xff pattern:$0x73625140]
      %4138 = vrot.lane.b32.xlu0 %v4137, 48
      %v4139 = vpop.permute.xlu0 %4138
      %4143 = vst [vmem:[#allocation1] ss:$4 sm:$0xff] %v4071
      %s4144 = scalar_lea.vmem [#allocation1], 1
      %4145 = vst [vmem:[%s4144] ss:$4 sm:$0xff] %v4079
      %v4146 = vld.sshfl [vmem:[#allocation1] sm:$0xff pattern:$0x73625140]
      %4147 = vrot.lane.b32.xlu0 %v4146, 56
      %v4148 = vpop.permute.xlu0 %4147
      %v4150 = vsel %vm1073, %v4085, %v4094
      %v4151 = vsel %vm1155, %v4150, %v4103
      %v4152 = vsel %vm1237, %v4151, %v4112
      %v4153 = vsel %vm1319, %v4152, %v4121
      %v4154 = vsel %vm2714, %v4153, %v4130
      %v4155 = vsel %vm2731, %v4154, %v4139
      %v4156 = vsel %vm2748, %v4155, %v4148
      %vm4157 = vcmask 519168
      %4158 = vst.msk [vmem:[%s352] sm:$0xf] %vm4157, %v4156
      %v4159 = vsel %vm3785, %v3401, %v3753
      %v4160 = vsel %vm3786, %v3402, %v3754
      %v4161 = vsel %vm3787, %v3403, %v3755
      %v4162 = vsel %vm3788, %v3404, %v3756
      %v4163 = vsel %vm3789, %v3405, %v3757
      %v4164 = vsel %vm3790, %v3406, %v3758
      %v4165 = vsel %vm3791, %v3407, %v3759
      %v4166 = vsel %vm3792, %v3408, %v3760
      %v4167 = vsel %vm3793, %v3409, %v3761
      %v4168 = vsel %vm3794, %v3410, %v3762
      %v4169 = vsel %vm3795, %v3411, %v3763
      %v4170 = vsel %vm3796, %v3412, %v3764
      %v4171 = vsel %vm3797, %v3413, %v3765
      %v4172 = vsel %vm3798, %v3414, %v3766
      %v4173 = vsel %vm3799, %v3415, %v3767
      %v4174 = vsel %vm3800, %v3416, %v3768
      %v4175 = vsel %vm3801, %v3417, %v3769
      %v4176 = vsel %vm3802, %v3418, %v3770
      %v4177 = vsel %vm3803, %v3419, %v3771
      %v4178 = vsel %vm3804, %v3420, %v3772
      %v4179 = vsel %vm3805, %v3421, %v3773
      %v4180 = vsel %vm3806, %v3422, %v3774
      %v4181 = vsel %vm3807, %v3423, %v3775
      %v4182 = vsel %vm3808, %v3424, %v3776
      %v4183 = vsel %vm3809, %v3425, %v3777
      %v4184 = vsel %vm3810, %v3426, %v3778
      %v4185 = vsel %vm3811, %v3427, %v3779
      %v4186 = vsel %vm3812, %v3428, %v3780
      %v4187 = vsel %vm3813, %v3429, %v3781
      %v4188 = vsel %vm3814, %v3430, %v3782
      %v4189 = vsel %vm3815, %v3431, %v3783
      %v4190 = vsel %vm3816, %v3432, %v3784
      %v4191 = vsel %vm3881, %v4159, %v4159
      %v4192 = vsel %vm3883, %v4159, %v4191
      %v4193 = vrot.slane %v4160, 7
      %v4194 = vsel %vm3886, %v4193, %v4192
      %v4195 = vsel %vm3888, %v4193, %v4194
      %v4196 = vsel %vm3890, %v4193, %v4195
      %v4197 = vsel %vm3892, %v4193, %v4196
      %v4198 = vsel %vm3881, %v4161, %v4161
      %v4199 = vsel %vm3883, %v4161, %v4198
      %v4200 = vrot.slane %v4162, 7
      %v4201 = vsel %vm3886, %v4200, %v4199
      %v4202 = vsel %vm3888, %v4200, %v4201
      %v4203 = vsel %vm3890, %v4200, %v4202
      %v4204 = vsel %vm3892, %v4200, %v4203
      %v4205 = vsel %vm3881, %v4163, %v4163
      %v4206 = vsel %vm3883, %v4163, %v4205
      %v4207 = vrot.slane %v4164, 7
      %v4208 = vsel %vm3886, %v4207, %v4206
      %v4209 = vsel %vm3888, %v4207, %v4208
      %v4210 = vsel %vm3890, %v4207, %v4209
      %v4211 = vsel %vm3892, %v4207, %v4210
      %v4212 = vsel %vm3881, %v4165, %v4165
      %v4213 = vsel %vm3883, %v4165, %v4212
      %v4214 = vrot.slane %v4166, 7
      %v4215 = vsel %vm3886, %v4214, %v4213
      %v4216 = vsel %vm3888, %v4214, %v4215
      %v4217 = vsel %vm3890, %v4214, %v4216
      %v4218 = vsel %vm3892, %v4214, %v4217
      %v4219 = vsel %vm3881, %v4167, %v4167
      %v4220 = vsel %vm3883, %v4167, %v4219
      %v4221 = vrot.slane %v4168, 7
      %v4222 = vsel %vm3886, %v4221, %v4220
      %v4223 = vsel %vm3888, %v4221, %v4222
      %v4224 = vsel %vm3890, %v4221, %v4223
      %v4225 = vsel %vm3892, %v4221, %v4224
      %v4226 = vsel %vm3881, %v4169, %v4169
      %v4227 = vsel %vm3883, %v4169, %v4226
      %v4228 = vrot.slane %v4170, 7
      %v4229 = vsel %vm3886, %v4228, %v4227
      %v4230 = vsel %vm3888, %v4228, %v4229
      %v4231 = vsel %vm3890, %v4228, %v4230
      %v4232 = vsel %vm3892, %v4228, %v4231
      %v4233 = vsel %vm3881, %v4171, %v4171
      %v4234 = vsel %vm3883, %v4171, %v4233
      %v4235 = vrot.slane %v4172, 7
      %v4236 = vsel %vm3886, %v4235, %v4234
      %v4237 = vsel %vm3888, %v4235, %v4236
      %v4238 = vsel %vm3890, %v4235, %v4237
      %v4239 = vsel %vm3892, %v4235, %v4238
      %v4240 = vsel %vm3881, %v4173, %v4173
      %v4241 = vsel %vm3883, %v4173, %v4240
      %v4242 = vrot.slane %v4174, 7
      %v4243 = vsel %vm3886, %v4242, %v4241
      %v4244 = vsel %vm3888, %v4242, %v4243
      %v4245 = vsel %vm3890, %v4242, %v4244
      %v4246 = vsel %vm3892, %v4242, %v4245
      %v4247 = vsel %vm3881, %v4175, %v4175
      %v4248 = vsel %vm3883, %v4175, %v4247
      %v4249 = vrot.slane %v4176, 7
      %v4250 = vsel %vm3886, %v4249, %v4248
      %v4251 = vsel %vm3888, %v4249, %v4250
      %v4252 = vsel %vm3890, %v4249, %v4251
      %v4253 = vsel %vm3892, %v4249, %v4252
      %v4254 = vsel %vm3881, %v4177, %v4177
      %v4255 = vsel %vm3883, %v4177, %v4254
      %v4256 = vrot.slane %v4178, 7
      %v4257 = vsel %vm3886, %v4256, %v4255
      %v4258 = vsel %vm3888, %v4256, %v4257
      %v4259 = vsel %vm3890, %v4256, %v4258
      %v4260 = vsel %vm3892, %v4256, %v4259
      %v4261 = vsel %vm3881, %v4179, %v4179
      %v4262 = vsel %vm3883, %v4179, %v4261
      %v4263 = vrot.slane %v4180, 7
      %v4264 = vsel %vm3886, %v4263, %v4262
      %v4265 = vsel %vm3888, %v4263, %v4264
      %v4266 = vsel %vm3890, %v4263, %v4265
      %v4267 = vsel %vm3892, %v4263, %v4266
      %v4268 = vsel %vm3881, %v4181, %v4181
      %v4269 = vsel %vm3883, %v4181, %v4268
      %v4270 = vrot.slane %v4182, 7
      %v4271 = vsel %vm3886, %v4270, %v4269
      %v4272 = vsel %vm3888, %v4270, %v4271
      %v4273 = vsel %vm3890, %v4270, %v4272
      %v4274 = vsel %vm3892, %v4270, %v4273
      %v4275 = vsel %vm3881, %v4183, %v4183
      %v4276 = vsel %vm3883, %v4183, %v4275
      %v4277 = vrot.slane %v4184, 7
      %v4278 = vsel %vm3886, %v4277, %v4276
      %v4279 = vsel %vm3888, %v4277, %v4278
      %v4280 = vsel %vm3890, %v4277, %v4279
      %v4281 = vsel %vm3892, %v4277, %v4280
      %v4282 = vsel %vm3881, %v4185, %v4185
      %v4283 = vsel %vm3883, %v4185, %v4282
      %v4284 = vrot.slane %v4186, 7
      %v4285 = vsel %vm3886, %v4284, %v4283
      %v4286 = vsel %vm3888, %v4284, %v4285
      %v4287 = vsel %vm3890, %v4284, %v4286
      %v4288 = vsel %vm3892, %v4284, %v4287
      %v4289 = vsel %vm3881, %v4187, %v4187
      %v4290 = vsel %vm3883, %v4187, %v4289
      %v4291 = vrot.slane %v4188, 7
      %v4292 = vsel %vm3886, %v4291, %v4290
      %v4293 = vsel %vm3888, %v4291, %v4292
      %v4294 = vsel %vm3890, %v4291, %v4293
      %v4295 = vsel %vm3892, %v4291, %v4294
      %v4296 = vsel %vm3881, %v4189, %v4189
      %v4297 = vsel %vm3883, %v4189, %v4296
      %v4298 = vrot.slane %v4190, 7
      %v4299 = vsel %vm3886, %v4298, %v4297
      %v4300 = vsel %vm3888, %v4298, %v4299
      %v4301 = vsel %vm3890, %v4298, %v4300
      %v4302 = vsel %vm3892, %v4298, %v4301
      %v4303 = vrot.slane %v4225, 4
      %v4304 = vsel %vm4016, %v4303, %v4197
      %v4306 = vunpack.c.l.s4 1934713408
      %v4307 = vunpack.c.0.s8 %v4306
      %v4308 = vperm.slane %v4304, %v4307
      %v4309 = vrot.slane %v4308, 4
      %v4310 = vsel %vm4016, 0, %v4309
      %v4311 = vrot.slane %v4281, 4
      %v4312 = vsel %vm4016, %v4311, %v4253
      %v4314 = vunpack.c.l.s4 1934713408
      %v4315 = vunpack.c.0.s8 %v4314
      %v4316 = vperm.slane %v4312, %v4315
      %v4317 = vrot.slane %v4316, 4
      %v4318 = vsel %vm4016, 0, %v4317
      %v4319 = vrot.slane %v4232, 4
      %v4320 = vsel %vm4016, %v4319, %v4204
      %v4322 = vunpack.c.l.s4 1934713408
      %v4323 = vunpack.c.0.s8 %v4322
      %v4324 = vperm.slane %v4320, %v4323
      %v4325 = vrot.slane %v4324, 4
      %v4326 = vsel %vm4016, 0, %v4325
      %v4327 = vrot.slane %v4288, 4
      %v4328 = vsel %vm4016, %v4327, %v4260
      %v4330 = vunpack.c.l.s4 1934713408
      %v4331 = vunpack.c.0.s8 %v4330
      %v4332 = vperm.slane %v4328, %v4331
      %v4333 = vrot.slane %v4332, 4
      %v4334 = vsel %vm4016, 0, %v4333
      %v4335 = vrot.slane %v4239, 4
      %v4336 = vsel %vm4016, %v4335, %v4211
      %v4338 = vunpack.c.l.s4 1934713408
      %v4339 = vunpack.c.0.s8 %v4338
      %v4340 = vperm.slane %v4336, %v4339
      %v4341 = vrot.slane %v4340, 4
      %v4342 = vsel %vm4016, 0, %v4341
      %v4343 = vrot.slane %v4295, 4
      %v4344 = vsel %vm4016, %v4343, %v4267
      %v4346 = vunpack.c.l.s4 1934713408
      %v4347 = vunpack.c.0.s8 %v4346
      %v4348 = vperm.slane %v4344, %v4347
      %v4349 = vrot.slane %v4348, 4
      %v4350 = vsel %vm4016, 0, %v4349
      %v4351 = vrot.slane %v4246, 4
      %v4352 = vsel %vm4016, %v4351, %v4218
      %v4354 = vunpack.c.l.s4 1934713408
      %v4355 = vunpack.c.0.s8 %v4354
      %v4356 = vperm.slane %v4352, %v4355
      %v4357 = vrot.slane %v4356, 4
      %v4358 = vsel %vm4016, 0, %v4357
      %v4359 = vrot.slane %v4302, 4
      %v4360 = vsel %vm4016, %v4359, %v4274
      %v4362 = vunpack.c.l.s4 1934713408
      %v4363 = vunpack.c.0.s8 %v4362
      %v4364 = vperm.slane %v4360, %v4363
      %v4365 = vrot.slane %v4364, 4
      %v4366 = vsel %vm4016, 0, %v4365
      %4367 = vst [vmem:[#allocation1] ss:$4 sm:$0xff] %v4308
      %s4368 = scalar_lea.vmem [#allocation1], 1
      %4369 = vst [vmem:[%s4368] ss:$4 sm:$0xff] %v4316
      %v4370 = vld.sshfl [vmem:[#allocation1] sm:$0xff pattern:$0x73625140]
      %4371 = vst [vmem:[#allocation1] ss:$4 sm:$0xff] %v4310
      %s4372 = scalar_lea.vmem [#allocation1], 1
      %4373 = vst [vmem:[%s4372] ss:$4 sm:$0xff] %v4318
      %v4374 = vld.sshfl [vmem:[#allocation1] sm:$0xff pattern:$0x73625140]
      %4375 = vrot.lane.b32.xlu0 %v4374, 8
      %v4376 = vpop.permute.xlu0 %4375
      %4377 = vst [vmem:[#allocation1] ss:$4 sm:$0xff] %v4324
      %s4378 = scalar_lea.vmem [#allocation1], 1
      %4379 = vst [vmem:[%s4378] ss:$4 sm:$0xff] %v4332
      %v4380 = vld.sshfl [vmem:[#allocation1] sm:$0xff pattern:$0x73625140]
      %4381 = vrot.lane.b32.xlu0 %v4380, 16
      %v4382 = vpop.permute.xlu0 %4381
      %4383 = vst [vmem:[#allocation1] ss:$4 sm:$0xff] %v4326
      %s4384 = scalar_lea.vmem [#allocation1], 1
      %4385 = vst [vmem:[%s4384] ss:$4 sm:$0xff] %v4334
      %v4386 = vld.sshfl [vmem:[#allocation1] sm:$0xff pattern:$0x73625140]
      %4387 = vrot.lane.b32.xlu0 %v4386, 24
      %v4388 = vpop.permute.xlu0 %4387
      %4389 = vst [vmem:[#allocation1] ss:$4 sm:$0xff] %v4340
      %s4390 = scalar_lea.vmem [#allocation1], 1
      %4391 = vst [vmem:[%s4390] ss:$4 sm:$0xff] %v4348
      %v4392 = vld.sshfl [vmem:[#allocation1] sm:$0xff pattern:$0x73625140]
      %4393 = vrot.lane.b32.xlu0 %v4392, 32
      %v4394 = vpop.permute.xlu0 %4393
      %4395 = vst [vmem:[#allocation1] ss:$4 sm:$0xff] %v4342
      %s4396 = scalar_lea.vmem [#allocation1], 1
      %4397 = vst [vmem:[%s4396] ss:$4 sm:$0xff] %v4350
      %v4398 = vld.sshfl [vmem:[#allocation1] sm:$0xff pattern:$0x73625140]
      %4399 = vrot.lane.b32.xlu0 %v4398, 40
      %v4400 = vpop.permute.xlu0 %4399
      %4401 = vst [vmem:[#allocation1] ss:$4 sm:$0xff] %v4356
      %s4402 = scalar_lea.vmem [#allocation1], 1
      %4403 = vst [vmem:[%s4402] ss:$4 sm:$0xff] %v4364
      %v4404 = vld.sshfl [vmem:[#allocation1] sm:$0xff pattern:$0x73625140]
      %4405 = vrot.lane.b32.xlu0 %v4404, 48
      %v4406 = vpop.permute.xlu0 %4405
      %4407 = vst [vmem:[#allocation1] ss:$4 sm:$0xff] %v4358
      %s4408 = scalar_lea.vmem [#allocation1], 1
      %4409 = vst [vmem:[%s4408] ss:$4 sm:$0xff] %v4366
      %v4410 = vld.sshfl [vmem:[#allocation1] sm:$0xff pattern:$0x73625140]
      %4411 = vrot.lane.b32.xlu0 %v4410, 56
      %v4412 = vpop.permute.xlu0 %4411
      %v4413 = vsel %vm1073, %v4370, %v4376
      %v4414 = vsel %vm1155, %v4413, %v4382
      %v4415 = vsel %vm1237, %v4414, %v4388
      %v4416 = vsel %vm1319, %v4415, %v4394
      %v4417 = vsel %vm2714, %v4416, %v4400
      %v4418 = vsel %vm2731, %v4417, %v4406
      %v4419 = vsel %vm2748, %v4418, %v4412
      %4420 = vst.msk [vmem:[%s360] sm:$0xf] %vm4157, %v4419
      %p4421 = scmp.lt.s32.totalorder %s24, 1
      %s4422 = scalar_select %p4421, %s24, 1
      %p4423 = scmp.lt.s32.totalorder %s25, 1
      %s4424 = scalar_select %p4423, %s25, 1
      %s4425 = smul.addr %s4422, 2
      %s4426 = sadd.s32 %s4424, %s4425
      %s4427 = smul.addr %s4426, 4
      %s4428 = scalar_lea.vmem %s7, %s4427
      %p4429 = scmp.lt.s32.totalorder %s24, 1
      %s4430 = scalar_select %p4429, %s24, 1
      %p4431 = scmp.lt.s32.totalorder %s25, 1
      %s4432 = scalar_select %p4431, %s25, 1
      %s4433 = smul.addr %s4430, 2
      %s4434 = sadd.s32 %s4432, %s4433
      %s4435 = smul.addr %s4434, 4
      %s4436 = scalar_lea.vmem %s8, %s4435
      // Predicated region
      $region49: #{segnet_down2.1} parent=47 // pred_check
        %p4437 = pneg %p206
      $region50: #{segnet_down2.1} parent=47 // pred_check_branch
        %4439 = sbr.rel (%p4437) target = $region52
      $region51: #{segnet_down2.1} parent=47 // pred_region
        _
      $region52: #{segnet_down2.1} parent=47 // pred_fallthru
        _
      // Predicated region
      $region53: #{segnet_down2.1} parent=47 // pred_check
        %p4440 = pneg %p234
      $region54: #{segnet_down2.1} parent=47 // pred_check_branch
        %4442 = sbr.rel (%p4440) target = $region56
      $region55: #{segnet_down2.1} parent=47 // pred_region
        _
      $region56: #{segnet_down2.1} parent=47 // pred_fallthru
        _
    $region48: #{segnet_down2.1} parent=5 // pred_fallthru
      _
    %p4443 = scmp.le.s32.totalorder 2, %s15
    // Predicated region
    $region57: #{segnet_down2.1} parent=5 // pred_check
      %p4444 = pneg %p4443
    $region58: #{segnet_down2.1} parent=5 // pred_check_branch
      %4446 = sbr.rel (%p4444) target = $region60
    $region59: #{segnet_down2.1} parent=5 // pred_region
      %s4447 = ssub.s32 %s15, 2
      // Predicated region
      $region61: #{segnet_down2.1} parent=59 // pred_check
        %p4448 = pneg %p212
      $region62: #{segnet_down2.1} parent=59 // pred_check_branch
        %4450 = sbr.rel (%p4448) target = $region64
      $region63: #{segnet_down2.1} parent=59 // pred_region
        %p4451 = scmp.lt.s32.totalorder %s26, 1
        %s4452 = scalar_select %p4451, %s26, 1
        %p4453 = scmp.lt.s32.totalorder %s27, 1
        %s4454 = scalar_select %p4453, %s27, 1
        %s4455 = smul.addr %s4452, 2
        %s4456 = sadd.s32 %s4454, %s4455
        %s4457 = smul.addr %s4456, 4
        %s4458 = scalar_lea.vmem %s7, %s4457
      $region64: #{segnet_down2.1} parent=59 // pred_fallthru
        _
      // Predicated region
      $region65: #{segnet_down2.1} parent=59 // pred_check
        %p4459 = pneg %p240
      $region66: #{segnet_down2.1} parent=59 // pred_check_branch
        %4461 = sbr.rel (%p4459) target = $region68
      $region67: #{segnet_down2.1} parent=59 // pred_region
        %p4462 = scmp.lt.s32.totalorder %s26, 1
        %s4463 = scalar_select %p4462, %s26, 1
        %p4464 = scmp.lt.s32.totalorder %s27, 1
        %s4465 = scalar_select %p4464, %s27, 1
        %s4466 = smul.addr %s4463, 2
        %s4467 = sadd.s32 %s4465, %s4466
        %s4468 = smul.addr %s4467, 4
        %s4469 = scalar_lea.vmem %s8, %s4468
      $region68: #{segnet_down2.1} parent=59 // pred_fallthru
        _
    $region60: #{segnet_down2.1} parent=5 // pred_fallthru
      _
  $region6: #{segnet_down2.1} parent=0 // loop_footer
    %s19 = sadd.s32 1, %s15
  $region7: #{segnet_down2.1} parent=0 // loop_footer_branch
    %14 = sbr.rel target = $region3
  $region8: #{segnet_down2.1} parent=0 // loop_exit
    _

</llo_original>
